<compile_context>
chip_gen: v7x
topology: tpu7x:2x2x1
jax: 0.10.0
libtpu: 0.0.40
codegen_flags: <defaults>
</compile_context>

<pallas_src>
import functools
import math

import numpy as np
import jax
import jax.numpy as jnp
from jax import lax
from jax.experimental import pallas as pl
from jax.experimental.pallas import tpu as pltpu


def _round_up(x, m):
    return ((x + m - 1) // m) * m


# ----------------------------- Pallas kernel --------------------------------
def gru_layer_kernel(x_ref, wih_ref, whh_ref, bi_ref, bhn_ref,
                     out_ref, hN_ref, gi_ref, *, unroll):
    """One dilated-GRU layer over one batch block; full recurrence in-kernel.

    x_ref  : (T_d, B_blk, D_in)    whole dilated sequence block (f32, VMEM)
    wih_ref: (D_in, 3*H_pad)       fused input->hidden weights (bf16), (r,z,n)
    whh_ref: (H_pad, 3*H_pad)      fused hidden->hidden weights (bf16)
    bi_ref : (1, 3*H_pad)          input-side bias row (r,z: b_ih+b_hh; n: b_ih)
    bhn_ref: (1, H_pad)            hidden bias for the n gate
    out_ref: (T_d, B_blk, H_pad)   per-step hidden outputs (f32)
    hN_ref : (B_blk, H_pad)        final hidden state (f32)
    gi_ref : (T_d, B_blk, 3*H_pad) VMEM scratch for the hoisted x @ W_ih
    """
    T_d, B_blk, D_in = x_ref.shape
    H3 = wih_ref.shape[1]
    Hp = H3 // 3
    H2 = 2 * Hp

    # --- Hoisted input->hidden matmul: ONE MXU-efficient matmul for all steps,
    # with all input-side biases folded in a single broadcast add (outside the
    # serial loop).
    x_all = x_ref[...].reshape(T_d * B_blk, D_in).astype(jnp.bfloat16)
    gi_all = jnp.dot(x_all, wih_ref[...], preferred_element_type=jnp.float32)
    gi_all = gi_all + bi_ref[...]
    gi_ref[...] = gi_all.reshape(T_d, B_blk, H3)

    whh = whh_ref[...]          # bf16 recurrent weights, resident across loop
    bhn = bhn_ref[...]          # (1, H_pad) sublane-broadcast row

    def step(t, h):
        gi = gi_ref[t]                                             # (B_blk, 3*H_pad) f32
        gh = jnp.dot(h.astype(jnp.bfloat16), whh,
                     preferred_element_type=jnp.float32)           # (B_blk, 3*H_pad)
        rz = jax.nn.sigmoid(gi[:, :H2] + gh[:, :H2])               # r | z (lane-aligned)
        r = rz[:, :Hp]
        z = rz[:, Hp:]
        n = jnp.tanh(gi[:, H2:] + r * (gh[:, H2:] + bhn))
        h_new = (1.0 - z) * n + z * h
        out_ref[t] = h_new
        return h_new

    h0 = jnp.zeros((B_blk, Hp), jnp.float32)
    hN_ref[...] = lax.fori_loop(0, T_d, step, h0, unroll=unroll)


def gru_layer_pallas(x_dil, layer_params):
    """x_dil: (T_d, B_r, D_in) f32.  layer_params: prepared/padded tensors."""
    wih, whh, bi, bhn = layer_params
    T_d, B_r, D_in = x_dil.shape
    assert D_in == wih.shape[0]
    H3 = wih.shape[1]
    H_pad = H3 // 3

    # ---- VMEM-budgeted batch blocking (portable across v5e / v6e / v7x). ----
    X_BYTES, ACC_BYTES, W_BYTES = 4, 4, 2
    per_row = T_d * (2 * D_in * X_BYTES        # x block, double-buffered
                     + 2 * H_pad * ACC_BYTES   # out block, double-buffered
                     + 3 * H_pad * ACC_BYTES)  # gi scratch (single-buffered)
    per_row += 2 * H_pad * ACC_BYTES           # hN out block
    fixed = (D_in + H_pad) * H3 * W_BYTES + 4 * H_pad * ACC_BYTES + (64 << 10)
    BUDGET = 20 << 20                          # working-set target
    cap = ((BUDGET - fixed) // max(per_row, 1)) // 8 * 8
    cap = max(8, min(128, cap))                # <=128: >=2 blocks feed both v7x cores
    n_blk = -(-B_r // cap)
    if B_r >= 16:
        n_blk = max(n_blk, 2)                  # megacore/"parallel" only helps if >=2 blocks
    B_blk = _round_up(-(-B_r // n_blk), 8)     # balanced blocks -> minimal batch padding
    B_pad = n_blk * B_blk

    vmem_need = fixed + per_row * B_blk
    vmem_limit = int(min(max(32 << 20, vmem_need + (8 << 20)), 64 << 20))

    if B_pad != B_r:                           # batch-only padding (no D / H padding)
        x_dil = jnp.pad(x_dil, ((0, 0), (0, B_pad - B_r), (0, 0)))

    kernel = functools.partial(gru_layer_kernel,
                               unroll=(int(T_d) if T_d <= 16 else 8))

    out, h_n = pl.pallas_call(
        kernel,
        out_shape=(jax.ShapeDtypeStruct((T_d, B_pad, H_pad), jnp.float32),
                   jax.ShapeDtypeStruct((B_pad, H_pad), jnp.float32)),
        grid_spec=pltpu.PrefetchScalarGridSpec(
            num_scalar_prefetch=0,
            grid=(n_blk,),
            in_specs=[
                pl.BlockSpec((T_d, B_blk, D_in), lambda b: (0, b, 0)),
                pl.BlockSpec((D_in, H3), lambda b: (0, 0)),
                pl.BlockSpec((H_pad, H3), lambda b: (0, 0)),
                pl.BlockSpec((1, H3), lambda b: (0, 0)),
                pl.BlockSpec((1, H_pad), lambda b: (0, 0)),
            ],
            out_specs=[
                pl.BlockSpec((T_d, B_blk, H_pad), lambda b: (0, b, 0)),
                pl.BlockSpec((B_blk, H_pad), lambda b: (b, 0)),
            ],
            scratch_shapes=[pltpu.VMEM((T_d, B_blk, H3), jnp.float32)],
        ),
        compiler_params=pltpu.CompilerParams(
            dimension_semantics=("parallel",),
            vmem_limit_bytes=vmem_limit),
    )(x_dil, wih, whh, bi, bhn)
    return out, h_n


# --------------------------- parameter preparation ---------------------------
def prepare_drnn_params(params, n_hidden):
    """Fuse (r,z,n) gate weights into lane-dense padded bf16 matrices and fold
    the input-side biases into one row.  Done once, outside the jitted forward.

    Layer 0 keeps the raw input width (no D padding); deeper layers take the
    previous layer's padded (H_pad-wide) output directly — the padded rows of
    W_ih are zero so the padded input lanes contribute nothing."""
    H = n_hidden
    H_pad = _round_up(H, 128)
    prepared = []
    for li, (w_ih, w_hh, b_ih, b_hh) in enumerate(params):
        D_in = w_ih.shape[1]
        D_k = D_in if li == 0 else H_pad
        wih_t = w_ih.T.astype(jnp.float32)   # (D_in, 3H), gate order (r, z, n)
        whh_t = w_hh.T.astype(jnp.float32)   # (H, 3H)
        wih_p = jnp.zeros((D_k, 3 * H_pad), jnp.float32)
        whh_p = jnp.zeros((H_pad, 3 * H_pad), jnp.float32)
        for g in range(3):
            wih_p = wih_p.at[:D_in, g * H_pad:g * H_pad + H].set(
                wih_t[:, g * H:(g + 1) * H])
            whh_p = whh_p.at[:H, g * H_pad:g * H_pad + H].set(
                whh_t[:, g * H:(g + 1) * H])
        # Input-side bias row, added once to the hoisted gi matmul:
        #   r, z gates: b_ih + b_hh (fold is exact); n gate: b_ih only.
        bi = jnp.zeros((1, 3 * H_pad), jnp.float32)
        bi = bi.at[0, :H].set((b_ih[:H] + b_hh[:H]).astype(jnp.float32))
        bi = bi.at[0, H_pad:H_pad + H].set(
            (b_ih[H:2 * H] + b_hh[H:2 * H]).astype(jnp.float32))
        bi = bi.at[0, 2 * H_pad:2 * H_pad + H].set(b_ih[2 * H:].astype(jnp.float32))
        bhn = jnp.zeros((1, H_pad), jnp.float32)
        bhn = bhn.at[0, :H].set(b_hh[2 * H:].astype(jnp.float32))
        prepared.append((wih_p.astype(jnp.bfloat16),
                         whh_p.astype(jnp.bfloat16), bi, bhn))
    return prepared


# ------------------------------ DRNN forward ---------------------------------
@functools.partial(jax.jit, static_argnums=(2, 3))
def drnn_forward(x, prepared_params, n_hidden, n_layers):
    """x: (seq_len, batch, n_input).  Returns (layers, hiddens) like PyTorch:
    layers (n_layers, seq_len, batch, n_hidden); hiddens[i]: (1, batch*2**i, H).

    Layers are chained at H_pad width (no per-layer H slice / re-pad)."""
    T, B, _ = x.shape
    H_pad = prepared_params[0][1].shape[0]
    inputs = x
    layer_outs, hiddens = [], []
    for i in range(n_layers):
        rate = 2 ** i
        n_steps = inputs.shape[0]
        T_d = -(-n_steps // rate)                      # ceil
        pad_t = T_d * rate - n_steps                   # _pad_inputs
        x_pd = jnp.pad(inputs, ((0, pad_t), (0, 0), (0, 0)))
        x_dil = x_pd.reshape(T_d, rate * B, x_pd.shape[2])   # _prepare_inputs
        out_pad, hN_pad = gru_layer_pallas(x_dil, prepared_params[i])
        out_dil = out_pad[:, :rate * B, :]             # drop batch padding, keep H_pad
        out = out_dil.reshape(T_d * rate, B, H_pad)[:n_steps]   # split + unpad
        inputs = out                                   # padded hand-off to next layer
        layer_outs.append(out[..., :n_hidden])
        hiddens.append(hN_pad[:rate * B, :n_hidden][None])      # (1, B*rate, H)
    return jnp.stack(layer_outs, axis=0), hiddens


# ------------------------- pure-JAX reference (check) ------------------------
def gru_ref(x_seq, w_ih, w_hh, b_ih, b_hh):
    H = w_hh.shape[1]
    B = x_seq.shape[1]

    def step(h, x):
        gi = x @ w_ih.T + b_ih
        gh = h @ w_hh.T + b_hh
        i_r, i_z, i_n = gi[:, :H], gi[:, H:2 * H], gi[:, 2 * H:]
        h_r, h_z, h_n = gh[:, :H], gh[:, H:2 * H], gh[:, 2 * H:]
        r = jax.nn.sigmoid(i_r + h_r)
        z = jax.nn.sigmoid(i_z + h_z)
        n = jnp.tanh(i_n + r * h_n)
        h_new = (1.0 - z) * n + z * h
        return h_new, h_new

    h0 = jnp.zeros((B, H), jnp.float32)
    h_last, outs = lax.scan(step, h0, x_seq)
    return outs, h_last


def drnn_forward_ref(x, params, n_hidden, n_layers):
    T, B, _ = x.shape
    inputs = x
    layer_outs, hiddens = [], []
    for i in range(n_layers):
        rate = 2 ** i
        w_ih, w_hh, b_ih, b_hh = params[i]
        n_steps = inputs.shape[0]
        T_d = -(-n_steps // rate)
        pad = T_d * rate - n_steps
        x_p = jnp.pad(inputs, ((0, pad), (0, 0), (0, 0)))
        x_dil = x_p.reshape(T_d, rate * B, x_p.shape[2])
        out_dil, h_n = gru_ref(x_dil, w_ih, w_hh, b_ih, b_hh)
        out = out_dil.reshape(T_d * rate, B, n_hidden)[:n_steps]
        inputs = out
        layer_outs.append(out)
        hiddens.append(h_n[None])
    return jnp.stack(layer_outs, 0), hiddens


# --------------------------------- main ---------------------------------------
if __name__ == "__main__":
    n_input, n_hidden, n_layers = 4, 32, 3
    seq_len, batch = 8, 2

    key = jax.random.PRNGKey(0)
    k_x, key = jax.random.split(key)
    x = jax.random.normal(k_x, (seq_len, batch, n_input), dtype=jnp.float32)

    # Deterministic GRU parameter init (PyTorch-style uniform(-1/sqrt(H), 1/sqrt(H))).
    params = []
    bound = 1.0 / math.sqrt(n_hidden)
    for i in range(n_layers):
        d_in = n_input if i == 0 else n_hidden
        ks = jax.random.split(jax.random.fold_in(key, i), 4)
        w_ih = jax.random.uniform(ks[0], (3 * n_hidden, d_in), jnp.float32, -bound, bound)
        w_hh = jax.random.uniform(ks[1], (3 * n_hidden, n_hidden), jnp.float32, -bound, bound)
        b_ih = jax.random.uniform(ks[2], (3 * n_hidden,), jnp.float32, -bound, bound)
        b_hh = jax.random.uniform(ks[3], (3 * n_hidden,), jnp.float32, -bound, bound)
        params.append((w_ih, w_hh, b_ih, b_hh))

    # Fuse / pad the weights once, outside the jitted forward.
    prepared = prepare_drnn_params(params, n_hidden)

    layers, hiddens = drnn_forward(x, prepared, n_hidden, n_layers)
    layers = jax.block_until_ready(layers)
    hiddens = [jax.block_until_ready(h) for h in hiddens]

    # Correctness check against a pure-JAX (lax.scan) GRU reference.
    # Tolerance relaxed to 2e-2 because the kernel uses bf16 MXU operands
    # (f32 accumulation / gate math), per the perf review.
    layers_ref, hiddens_ref = drnn_forward_ref(x, params, n_hidden, n_layers)
    np.testing.assert_allclose(np.asarray(layers), np.asarray(layers_ref),
                               rtol=2e-2, atol=2e-2)
    for h, hr in zip(hiddens, hiddens_ref):
        np.testing.assert_allclose(np.asarray(h), np.asarray(hr),
                                   rtol=2e-2, atol=2e-2)

    assert layers.shape == (n_layers, seq_len, batch, n_hidden)
    for i, h in enumerate(hiddens):
        assert h.shape == (1, batch * (2 ** i), n_hidden)

    print("KERNEL_OK")
</pallas_src>

<mosaic_0001>
module attributes {stable_mosaic.version = 11 : i64} {
  func.func @gru_layer_kernel(%arg0: i32, %arg1: memref<8x8x4xf32, #tpu.memory_space<vmem>>, %arg2: memref<4x384xbf16, #tpu.memory_space<vmem>>, %arg3: memref<128x384xbf16, #tpu.memory_space<vmem>>, %arg4: memref<1x384xf32, #tpu.memory_space<vmem>>, %arg5: memref<1x128xf32, #tpu.memory_space<vmem>>, %arg6: memref<8x8x128xf32, #tpu.memory_space<vmem>>, %arg7: memref<8x128xf32, #tpu.memory_space<vmem>>, %arg8: memref<8x8x384xf32, #tpu.memory_space<vmem>>) attributes {dimension_semantics = [#tpu.dimension_semantics<parallel>], iteration_bounds = array<i64: 1>, scalar_prefetch = 0 : i64, scratch_operands = 1 : i64, tpu.core_type = #tpu.core_type<tc>, window_params = [{transform_indices = @transform_0, window_bounds = array<i64: 8, 8, 4>}, {pipeline_mode = #tpu.pipeline_mode<synchronous>, transform_indices = @transform_1, window_bounds = array<i64: 4, 384>}, {pipeline_mode = #tpu.pipeline_mode<synchronous>, transform_indices = @transform_2, window_bounds = array<i64: 128, 384>}, {pipeline_mode = #tpu.pipeline_mode<synchronous>, transform_indices = @transform_3, window_bounds = array<i64: 1, 384>}, {pipeline_mode = #tpu.pipeline_mode<synchronous>, transform_indices = @transform_4, window_bounds = array<i64: 1, 128>}, {transform_indices = @transform_5, window_bounds = array<i64: 8, 8, 128>}, {transform_indices = @transform_6, window_bounds = array<i64: 8, 128>}]} {
    %c0 = arith.constant 0 : index
    %c0_0 = arith.constant 0 : index
    %c0_1 = arith.constant 0 : index
    %0 = vector.load %arg1[%c0, %c0_0, %c0_1] : memref<8x8x4xf32, #tpu.memory_space<vmem>>, vector<8x8x4xf32>
    %1 = vector.shape_cast %0 : vector<8x8x4xf32> to vector<64x4xf32>
    %2 = arith.truncf %1 : vector<64x4xf32> to vector<64x4xbf16>
    %c0_2 = arith.constant 0 : index
    %c0_3 = arith.constant 0 : index
    %3 = vector.load %arg2[%c0_2, %c0_3] : memref<4x384xbf16, #tpu.memory_space<vmem>>, vector<4x384xbf16>
    %cst = arith.constant dense<0.000000e+00> : vector<64x384xf32>
    %4 = tpu.matmul %2, %3, %cst {dimension_numbers = #tpu.dot_dimension_numbers<[1], [0], [0], [1], [0, 0, 1, 1], [], []>} : vector<64x4xbf16>, vector<4x384xbf16>, vector<64x384xf32> -> vector<64x384xf32>
    %c0_4 = arith.constant 0 : index
    %c0_5 = arith.constant 0 : index
    %5 = vector.load %arg4[%c0_4, %c0_5] : memref<1x384xf32, #tpu.memory_space<vmem>>, vector<1x384xf32>
    %6 = vector.broadcast %5 : vector<1x384xf32> to vector<64x384xf32>
    %7 = arith.addf %4, %6 : vector<64x384xf32>
    %8 = vector.shape_cast %7 : vector<64x384xf32> to vector<8x8x384xf32>
    %c0_6 = arith.constant 0 : index
    %c0_7 = arith.constant 0 : index
    %c0_8 = arith.constant 0 : index
    %9 = vector.load %arg8[%c0_6, %c0_7, %c0_8] : memref<8x8x384xf32, #tpu.memory_space<vmem>>, vector<8x8x384xf32>
    tpu.vector_store %arg8[%c0_6, %c0_7, %c0_8], %8 {strides = array<i32>} : memref<8x8x384xf32, #tpu.memory_space<vmem>>, vector<8x8x384xf32>,
    %c0_9 = arith.constant 0 : index
    %c0_10 = arith.constant 0 : index
    %10 = vector.load %arg3[%c0_9, %c0_10] : memref<128x384xbf16, #tpu.memory_space<vmem>>, vector<128x384xbf16>
    %c0_11 = arith.constant 0 : index
    %c0_12 = arith.constant 0 : index
    %11 = vector.load %arg5[%c0_11, %c0_12] : memref<1x128xf32, #tpu.memory_space<vmem>>, vector<1x128xf32>
    %cst_13 = arith.constant 0.000000e+00 : f32
    %12 = vector.broadcast %cst_13 : f32 to vector<8x128xf32>
    %c0_i32 = arith.constant 0 : i32
    %13 = arith.index_cast %c0_i32 : i32 to index
    %c0_14 = arith.constant 0 : index
    %c0_15 = arith.constant 0 : index
    %14 = vector.load %arg8[%13, %c0_14, %c0_15] : memref<8x8x384xf32, #tpu.memory_space<vmem>>, vector<1x8x384xf32>
    %15 = vector.shape_cast %14 : vector<1x8x384xf32> to vector<8x384xf32>
    %16 = arith.truncf %12 : vector<8x128xf32> to vector<8x128xbf16>
    %cst_16 = arith.constant dense<0.000000e+00> : vector<8x384xf32>
    %17 = tpu.matmul %16, %10, %cst_16 {dimension_numbers = #tpu.dot_dimension_numbers<[1], [0], [0], [1], [0, 0, 1, 1], [], []>} : vector<8x128xbf16>, vector<128x384xbf16>, vector<8x384xf32> -> vector<8x384xf32>
    %18 = vector.extract_strided_slice %15 {offsets = [0, 0], sizes = [8, 256], strides = [1, 1]} : vector<8x384xf32> to vector<8x256xf32>
    %19 = vector.extract_strided_slice %17 {offsets = [0, 0], sizes = [8, 256], strides = [1, 1]} : vector<8x384xf32> to vector<8x256xf32>
    %20 = arith.addf %18, %19 : vector<8x256xf32>
    %21 = arith.negf %20 : vector<8x256xf32>
    %22 = math.exp %21 : vector<8x256xf32>
    %cst_17 = arith.constant 1.000000e+00 : f32
    %23 = vector.broadcast %cst_17 : f32 to vector<8x256xf32>
    %24 = arith.addf %23, %22 : vector<8x256xf32>
    %25 = arith.divf %23, %24 : vector<8x256xf32>
    %26 = vector.extract_strided_slice %25 {offsets = [0, 0], sizes = [8, 128], strides = [1, 1]} : vector<8x256xf32> to vector<8x128xf32>
    %27 = vector.extract_strided_slice %25 {offsets = [0, 128], sizes = [8, 128], strides = [1, 1]} : vector<8x256xf32> to vector<8x128xf32>
    %28 = vector.extract_strided_slice %15 {offsets = [0, 256], sizes = [8, 128], strides = [1, 1]} : vector<8x384xf32> to vector<8x128xf32>
    %29 = vector.extract_strided_slice %17 {offsets = [0, 256], sizes = [8, 128], strides = [1, 1]} : vector<8x384xf32> to vector<8x128xf32>
    %30 = vector.broadcast %11 : vector<1x128xf32> to vector<8x128xf32>
    %31 = arith.addf %29, %30 : vector<8x128xf32>
    %32 = arith.mulf %26, %31 : vector<8x128xf32>
    %33 = arith.addf %28, %32 : vector<8x128xf32>
    %34 = math.tanh %33 : vector<8x128xf32>
    %cst_18 = arith.constant 1.000000e+00 : f32
    %35 = vector.broadcast %cst_18 : f32 to vector<8x128xf32>
    %36 = arith.subf %35, %27 : vector<8x128xf32>
    %37 = arith.mulf %36, %34 : vector<8x128xf32>
    %38 = arith.mulf %27, %12 : vector<8x128xf32>
    %39 = arith.addf %37, %38 : vector<8x128xf32>
    %40 = arith.index_cast %c0_i32 : i32 to index
    %c0_19 = arith.constant 0 : index
    %c0_20 = arith.constant 0 : index
    %41 = vector.load %arg6[%40, %c0_19, %c0_20] : memref<8x8x128xf32, #tpu.memory_space<vmem>>, vector<1x8x128xf32>
    %42 = vector.shape_cast %41 : vector<1x8x128xf32> to vector<8x128xf32>
    %43 = vector.shape_cast %39 : vector<8x128xf32> to vector<1x8x128xf32>
    tpu.vector_store %arg6[%40, %c0_19, %c0_20], %43 {strides = array<i32>} : memref<8x8x128xf32, #tpu.memory_space<vmem>>, vector<1x8x128xf32>,
    %c1_i32 = arith.constant 1 : i32
    %44 = arith.index_cast %c1_i32 : i32 to index
    %c0_21 = arith.constant 0 : index
    %c0_22 = arith.constant 0 : index
    %45 = vector.load %arg8[%44, %c0_21, %c0_22] : memref<8x8x384xf32, #tpu.memory_space<vmem>>, vector<1x8x384xf32>
    %46 = vector.shape_cast %45 : vector<1x8x384xf32> to vector<8x384xf32>
    %47 = arith.truncf %39 : vector<8x128xf32> to vector<8x128xbf16>
    %cst_23 = arith.constant dense<0.000000e+00> : vector<8x384xf32>
    %48 = tpu.matmul %47, %10, %cst_23 {dimension_numbers = #tpu.dot_dimension_numbers<[1], [0], [0], [1], [0, 0, 1, 1], [], []>} : vector<8x128xbf16>, vector<128x384xbf16>, vector<8x384xf32> -> vector<8x384xf32>
    %49 = vector.extract_strided_slice %46 {offsets = [0, 0], sizes = [8, 256], strides = [1, 1]} : vector<8x384xf32> to vector<8x256xf32>
    %50 = vector.extract_strided_slice %48 {offsets = [0, 0], sizes = [8, 256], strides = [1, 1]} : vector<8x384xf32> to vector<8x256xf32>
    %51 = arith.addf %49, %50 : vector<8x256xf32>
    %52 = arith.negf %51 : vector<8x256xf32>
    %53 = math.exp %52 : vector<8x256xf32>
    %cst_24 = arith.constant 1.000000e+00 : f32
    %54 = vector.broadcast %cst_24 : f32 to vector<8x256xf32>
    %55 = arith.addf %54, %53 : vector<8x256xf32>
    %56 = arith.divf %54, %55 : vector<8x256xf32>
    %57 = vector.extract_strided_slice %56 {offsets = [0, 0], sizes = [8, 128], strides = [1, 1]} : vector<8x256xf32> to vector<8x128xf32>
    %58 = vector.extract_strided_slice %56 {offsets = [0, 128], sizes = [8, 128], strides = [1, 1]} : vector<8x256xf32> to vector<8x128xf32>
    %59 = vector.extract_strided_slice %46 {offsets = [0, 256], sizes = [8, 128], strides = [1, 1]} : vector<8x384xf32> to vector<8x128xf32>
    %60 = vector.extract_strided_slice %48 {offsets = [0, 256], sizes = [8, 128], strides = [1, 1]} : vector<8x384xf32> to vector<8x128xf32>
    %61 = vector.broadcast %11 : vector<1x128xf32> to vector<8x128xf32>
    %62 = arith.addf %60, %61 : vector<8x128xf32>
    %63 = arith.mulf %57, %62 : vector<8x128xf32>
    %64 = arith.addf %59, %63 : vector<8x128xf32>
    %65 = math.tanh %64 : vector<8x128xf32>
    %cst_25 = arith.constant 1.000000e+00 : f32
    %66 = vector.broadcast %cst_25 : f32 to vector<8x128xf32>
    %67 = arith.subf %66, %58 : vector<8x128xf32>
    %68 = arith.mulf %67, %65 : vector<8x128xf32>
    %69 = arith.mulf %58, %39 : vector<8x128xf32>
    %70 = arith.addf %68, %69 : vector<8x128xf32>
    %71 = arith.index_cast %c1_i32 : i32 to index
    %c0_26 = arith.constant 0 : index
    %c0_27 = arith.constant 0 : index
    %72 = vector.load %arg6[%71, %c0_26, %c0_27] : memref<8x8x128xf32, #tpu.memory_space<vmem>>, vector<1x8x128xf32>
    %73 = vector.shape_cast %72 : vector<1x8x128xf32> to vector<8x128xf32>
    %74 = vector.shape_cast %70 : vector<8x128xf32> to vector<1x8x128xf32>
    tpu.vector_store %arg6[%71, %c0_26, %c0_27], %74 {strides = array<i32>} : memref<8x8x128xf32, #tpu.memory_space<vmem>>, vector<1x8x128xf32>,
    %c2_i32 = arith.constant 2 : i32
    %75 = arith.index_cast %c2_i32 : i32 to index
    %c0_28 = arith.constant 0 : index
    %c0_29 = arith.constant 0 : index
    %76 = vector.load %arg8[%75, %c0_28, %c0_29] : memref<8x8x384xf32, #tpu.memory_space<vmem>>, vector<1x8x384xf32>
    %77 = vector.shape_cast %76 : vector<1x8x384xf32> to vector<8x384xf32>
    %78 = arith.truncf %70 : vector<8x128xf32> to vector<8x128xbf16>
    %cst_30 = arith.constant dense<0.000000e+00> : vector<8x384xf32>
    %79 = tpu.matmul %78, %10, %cst_30 {dimension_numbers = #tpu.dot_dimension_numbers<[1], [0], [0], [1], [0, 0, 1, 1], [], []>} : vector<8x128xbf16>, vector<128x384xbf16>, vector<8x384xf32> -> vector<8x384xf32>
    %80 = vector.extract_strided_slice %77 {offsets = [0, 0], sizes = [8, 256], strides = [1, 1]} : vector<8x384xf32> to vector<8x256xf32>
    %81 = vector.extract_strided_slice %79 {offsets = [0, 0], sizes = [8, 256], strides = [1, 1]} : vector<8x384xf32> to vector<8x256xf32>
    %82 = arith.addf %80, %81 : vector<8x256xf32>
    %83 = arith.negf %82 : vector<8x256xf32>
    %84 = math.exp %83 : vector<8x256xf32>
    %cst_31 = arith.constant 1.000000e+00 : f32
    %85 = vector.broadcast %cst_31 : f32 to vector<8x256xf32>
    %86 = arith.addf %85, %84 : vector<8x256xf32>
    %87 = arith.divf %85, %86 : vector<8x256xf32>
    %88 = vector.extract_strided_slice %87 {offsets = [0, 0], sizes = [8, 128], strides = [1, 1]} : vector<8x256xf32> to vector<8x128xf32>
    %89 = vector.extract_strided_slice %87 {offsets = [0, 128], sizes = [8, 128], strides = [1, 1]} : vector<8x256xf32> to vector<8x128xf32>
    %90 = vector.extract_strided_slice %77 {offsets = [0, 256], sizes = [8, 128], strides = [1, 1]} : vector<8x384xf32> to vector<8x128xf32>
    %91 = vector.extract_strided_slice %79 {offsets = [0, 256], sizes = [8, 128], strides = [1, 1]} : vector<8x384xf32> to vector<8x128xf32>
    %92 = vector.broadcast %11 : vector<1x128xf32> to vector<8x128xf32>
    %93 = arith.addf %91, %92 : vector<8x128xf32>
    %94 = arith.mulf %88, %93 : vector<8x128xf32>
    %95 = arith.addf %90, %94 : vector<8x128xf32>
    %96 = math.tanh %95 : vector<8x128xf32>
    %cst_32 = arith.constant 1.000000e+00 : f32
    %97 = vector.broadcast %cst_32 : f32 to vector<8x128xf32>
    %98 = arith.subf %97, %89 : vector<8x128xf32>
    %99 = arith.mulf %98, %96 : vector<8x128xf32>
    %100 = arith.mulf %89, %70 : vector<8x128xf32>
    %101 = arith.addf %99, %100 : vector<8x128xf32>
    %102 = arith.index_cast %c2_i32 : i32 to index
    %c0_33 = arith.constant 0 : index
    %c0_34 = arith.constant 0 : index
    %103 = vector.load %arg6[%102, %c0_33, %c0_34] : memref<8x8x128xf32, #tpu.memory_space<vmem>>, vector<1x8x128xf32>
    %104 = vector.shape_cast %103 : vector<1x8x128xf32> to vector<8x128xf32>
    %105 = vector.shape_cast %101 : vector<8x128xf32> to vector<1x8x128xf32>
    tpu.vector_store %arg6[%102, %c0_33, %c0_34], %105 {strides = array<i32>} : memref<8x8x128xf32, #tpu.memory_space<vmem>>, vector<1x8x128xf32>,
    %c3_i32 = arith.constant 3 : i32
    %106 = arith.index_cast %c3_i32 : i32 to index
    %c0_35 = arith.constant 0 : index
    %c0_36 = arith.constant 0 : index
    %107 = vector.load %arg8[%106, %c0_35, %c0_36] : memref<8x8x384xf32, #tpu.memory_space<vmem>>, vector<1x8x384xf32>
    %108 = vector.shape_cast %107 : vector<1x8x384xf32> to vector<8x384xf32>
    %109 = arith.truncf %101 : vector<8x128xf32> to vector<8x128xbf16>
    %cst_37 = arith.constant dense<0.000000e+00> : vector<8x384xf32>
    %110 = tpu.matmul %109, %10, %cst_37 {dimension_numbers = #tpu.dot_dimension_numbers<[1], [0], [0], [1], [0, 0, 1, 1], [], []>} : vector<8x128xbf16>, vector<128x384xbf16>, vector<8x384xf32> -> vector<8x384xf32>
    %111 = vector.extract_strided_slice %108 {offsets = [0, 0], sizes = [8, 256], strides = [1, 1]} : vector<8x384xf32> to vector<8x256xf32>
    %112 = vector.extract_strided_slice %110 {offsets = [0, 0], sizes = [8, 256], strides = [1, 1]} : vector<8x384xf32> to vector<8x256xf32>
    %113 = arith.addf %111, %112 : vector<8x256xf32>
    %114 = arith.negf %113 : vector<8x256xf32>
    %115 = math.exp %114 : vector<8x256xf32>
    %cst_38 = arith.constant 1.000000e+00 : f32
    %116 = vector.broadcast %cst_38 : f32 to vector<8x256xf32>
    %117 = arith.addf %116, %115 : vector<8x256xf32>
    %118 = arith.divf %116, %117 : vector<8x256xf32>
    %119 = vector.extract_strided_slice %118 {offsets = [0, 0], sizes = [8, 128], strides = [1, 1]} : vector<8x256xf32> to vector<8x128xf32>
    %120 = vector.extract_strided_slice %118 {offsets = [0, 128], sizes = [8, 128], strides = [1, 1]} : vector<8x256xf32> to vector<8x128xf32>
    %121 = vector.extract_strided_slice %108 {offsets = [0, 256], sizes = [8, 128], strides = [1, 1]} : vector<8x384xf32> to vector<8x128xf32>
    %122 = vector.extract_strided_slice %110 {offsets = [0, 256], sizes = [8, 128], strides = [1, 1]} : vector<8x384xf32> to vector<8x128xf32>
    %123 = vector.broadcast %11 : vector<1x128xf32> to vector<8x128xf32>
    %124 = arith.addf %122, %123 : vector<8x128xf32>
    %125 = arith.mulf %119, %124 : vector<8x128xf32>
    %126 = arith.addf %121, %125 : vector<8x128xf32>
    %127 = math.tanh %126 : vector<8x128xf32>
    %cst_39 = arith.constant 1.000000e+00 : f32
    %128 = vector.broadcast %cst_39 : f32 to vector<8x128xf32>
    %129 = arith.subf %128, %120 : vector<8x128xf32>
    %130 = arith.mulf %129, %127 : vector<8x128xf32>
    %131 = arith.mulf %120, %101 : vector<8x128xf32>
    %132 = arith.addf %130, %131 : vector<8x128xf32>
    %133 = arith.index_cast %c3_i32 : i32 to index
    %c0_40 = arith.constant 0 : index
    %c0_41 = arith.constant 0 : index
    %134 = vector.load %arg6[%133, %c0_40, %c0_41] : memref<8x8x128xf32, #tpu.memory_space<vmem>>, vector<1x8x128xf32>
    %135 = vector.shape_cast %134 : vector<1x8x128xf32> to vector<8x128xf32>
    %136 = vector.shape_cast %132 : vector<8x128xf32> to vector<1x8x128xf32>
    tpu.vector_store %arg6[%133, %c0_40, %c0_41], %136 {strides = array<i32>} : memref<8x8x128xf32, #tpu.memory_space<vmem>>, vector<1x8x128xf32>,
    %c4_i32 = arith.constant 4 : i32
    %137 = arith.index_cast %c4_i32 : i32 to index
    %c0_42 = arith.constant 0 : index
    %c0_43 = arith.constant 0 : index
    %138 = vector.load %arg8[%137, %c0_42, %c0_43] : memref<8x8x384xf32, #tpu.memory_space<vmem>>, vector<1x8x384xf32>
    %139 = vector.shape_cast %138 : vector<1x8x384xf32> to vector<8x384xf32>
    %140 = arith.truncf %132 : vector<8x128xf32> to vector<8x128xbf16>
    %cst_44 = arith.constant dense<0.000000e+00> : vector<8x384xf32>
    %141 = tpu.matmul %140, %10, %cst_44 {dimension_numbers = #tpu.dot_dimension_numbers<[1], [0], [0], [1], [0, 0, 1, 1], [], []>} : vector<8x128xbf16>, vector<128x384xbf16>, vector<8x384xf32> -> vector<8x384xf32>
    %142 = vector.extract_strided_slice %139 {offsets = [0, 0], sizes = [8, 256], strides = [1, 1]} : vector<8x384xf32> to vector<8x256xf32>
    %143 = vector.extract_strided_slice %141 {offsets = [0, 0], sizes = [8, 256], strides = [1, 1]} : vector<8x384xf32> to vector<8x256xf32>
    %144 = arith.addf %142, %143 : vector<8x256xf32>
    %145 = arith.negf %144 : vector<8x256xf32>
    %146 = math.exp %145 : vector<8x256xf32>
    %cst_45 = arith.constant 1.000000e+00 : f32
    %147 = vector.broadcast %cst_45 : f32 to vector<8x256xf32>
    %148 = arith.addf %147, %146 : vector<8x256xf32>
    %149 = arith.divf %147, %148 : vector<8x256xf32>
    %150 = vector.extract_strided_slice %149 {offsets = [0, 0], sizes = [8, 128], strides = [1, 1]} : vector<8x256xf32> to vector<8x128xf32>
    %151 = vector.extract_strided_slice %149 {offsets = [0, 128], sizes = [8, 128], strides = [1, 1]} : vector<8x256xf32> to vector<8x128xf32>
    %152 = vector.extract_strided_slice %139 {offsets = [0, 256], sizes = [8, 128], strides = [1, 1]} : vector<8x384xf32> to vector<8x128xf32>
    %153 = vector.extract_strided_slice %141 {offsets = [0, 256], sizes = [8, 128], strides = [1, 1]} : vector<8x384xf32> to vector<8x128xf32>
    %154 = vector.broadcast %11 : vector<1x128xf32> to vector<8x128xf32>
    %155 = arith.addf %153, %154 : vector<8x128xf32>
    %156 = arith.mulf %150, %155 : vector<8x128xf32>
    %157 = arith.addf %152, %156 : vector<8x128xf32>
    %158 = math.tanh %157 : vector<8x128xf32>
    %cst_46 = arith.constant 1.000000e+00 : f32
    %159 = vector.broadcast %cst_46 : f32 to vector<8x128xf32>
    %160 = arith.subf %159, %151 : vector<8x128xf32>
    %161 = arith.mulf %160, %158 : vector<8x128xf32>
    %162 = arith.mulf %151, %132 : vector<8x128xf32>
    %163 = arith.addf %161, %162 : vector<8x128xf32>
    %164 = arith.index_cast %c4_i32 : i32 to index
    %c0_47 = arith.constant 0 : index
    %c0_48 = arith.constant 0 : index
    %165 = vector.load %arg6[%164, %c0_47, %c0_48] : memref<8x8x128xf32, #tpu.memory_space<vmem>>, vector<1x8x128xf32>
    %166 = vector.shape_cast %165 : vector<1x8x128xf32> to vector<8x128xf32>
    %167 = vector.shape_cast %163 : vector<8x128xf32> to vector<1x8x128xf32>
    tpu.vector_store %arg6[%164, %c0_47, %c0_48], %167 {strides = array<i32>} : memref<8x8x128xf32, #tpu.memory_space<vmem>>, vector<1x8x128xf32>,
    %c5_i32 = arith.constant 5 : i32
    %168 = arith.index_cast %c5_i32 : i32 to index
    %c0_49 = arith.constant 0 : index
    %c0_50 = arith.constant 0 : index
    %169 = vector.load %arg8[%168, %c0_49, %c0_50] : memref<8x8x384xf32, #tpu.memory_space<vmem>>, vector<1x8x384xf32>
    %170 = vector.shape_cast %169 : vector<1x8x384xf32> to vector<8x384xf32>
    %171 = arith.truncf %163 : vector<8x128xf32> to vector<8x128xbf16>
    %cst_51 = arith.constant dense<0.000000e+00> : vector<8x384xf32>
    %172 = tpu.matmul %171, %10, %cst_51 {dimension_numbers = #tpu.dot_dimension_numbers<[1], [0], [0], [1], [0, 0, 1, 1], [], []>} : vector<8x128xbf16>, vector<128x384xbf16>, vector<8x384xf32> -> vector<8x384xf32>
    %173 = vector.extract_strided_slice %170 {offsets = [0, 0], sizes = [8, 256], strides = [1, 1]} : vector<8x384xf32> to vector<8x256xf32>
    %174 = vector.extract_strided_slice %172 {offsets = [0, 0], sizes = [8, 256], strides = [1, 1]} : vector<8x384xf32> to vector<8x256xf32>
    %175 = arith.addf %173, %174 : vector<8x256xf32>
    %176 = arith.negf %175 : vector<8x256xf32>
    %177 = math.exp %176 : vector<8x256xf32>
    %cst_52 = arith.constant 1.000000e+00 : f32
    %178 = vector.broadcast %cst_52 : f32 to vector<8x256xf32>
    %179 = arith.addf %178, %177 : vector<8x256xf32>
    %180 = arith.divf %178, %179 : vector<8x256xf32>
    %181 = vector.extract_strided_slice %180 {offsets = [0, 0], sizes = [8, 128], strides = [1, 1]} : vector<8x256xf32> to vector<8x128xf32>
    %182 = vector.extract_strided_slice %180 {offsets = [0, 128], sizes = [8, 128], strides = [1, 1]} : vector<8x256xf32> to vector<8x128xf32>
    %183 = vector.extract_strided_slice %170 {offsets = [0, 256], sizes = [8, 128], strides = [1, 1]} : vector<8x384xf32> to vector<8x128xf32>
    %184 = vector.extract_strided_slice %172 {offsets = [0, 256], sizes = [8, 128], strides = [1, 1]} : vector<8x384xf32> to vector<8x128xf32>
    %185 = vector.broadcast %11 : vector<1x128xf32> to vector<8x128xf32>
    %186 = arith.addf %184, %185 : vector<8x128xf32>
    %187 = arith.mulf %181, %186 : vector<8x128xf32>
    %188 = arith.addf %183, %187 : vector<8x128xf32>
    %189 = math.tanh %188 : vector<8x128xf32>
    %cst_53 = arith.constant 1.000000e+00 : f32
    %190 = vector.broadcast %cst_53 : f32 to vector<8x128xf32>
    %191 = arith.subf %190, %182 : vector<8x128xf32>
    %192 = arith.mulf %191, %189 : vector<8x128xf32>
    %193 = arith.mulf %182, %163 : vector<8x128xf32>
    %194 = arith.addf %192, %193 : vector<8x128xf32>
    %195 = arith.index_cast %c5_i32 : i32 to index
    %c0_54 = arith.constant 0 : index
    %c0_55 = arith.constant 0 : index
    %196 = vector.load %arg6[%195, %c0_54, %c0_55] : memref<8x8x128xf32, #tpu.memory_space<vmem>>, vector<1x8x128xf32>
    %197 = vector.shape_cast %196 : vector<1x8x128xf32> to vector<8x128xf32>
    %198 = vector.shape_cast %194 : vector<8x128xf32> to vector<1x8x128xf32>
    tpu.vector_store %arg6[%195, %c0_54, %c0_55], %198 {strides = array<i32>} : memref<8x8x128xf32, #tpu.memory_space<vmem>>, vector<1x8x128xf32>,
    %c6_i32 = arith.constant 6 : i32
    %199 = arith.index_cast %c6_i32 : i32 to index
    %c0_56 = arith.constant 0 : index
    %c0_57 = arith.constant 0 : index
    %200 = vector.load %arg8[%199, %c0_56, %c0_57] : memref<8x8x384xf32, #tpu.memory_space<vmem>>, vector<1x8x384xf32>
    %201 = vector.shape_cast %200 : vector<1x8x384xf32> to vector<8x384xf32>
    %202 = arith.truncf %194 : vector<8x128xf32> to vector<8x128xbf16>
    %cst_58 = arith.constant dense<0.000000e+00> : vector<8x384xf32>
    %203 = tpu.matmul %202, %10, %cst_58 {dimension_numbers = #tpu.dot_dimension_numbers<[1], [0], [0], [1], [0, 0, 1, 1], [], []>} : vector<8x128xbf16>, vector<128x384xbf16>, vector<8x384xf32> -> vector<8x384xf32>
    %204 = vector.extract_strided_slice %201 {offsets = [0, 0], sizes = [8, 256], strides = [1, 1]} : vector<8x384xf32> to vector<8x256xf32>
    %205 = vector.extract_strided_slice %203 {offsets = [0, 0], sizes = [8, 256], strides = [1, 1]} : vector<8x384xf32> to vector<8x256xf32>
    %206 = arith.addf %204, %205 : vector<8x256xf32>
    %207 = arith.negf %206 : vector<8x256xf32>
    %208 = math.exp %207 : vector<8x256xf32>
    %cst_59 = arith.constant 1.000000e+00 : f32
    %209 = vector.broadcast %cst_59 : f32 to vector<8x256xf32>
    %210 = arith.addf %209, %208 : vector<8x256xf32>
    %211 = arith.divf %209, %210 : vector<8x256xf32>
    %212 = vector.extract_strided_slice %211 {offsets = [0, 0], sizes = [8, 128], strides = [1, 1]} : vector<8x256xf32> to vector<8x128xf32>
    %213 = vector.extract_strided_slice %211 {offsets = [0, 128], sizes = [8, 128], strides = [1, 1]} : vector<8x256xf32> to vector<8x128xf32>
    %214 = vector.extract_strided_slice %201 {offsets = [0, 256], sizes = [8, 128], strides = [1, 1]} : vector<8x384xf32> to vector<8x128xf32>
    %215 = vector.extract_strided_slice %203 {offsets = [0, 256], sizes = [8, 128], strides = [1, 1]} : vector<8x384xf32> to vector<8x128xf32>
    %216 = vector.broadcast %11 : vector<1x128xf32> to vector<8x128xf32>
    %217 = arith.addf %215, %216 : vector<8x128xf32>
    %218 = arith.mulf %212, %217 : vector<8x128xf32>
    %219 = arith.addf %214, %218 : vector<8x128xf32>
    %220 = math.tanh %219 : vector<8x128xf32>
    %cst_60 = arith.constant 1.000000e+00 : f32
    %221 = vector.broadcast %cst_60 : f32 to vector<8x128xf32>
    %222 = arith.subf %221, %213 : vector<8x128xf32>
    %223 = arith.mulf %222, %220 : vector<8x128xf32>
    %224 = arith.mulf %213, %194 : vector<8x128xf32>
    %225 = arith.addf %223, %224 : vector<8x128xf32>
    %226 = arith.index_cast %c6_i32 : i32 to index
    %c0_61 = arith.constant 0 : index
    %c0_62 = arith.constant 0 : index
    %227 = vector.load %arg6[%226, %c0_61, %c0_62] : memref<8x8x128xf32, #tpu.memory_space<vmem>>, vector<1x8x128xf32>
    %228 = vector.shape_cast %227 : vector<1x8x128xf32> to vector<8x128xf32>
    %229 = vector.shape_cast %225 : vector<8x128xf32> to vector<1x8x128xf32>
    tpu.vector_store %arg6[%226, %c0_61, %c0_62], %229 {strides = array<i32>} : memref<8x8x128xf32, #tpu.memory_space<vmem>>, vector<1x8x128xf32>,
    %c7_i32 = arith.constant 7 : i32
    %230 = arith.index_cast %c7_i32 : i32 to index
    %c0_63 = arith.constant 0 : index
    %c0_64 = arith.constant 0 : index
    %231 = vector.load %arg8[%230, %c0_63, %c0_64] : memref<8x8x384xf32, #tpu.memory_space<vmem>>, vector<1x8x384xf32>
    %232 = vector.shape_cast %231 : vector<1x8x384xf32> to vector<8x384xf32>
    %233 = arith.truncf %225 : vector<8x128xf32> to vector<8x128xbf16>
    %cst_65 = arith.constant dense<0.000000e+00> : vector<8x384xf32>
    %234 = tpu.matmul %233, %10, %cst_65 {dimension_numbers = #tpu.dot_dimension_numbers<[1], [0], [0], [1], [0, 0, 1, 1], [], []>} : vector<8x128xbf16>, vector<128x384xbf16>, vector<8x384xf32> -> vector<8x384xf32>
    %235 = vector.extract_strided_slice %232 {offsets = [0, 0], sizes = [8, 256], strides = [1, 1]} : vector<8x384xf32> to vector<8x256xf32>
    %236 = vector.extract_strided_slice %234 {offsets = [0, 0], sizes = [8, 256], strides = [1, 1]} : vector<8x384xf32> to vector<8x256xf32>
    %237 = arith.addf %235, %236 : vector<8x256xf32>
    %238 = arith.negf %237 : vector<8x256xf32>
    %239 = math.exp %238 : vector<8x256xf32>
    %cst_66 = arith.constant 1.000000e+00 : f32
    %240 = vector.broadcast %cst_66 : f32 to vector<8x256xf32>
    %241 = arith.addf %240, %239 : vector<8x256xf32>
    %242 = arith.divf %240, %241 : vector<8x256xf32>
    %243 = vector.extract_strided_slice %242 {offsets = [0, 0], sizes = [8, 128], strides = [1, 1]} : vector<8x256xf32> to vector<8x128xf32>
    %244 = vector.extract_strided_slice %242 {offsets = [0, 128], sizes = [8, 128], strides = [1, 1]} : vector<8x256xf32> to vector<8x128xf32>
    %245 = vector.extract_strided_slice %232 {offsets = [0, 256], sizes = [8, 128], strides = [1, 1]} : vector<8x384xf32> to vector<8x128xf32>
    %246 = vector.extract_strided_slice %234 {offsets = [0, 256], sizes = [8, 128], strides = [1, 1]} : vector<8x384xf32> to vector<8x128xf32>
    %247 = vector.broadcast %11 : vector<1x128xf32> to vector<8x128xf32>
    %248 = arith.addf %246, %247 : vector<8x128xf32>
    %249 = arith.mulf %243, %248 : vector<8x128xf32>
    %250 = arith.addf %245, %249 : vector<8x128xf32>
    %251 = math.tanh %250 : vector<8x128xf32>
    %cst_67 = arith.constant 1.000000e+00 : f32
    %252 = vector.broadcast %cst_67 : f32 to vector<8x128xf32>
    %253 = arith.subf %252, %244 : vector<8x128xf32>
    %254 = arith.mulf %253, %251 : vector<8x128xf32>
    %255 = arith.mulf %244, %225 : vector<8x128xf32>
    %256 = arith.addf %254, %255 : vector<8x128xf32>
    %257 = arith.index_cast %c7_i32 : i32 to index
    %c0_68 = arith.constant 0 : index
    %c0_69 = arith.constant 0 : index
    %258 = vector.load %arg6[%257, %c0_68, %c0_69] : memref<8x8x128xf32, #tpu.memory_space<vmem>>, vector<1x8x128xf32>
    %259 = vector.shape_cast %258 : vector<1x8x128xf32> to vector<8x128xf32>
    %260 = vector.shape_cast %256 : vector<8x128xf32> to vector<1x8x128xf32>
    tpu.vector_store %arg6[%257, %c0_68, %c0_69], %260 {strides = array<i32>} : memref<8x8x128xf32, #tpu.memory_space<vmem>>, vector<1x8x128xf32>,
    %c8_i32 = arith.constant 8 : i32
    %c0_70 = arith.constant 0 : index
    %c0_71 = arith.constant 0 : index
    %261 = vector.load %arg7[%c0_70, %c0_71] : memref<8x128xf32, #tpu.memory_space<vmem>>, vector<8x128xf32>
    tpu.vector_store %arg7[%c0_70, %c0_71], %256 {strides = array<i32>} : memref<8x128xf32, #tpu.memory_space<vmem>>, vector<8x128xf32>,
    return
  }
  func.func @transform_0(%arg0: i32) -> (i32, i32, i32) {
    %c0_i32 = arith.constant 0 : i32
    %c0_i32_0 = arith.constant 0 : i32
    %c0_i32_1 = arith.constant 0 : i32
    return %c0_i32, %arg0, %c0_i32_0 : i32, i32, i32
  }
  func.func @transform_1(%arg0: i32) -> (i32, i32) {
    %c0_i32 = arith.constant 0 : i32
    %c0_i32_0 = arith.constant 0 : i32
    %c0_i32_1 = arith.constant 0 : i32
    return %c0_i32, %c0_i32_0 : i32, i32
  }
  func.func @transform_2(%arg0: i32) -> (i32, i32) {
    %c0_i32 = arith.constant 0 : i32
    %c0_i32_0 = arith.constant 0 : i32
    %c0_i32_1 = arith.constant 0 : i32
    return %c0_i32, %c0_i32_0 : i32, i32
  }
  func.func @transform_3(%arg0: i32) -> (i32, i32) {
    %c0_i32 = arith.constant 0 : i32
    %c0_i32_0 = arith.constant 0 : i32
    %c0_i32_1 = arith.constant 0 : i32
    return %c0_i32, %c0_i32_0 : i32, i32
  }
  func.func @transform_4(%arg0: i32) -> (i32, i32) {
    %c0_i32 = arith.constant 0 : i32
    %c0_i32_0 = arith.constant 0 : i32
    %c0_i32_1 = arith.constant 0 : i32
    return %c0_i32, %c0_i32_0 : i32, i32
  }
  func.func @transform_5(%arg0: i32) -> (i32, i32, i32) {
    %c0_i32 = arith.constant 0 : i32
    %c0_i32_0 = arith.constant 0 : i32
    %c0_i32_1 = arith.constant 0 : i32
    return %c0_i32, %arg0, %c0_i32_0 : i32, i32, i32
  }
  func.func @transform_6(%arg0: i32) -> (i32, i32) {
    %c0_i32 = arith.constant 0 : i32
    %c0_i32_0 = arith.constant 0 : i32
    return %arg0, %c0_i32 : i32, i32
  }
}

module attributes {stable_mosaic.version = 11 : i64} {
  func.func @gru_layer_kernel(%arg0: i32, %arg1: memref<4x8x128xf32, #tpu.memory_space<vmem>>, %arg2: memref<128x384xbf16, #tpu.memory_space<vmem>>, %arg3: memref<128x384xbf16, #tpu.memory_space<vmem>>, %arg4: memref<1x384xf32, #tpu.memory_space<vmem>>, %arg5: memref<1x128xf32, #tpu.memory_space<vmem>>, %arg6: memref<4x8x128xf32, #tpu.memory_space<vmem>>, %arg7: memref<8x128xf32, #tpu.memory_space<vmem>>, %arg8: memref<4x8x384xf32, #tpu.memory_space<vmem>>) attributes {dimension_semantics = [#tpu.dimension_semantics<parallel>], iteration_bounds = array<i64: 1>, scalar_prefetch = 0 : i64, scratch_operands = 1 : i64, tpu.core_type = #tpu.core_type<tc>, window_params = [{transform_indices = @transform_0, window_bounds = array<i64: 4, 8, 128>}, {pipeline_mode = #tpu.pipeline_mode<synchronous>, transform_indices = @transform_1, window_bounds = array<i64: 128, 384>}, {pipeline_mode = #tpu.pipeline_mode<synchronous>, transform_indices = @transform_2, window_bounds = array<i64: 128, 384>}, {pipeline_mode = #tpu.pipeline_mode<synchronous>, transform_indices = @transform_3, window_bounds = array<i64: 1, 384>}, {pipeline_mode = #tpu.pipeline_mode<synchronous>, transform_indices = @transform_4, window_bounds = array<i64: 1, 128>}, {transform_indices = @transform_5, window_bounds = array<i64: 4, 8, 128>}, {transform_indices = @transform_6, window_bounds = array<i64: 8, 128>}]} {
    %c0 = arith.constant 0 : index
    %c0_0 = arith.constant 0 : index
    %c0_1 = arith.constant 0 : index
    %0 = vector.load %arg1[%c0, %c0_0, %c0_1] : memref<4x8x128xf32, #tpu.memory_space<vmem>>, vector<4x8x128xf32>
    %1 = vector.shape_cast %0 : vector<4x8x128xf32> to vector<32x128xf32>
    %2 = arith.truncf %1 : vector<32x128xf32> to vector<32x128xbf16>
    %c0_2 = arith.constant 0 : index
    %c0_3 = arith.constant 0 : index
    %3 = vector.load %arg2[%c0_2, %c0_3] : memref<128x384xbf16, #tpu.memory_space<vmem>>, vector<128x384xbf16>
    %cst = arith.constant dense<0.000000e+00> : vector<32x384xf32>
    %4 = tpu.matmul %2, %3, %cst {dimension_numbers = #tpu.dot_dimension_numbers<[1], [0], [0], [1], [0, 0, 1, 1], [], []>} : vector<32x128xbf16>, vector<128x384xbf16>, vector<32x384xf32> -> vector<32x384xf32>
    %c0_4 = arith.constant 0 : index
    %c0_5 = arith.constant 0 : index
    %5 = vector.load %arg4[%c0_4, %c0_5] : memref<1x384xf32, #tpu.memory_space<vmem>>, vector<1x384xf32>
    %6 = vector.broadcast %5 : vector<1x384xf32> to vector<32x384xf32>
    %7 = arith.addf %4, %6 : vector<32x384xf32>
    %8 = vector.shape_cast %7 : vector<32x384xf32> to vector<4x8x384xf32>
    %c0_6 = arith.constant 0 : index
    %c0_7 = arith.constant 0 : index
    %c0_8 = arith.constant 0 : index
    %9 = vector.load %arg8[%c0_6, %c0_7, %c0_8] : memref<4x8x384xf32, #tpu.memory_space<vmem>>, vector<4x8x384xf32>
    tpu.vector_store %arg8[%c0_6, %c0_7, %c0_8], %8 {strides = array<i32>} : memref<4x8x384xf32, #tpu.memory_space<vmem>>, vector<4x8x384xf32>,
    %c0_9 = arith.constant 0 : index
    %c0_10 = arith.constant 0 : index
    %10 = vector.load %arg3[%c0_9, %c0_10] : memref<128x384xbf16, #tpu.memory_space<vmem>>, vector<128x384xbf16>
    %c0_11 = arith.constant 0 : index
    %c0_12 = arith.constant 0 : index
    %11 = vector.load %arg5[%c0_11, %c0_12] : memref<1x128xf32, #tpu.memory_space<vmem>>, vector<1x128xf32>
    %cst_13 = arith.constant 0.000000e+00 : f32
    %12 = vector.broadcast %cst_13 : f32 to vector<8x128xf32>
    %c0_i32 = arith.constant 0 : i32
    %13 = arith.index_cast %c0_i32 : i32 to index
    %c0_14 = arith.constant 0 : index
    %c0_15 = arith.constant 0 : index
    %14 = vector.load %arg8[%13, %c0_14, %c0_15] : memref<4x8x384xf32, #tpu.memory_space<vmem>>, vector<1x8x384xf32>
    %15 = vector.shape_cast %14 : vector<1x8x384xf32> to vector<8x384xf32>
    %16 = arith.truncf %12 : vector<8x128xf32> to vector<8x128xbf16>
    %cst_16 = arith.constant dense<0.000000e+00> : vector<8x384xf32>
    %17 = tpu.matmul %16, %10, %cst_16 {dimension_numbers = #tpu.dot_dimension_numbers<[1], [0], [0], [1], [0, 0, 1, 1], [], []>} : vector<8x128xbf16>, vector<128x384xbf16>, vector<8x384xf32> -> vector<8x384xf32>
    %18 = vector.extract_strided_slice %15 {offsets = [0, 0], sizes = [8, 256], strides = [1, 1]} : vector<8x384xf32> to vector<8x256xf32>
    %19 = vector.extract_strided_slice %17 {offsets = [0, 0], sizes = [8, 256], strides = [1, 1]} : vector<8x384xf32> to vector<8x256xf32>
    %20 = arith.addf %18, %19 : vector<8x256xf32>
    %21 = arith.negf %20 : vector<8x256xf32>
    %22 = math.exp %21 : vector<8x256xf32>
    %cst_17 = arith.constant 1.000000e+00 : f32
    %23 = vector.broadcast %cst_17 : f32 to vector<8x256xf32>
    %24 = arith.addf %23, %22 : vector<8x256xf32>
    %25 = arith.divf %23, %24 : vector<8x256xf32>
    %26 = vector.extract_strided_slice %25 {offsets = [0, 0], sizes = [8, 128], strides = [1, 1]} : vector<8x256xf32> to vector<8x128xf32>
    %27 = vector.extract_strided_slice %25 {offsets = [0, 128], sizes = [8, 128], strides = [1, 1]} : vector<8x256xf32> to vector<8x128xf32>
    %28 = vector.extract_strided_slice %15 {offsets = [0, 256], sizes = [8, 128], strides = [1, 1]} : vector<8x384xf32> to vector<8x128xf32>
    %29 = vector.extract_strided_slice %17 {offsets = [0, 256], sizes = [8, 128], strides = [1, 1]} : vector<8x384xf32> to vector<8x128xf32>
    %30 = vector.broadcast %11 : vector<1x128xf32> to vector<8x128xf32>
    %31 = arith.addf %29, %30 : vector<8x128xf32>
    %32 = arith.mulf %26, %31 : vector<8x128xf32>
    %33 = arith.addf %28, %32 : vector<8x128xf32>
    %34 = math.tanh %33 : vector<8x128xf32>
    %cst_18 = arith.constant 1.000000e+00 : f32
    %35 = vector.broadcast %cst_18 : f32 to vector<8x128xf32>
    %36 = arith.subf %35, %27 : vector<8x128xf32>
    %37 = arith.mulf %36, %34 : vector<8x128xf32>
    %38 = arith.mulf %27, %12 : vector<8x128xf32>
    %39 = arith.addf %37, %38 : vector<8x128xf32>
    %40 = arith.index_cast %c0_i32 : i32 to index
    %c0_19 = arith.constant 0 : index
    %c0_20 = arith.constant 0 : index
    %41 = vector.load %arg6[%40, %c0_19, %c0_20] : memref<4x8x128xf32, #tpu.memory_space<vmem>>, vector<1x8x128xf32>
    %42 = vector.shape_cast %41 : vector<1x8x128xf32> to vector<8x128xf32>
    %43 = vector.shape_cast %39 : vector<8x128xf32> to vector<1x8x128xf32>
    tpu.vector_store %arg6[%40, %c0_19, %c0_20], %43 {strides = array<i32>} : memref<4x8x128xf32, #tpu.memory_space<vmem>>, vector<1x8x128xf32>,
    %c1_i32 = arith.constant 1 : i32
    %44 = arith.index_cast %c1_i32 : i32 to index
    %c0_21 = arith.constant 0 : index
    %c0_22 = arith.constant 0 : index
    %45 = vector.load %arg8[%44, %c0_21, %c0_22] : memref<4x8x384xf32, #tpu.memory_space<vmem>>, vector<1x8x384xf32>
    %46 = vector.shape_cast %45 : vector<1x8x384xf32> to vector<8x384xf32>
    %47 = arith.truncf %39 : vector<8x128xf32> to vector<8x128xbf16>
    %cst_23 = arith.constant dense<0.000000e+00> : vector<8x384xf32>
    %48 = tpu.matmul %47, %10, %cst_23 {dimension_numbers = #tpu.dot_dimension_numbers<[1], [0], [0], [1], [0, 0, 1, 1], [], []>} : vector<8x128xbf16>, vector<128x384xbf16>, vector<8x384xf32> -> vector<8x384xf32>
    %49 = vector.extract_strided_slice %46 {offsets = [0, 0], sizes = [8, 256], strides = [1, 1]} : vector<8x384xf32> to vector<8x256xf32>
    %50 = vector.extract_strided_slice %48 {offsets = [0, 0], sizes = [8, 256], strides = [1, 1]} : vector<8x384xf32> to vector<8x256xf32>
    %51 = arith.addf %49, %50 : vector<8x256xf32>
    %52 = arith.negf %51 : vector<8x256xf32>
    %53 = math.exp %52 : vector<8x256xf32>
    %cst_24 = arith.constant 1.000000e+00 : f32
    %54 = vector.broadcast %cst_24 : f32 to vector<8x256xf32>
    %55 = arith.addf %54, %53 : vector<8x256xf32>
    %56 = arith.divf %54, %55 : vector<8x256xf32>
    %57 = vector.extract_strided_slice %56 {offsets = [0, 0], sizes = [8, 128], strides = [1, 1]} : vector<8x256xf32> to vector<8x128xf32>
    %58 = vector.extract_strided_slice %56 {offsets = [0, 128], sizes = [8, 128], strides = [1, 1]} : vector<8x256xf32> to vector<8x128xf32>
    %59 = vector.extract_strided_slice %46 {offsets = [0, 256], sizes = [8, 128], strides = [1, 1]} : vector<8x384xf32> to vector<8x128xf32>
    %60 = vector.extract_strided_slice %48 {offsets = [0, 256], sizes = [8, 128], strides = [1, 1]} : vector<8x384xf32> to vector<8x128xf32>
    %61 = vector.broadcast %11 : vector<1x128xf32> to vector<8x128xf32>
    %62 = arith.addf %60, %61 : vector<8x128xf32>
    %63 = arith.mulf %57, %62 : vector<8x128xf32>
    %64 = arith.addf %59, %63 : vector<8x128xf32>
    %65 = math.tanh %64 : vector<8x128xf32>
    %cst_25 = arith.constant 1.000000e+00 : f32
    %66 = vector.broadcast %cst_25 : f32 to vector<8x128xf32>
    %67 = arith.subf %66, %58 : vector<8x128xf32>
    %68 = arith.mulf %67, %65 : vector<8x128xf32>
    %69 = arith.mulf %58, %39 : vector<8x128xf32>
    %70 = arith.addf %68, %69 : vector<8x128xf32>
    %71 = arith.index_cast %c1_i32 : i32 to index
    %c0_26 = arith.constant 0 : index
    %c0_27 = arith.constant 0 : index
    %72 = vector.load %arg6[%71, %c0_26, %c0_27] : memref<4x8x128xf32, #tpu.memory_space<vmem>>, vector<1x8x128xf32>
    %73 = vector.shape_cast %72 : vector<1x8x128xf32> to vector<8x128xf32>
    %74 = vector.shape_cast %70 : vector<8x128xf32> to vector<1x8x128xf32>
    tpu.vector_store %arg6[%71, %c0_26, %c0_27], %74 {strides = array<i32>} : memref<4x8x128xf32, #tpu.memory_space<vmem>>, vector<1x8x128xf32>,
    %c2_i32 = arith.constant 2 : i32
    %75 = arith.index_cast %c2_i32 : i32 to index
    %c0_28 = arith.constant 0 : index
    %c0_29 = arith.constant 0 : index
    %76 = vector.load %arg8[%75, %c0_28, %c0_29] : memref<4x8x384xf32, #tpu.memory_space<vmem>>, vector<1x8x384xf32>
    %77 = vector.shape_cast %76 : vector<1x8x384xf32> to vector<8x384xf32>
    %78 = arith.truncf %70 : vector<8x128xf32> to vector<8x128xbf16>
    %cst_30 = arith.constant dense<0.000000e+00> : vector<8x384xf32>
    %79 = tpu.matmul %78, %10, %cst_30 {dimension_numbers = #tpu.dot_dimension_numbers<[1], [0], [0], [1], [0, 0, 1, 1], [], []>} : vector<8x128xbf16>, vector<128x384xbf16>, vector<8x384xf32> -> vector<8x384xf32>
    %80 = vector.extract_strided_slice %77 {offsets = [0, 0], sizes = [8, 256], strides = [1, 1]} : vector<8x384xf32> to vector<8x256xf32>
    %81 = vector.extract_strided_slice %79 {offsets = [0, 0], sizes = [8, 256], strides = [1, 1]} : vector<8x384xf32> to vector<8x256xf32>
    %82 = arith.addf %80, %81 : vector<8x256xf32>
    %83 = arith.negf %82 : vector<8x256xf32>
    %84 = math.exp %83 : vector<8x256xf32>
    %cst_31 = arith.constant 1.000000e+00 : f32
    %85 = vector.broadcast %cst_31 : f32 to vector<8x256xf32>
    %86 = arith.addf %85, %84 : vector<8x256xf32>
    %87 = arith.divf %85, %86 : vector<8x256xf32>
    %88 = vector.extract_strided_slice %87 {offsets = [0, 0], sizes = [8, 128], strides = [1, 1]} : vector<8x256xf32> to vector<8x128xf32>
    %89 = vector.extract_strided_slice %87 {offsets = [0, 128], sizes = [8, 128], strides = [1, 1]} : vector<8x256xf32> to vector<8x128xf32>
    %90 = vector.extract_strided_slice %77 {offsets = [0, 256], sizes = [8, 128], strides = [1, 1]} : vector<8x384xf32> to vector<8x128xf32>
    %91 = vector.extract_strided_slice %79 {offsets = [0, 256], sizes = [8, 128], strides = [1, 1]} : vector<8x384xf32> to vector<8x128xf32>
    %92 = vector.broadcast %11 : vector<1x128xf32> to vector<8x128xf32>
    %93 = arith.addf %91, %92 : vector<8x128xf32>
    %94 = arith.mulf %88, %93 : vector<8x128xf32>
    %95 = arith.addf %90, %94 : vector<8x128xf32>
    %96 = math.tanh %95 : vector<8x128xf32>
    %cst_32 = arith.constant 1.000000e+00 : f32
    %97 = vector.broadcast %cst_32 : f32 to vector<8x128xf32>
    %98 = arith.subf %97, %89 : vector<8x128xf32>
    %99 = arith.mulf %98, %96 : vector<8x128xf32>
    %100 = arith.mulf %89, %70 : vector<8x128xf32>
    %101 = arith.addf %99, %100 : vector<8x128xf32>
    %102 = arith.index_cast %c2_i32 : i32 to index
    %c0_33 = arith.constant 0 : index
    %c0_34 = arith.constant 0 : index
    %103 = vector.load %arg6[%102, %c0_33, %c0_34] : memref<4x8x128xf32, #tpu.memory_space<vmem>>, vector<1x8x128xf32>
    %104 = vector.shape_cast %103 : vector<1x8x128xf32> to vector<8x128xf32>
    %105 = vector.shape_cast %101 : vector<8x128xf32> to vector<1x8x128xf32>
    tpu.vector_store %arg6[%102, %c0_33, %c0_34], %105 {strides = array<i32>} : memref<4x8x128xf32, #tpu.memory_space<vmem>>, vector<1x8x128xf32>,
    %c3_i32 = arith.constant 3 : i32
    %106 = arith.index_cast %c3_i32 : i32 to index
    %c0_35 = arith.constant 0 : index
    %c0_36 = arith.constant 0 : index
    %107 = vector.load %arg8[%106, %c0_35, %c0_36] : memref<4x8x384xf32, #tpu.memory_space<vmem>>, vector<1x8x384xf32>
    %108 = vector.shape_cast %107 : vector<1x8x384xf32> to vector<8x384xf32>
    %109 = arith.truncf %101 : vector<8x128xf32> to vector<8x128xbf16>
    %cst_37 = arith.constant dense<0.000000e+00> : vector<8x384xf32>
    %110 = tpu.matmul %109, %10, %cst_37 {dimension_numbers = #tpu.dot_dimension_numbers<[1], [0], [0], [1], [0, 0, 1, 1], [], []>} : vector<8x128xbf16>, vector<128x384xbf16>, vector<8x384xf32> -> vector<8x384xf32>
    %111 = vector.extract_strided_slice %108 {offsets = [0, 0], sizes = [8, 256], strides = [1, 1]} : vector<8x384xf32> to vector<8x256xf32>
    %112 = vector.extract_strided_slice %110 {offsets = [0, 0], sizes = [8, 256], strides = [1, 1]} : vector<8x384xf32> to vector<8x256xf32>
    %113 = arith.addf %111, %112 : vector<8x256xf32>
    %114 = arith.negf %113 : vector<8x256xf32>
    %115 = math.exp %114 : vector<8x256xf32>
    %cst_38 = arith.constant 1.000000e+00 : f32
    %116 = vector.broadcast %cst_38 : f32 to vector<8x256xf32>
    %117 = arith.addf %116, %115 : vector<8x256xf32>
    %118 = arith.divf %116, %117 : vector<8x256xf32>
    %119 = vector.extract_strided_slice %118 {offsets = [0, 0], sizes = [8, 128], strides = [1, 1]} : vector<8x256xf32> to vector<8x128xf32>
    %120 = vector.extract_strided_slice %118 {offsets = [0, 128], sizes = [8, 128], strides = [1, 1]} : vector<8x256xf32> to vector<8x128xf32>
    %121 = vector.extract_strided_slice %108 {offsets = [0, 256], sizes = [8, 128], strides = [1, 1]} : vector<8x384xf32> to vector<8x128xf32>
    %122 = vector.extract_strided_slice %110 {offsets = [0, 256], sizes = [8, 128], strides = [1, 1]} : vector<8x384xf32> to vector<8x128xf32>
    %123 = vector.broadcast %11 : vector<1x128xf32> to vector<8x128xf32>
    %124 = arith.addf %122, %123 : vector<8x128xf32>
    %125 = arith.mulf %119, %124 : vector<8x128xf32>
    %126 = arith.addf %121, %125 : vector<8x128xf32>
    %127 = math.tanh %126 : vector<8x128xf32>
    %cst_39 = arith.constant 1.000000e+00 : f32
    %128 = vector.broadcast %cst_39 : f32 to vector<8x128xf32>
    %129 = arith.subf %128, %120 : vector<8x128xf32>
    %130 = arith.mulf %129, %127 : vector<8x128xf32>
    %131 = arith.mulf %120, %101 : vector<8x128xf32>
    %132 = arith.addf %130, %131 : vector<8x128xf32>
    %133 = arith.index_cast %c3_i32 : i32 to index
    %c0_40 = arith.constant 0 : index
    %c0_41 = arith.constant 0 : index
    %134 = vector.load %arg6[%133, %c0_40, %c0_41] : memref<4x8x128xf32, #tpu.memory_space<vmem>>, vector<1x8x128xf32>
    %135 = vector.shape_cast %134 : vector<1x8x128xf32> to vector<8x128xf32>
    %136 = vector.shape_cast %132 : vector<8x128xf32> to vector<1x8x128xf32>
    tpu.vector_store %arg6[%133, %c0_40, %c0_41], %136 {strides = array<i32>} : memref<4x8x128xf32, #tpu.memory_space<vmem>>, vector<1x8x128xf32>,
    %c4_i32 = arith.constant 4 : i32
    %c0_42 = arith.constant 0 : index
    %c0_43 = arith.constant 0 : index
    %137 = vector.load %arg7[%c0_42, %c0_43] : memref<8x128xf32, #tpu.memory_space<vmem>>, vector<8x128xf32>
    tpu.vector_store %arg7[%c0_42, %c0_43], %132 {strides = array<i32>} : memref<8x128xf32, #tpu.memory_space<vmem>>, vector<8x128xf32>,
    return
  }
  func.func @transform_0(%arg0: i32) -> (i32, i32, i32) {
    %c0_i32 = arith.constant 0 : i32
    %c0_i32_0 = arith.constant 0 : i32
    %c0_i32_1 = arith.constant 0 : i32
    return %c0_i32, %arg0, %c0_i32_0 : i32, i32, i32
  }
  func.func @transform_1(%arg0: i32) -> (i32, i32) {
    %c0_i32 = arith.constant 0 : i32
    %c0_i32_0 = arith.constant 0 : i32
    %c0_i32_1 = arith.constant 0 : i32
    return %c0_i32, %c0_i32_0 : i32, i32
  }
  func.func @transform_2(%arg0: i32) -> (i32, i32) {
    %c0_i32 = arith.constant 0 : i32
    %c0_i32_0 = arith.constant 0 : i32
    %c0_i32_1 = arith.constant 0 : i32
    return %c0_i32, %c0_i32_0 : i32, i32
  }
  func.func @transform_3(%arg0: i32) -> (i32, i32) {
    %c0_i32 = arith.constant 0 : i32
    %c0_i32_0 = arith.constant 0 : i32
    %c0_i32_1 = arith.constant 0 : i32
    return %c0_i32, %c0_i32_0 : i32, i32
  }
  func.func @transform_4(%arg0: i32) -> (i32, i32) {
    %c0_i32 = arith.constant 0 : i32
    %c0_i32_0 = arith.constant 0 : i32
    %c0_i32_1 = arith.constant 0 : i32
    return %c0_i32, %c0_i32_0 : i32, i32
  }
  func.func @transform_5(%arg0: i32) -> (i32, i32, i32) {
    %c0_i32 = arith.constant 0 : i32
    %c0_i32_0 = arith.constant 0 : i32
    %c0_i32_1 = arith.constant 0 : i32
    return %c0_i32, %arg0, %c0_i32_0 : i32, i32, i32
  }
  func.func @transform_6(%arg0: i32) -> (i32, i32) {
    %c0_i32 = arith.constant 0 : i32
    %c0_i32_0 = arith.constant 0 : i32
    return %arg0, %c0_i32 : i32, i32
  }
}

module attributes {stable_mosaic.version = 11 : i64} {
  func.func @gru_layer_kernel(%arg0: i32, %arg1: memref<2x8x128xf32, #tpu.memory_space<vmem>>, %arg2: memref<128x384xbf16, #tpu.memory_space<vmem>>, %arg3: memref<128x384xbf16, #tpu.memory_space<vmem>>, %arg4: memref<1x384xf32, #tpu.memory_space<vmem>>, %arg5: memref<1x128xf32, #tpu.memory_space<vmem>>, %arg6: memref<2x8x128xf32, #tpu.memory_space<vmem>>, %arg7: memref<8x128xf32, #tpu.memory_space<vmem>>, %arg8: memref<2x8x384xf32, #tpu.memory_space<vmem>>) attributes {dimension_semantics = [#tpu.dimension_semantics<parallel>], iteration_bounds = array<i64: 1>, scalar_prefetch = 0 : i64, scratch_operands = 1 : i64, tpu.core_type = #tpu.core_type<tc>, window_params = [{transform_indices = @transform_0, window_bounds = array<i64: 2, 8, 128>}, {pipeline_mode = #tpu.pipeline_mode<synchronous>, transform_indices = @transform_1, window_bounds = array<i64: 128, 384>}, {pipeline_mode = #tpu.pipeline_mode<synchronous>, transform_indices = @transform_2, window_bounds = array<i64: 128, 384>}, {pipeline_mode = #tpu.pipeline_mode<synchronous>, transform_indices = @transform_3, window_bounds = array<i64: 1, 384>}, {pipeline_mode = #tpu.pipeline_mode<synchronous>, transform_indices = @transform_4, window_bounds = array<i64: 1, 128>}, {transform_indices = @transform_5, window_bounds = array<i64: 2, 8, 128>}, {transform_indices = @transform_6, window_bounds = array<i64: 8, 128>}]} {
    %c0 = arith.constant 0 : index
    %c0_0 = arith.constant 0 : index
    %c0_1 = arith.constant 0 : index
    %0 = vector.load %arg1[%c0, %c0_0, %c0_1] : memref<2x8x128xf32, #tpu.memory_space<vmem>>, vector<2x8x128xf32>
    %1 = vector.shape_cast %0 : vector<2x8x128xf32> to vector<16x128xf32>
    %2 = arith.truncf %1 : vector<16x128xf32> to vector<16x128xbf16>
    %c0_2 = arith.constant 0 : index
    %c0_3 = arith.constant 0 : index
    %3 = vector.load %arg2[%c0_2, %c0_3] : memref<128x384xbf16, #tpu.memory_space<vmem>>, vector<128x384xbf16>
    %cst = arith.constant dense<0.000000e+00> : vector<16x384xf32>
    %4 = tpu.matmul %2, %3, %cst {dimension_numbers = #tpu.dot_dimension_numbers<[1], [0], [0], [1], [0, 0, 1, 1], [], []>} : vector<16x128xbf16>, vector<128x384xbf16>, vector<16x384xf32> -> vector<16x384xf32>
    %c0_4 = arith.constant 0 : index
    %c0_5 = arith.constant 0 : index
    %5 = vector.load %arg4[%c0_4, %c0_5] : memref<1x384xf32, #tpu.memory_space<vmem>>, vector<1x384xf32>
    %6 = vector.broadcast %5 : vector<1x384xf32> to vector<16x384xf32>
    %7 = arith.addf %4, %6 : vector<16x384xf32>
    %8 = vector.shape_cast %7 : vector<16x384xf32> to vector<2x8x384xf32>
    %c0_6 = arith.constant 0 : index
    %c0_7 = arith.constant 0 : index
    %c0_8 = arith.constant 0 : index
    %9 = vector.load %arg8[%c0_6, %c0_7, %c0_8] : memref<2x8x384xf32, #tpu.memory_space<vmem>>, vector<2x8x384xf32>
    tpu.vector_store %arg8[%c0_6, %c0_7, %c0_8], %8 {strides = array<i32>} : memref<2x8x384xf32, #tpu.memory_space<vmem>>, vector<2x8x384xf32>,
    %c0_9 = arith.constant 0 : index
    %c0_10 = arith.constant 0 : index
    %10 = vector.load %arg3[%c0_9, %c0_10] : memref<128x384xbf16, #tpu.memory_space<vmem>>, vector<128x384xbf16>
    %c0_11 = arith.constant 0 : index
    %c0_12 = arith.constant 0 : index
    %11 = vector.load %arg5[%c0_11, %c0_12] : memref<1x128xf32, #tpu.memory_space<vmem>>, vector<1x128xf32>
    %cst_13 = arith.constant 0.000000e+00 : f32
    %12 = vector.broadcast %cst_13 : f32 to vector<8x128xf32>
    %c0_i32 = arith.constant 0 : i32
    %13 = arith.index_cast %c0_i32 : i32 to index
    %c0_14 = arith.constant 0 : index
    %c0_15 = arith.constant 0 : index
    %14 = vector.load %arg8[%13, %c0_14, %c0_15] : memref<2x8x384xf32, #tpu.memory_space<vmem>>, vector<1x8x384xf32>
    %15 = vector.shape_cast %14 : vector<1x8x384xf32> to vector<8x384xf32>
    %16 = arith.truncf %12 : vector<8x128xf32> to vector<8x128xbf16>
    %cst_16 = arith.constant dense<0.000000e+00> : vector<8x384xf32>
    %17 = tpu.matmul %16, %10, %cst_16 {dimension_numbers = #tpu.dot_dimension_numbers<[1], [0], [0], [1], [0, 0, 1, 1], [], []>} : vector<8x128xbf16>, vector<128x384xbf16>, vector<8x384xf32> -> vector<8x384xf32>
    %18 = vector.extract_strided_slice %15 {offsets = [0, 0], sizes = [8, 256], strides = [1, 1]} : vector<8x384xf32> to vector<8x256xf32>
    %19 = vector.extract_strided_slice %17 {offsets = [0, 0], sizes = [8, 256], strides = [1, 1]} : vector<8x384xf32> to vector<8x256xf32>
    %20 = arith.addf %18, %19 : vector<8x256xf32>
    %21 = arith.negf %20 : vector<8x256xf32>
    %22 = math.exp %21 : vector<8x256xf32>
    %cst_17 = arith.constant 1.000000e+00 : f32
    %23 = vector.broadcast %cst_17 : f32 to vector<8x256xf32>
    %24 = arith.addf %23, %22 : vector<8x256xf32>
    %25 = arith.divf %23, %24 : vector<8x256xf32>
    %26 = vector.extract_strided_slice %25 {offsets = [0, 0], sizes = [8, 128], strides = [1, 1]} : vector<8x256xf32> to vector<8x128xf32>
    %27 = vector.extract_strided_slice %25 {offsets = [0, 128], sizes = [8, 128], strides = [1, 1]} : vector<8x256xf32> to vector<8x128xf32>
    %28 = vector.extract_strided_slice %15 {offsets = [0, 256], sizes = [8, 128], strides = [1, 1]} : vector<8x384xf32> to vector<8x128xf32>
    %29 = vector.extract_strided_slice %17 {offsets = [0, 256], sizes = [8, 128], strides = [1, 1]} : vector<8x384xf32> to vector<8x128xf32>
    %30 = vector.broadcast %11 : vector<1x128xf32> to vector<8x128xf32>
    %31 = arith.addf %29, %30 : vector<8x128xf32>
    %32 = arith.mulf %26, %31 : vector<8x128xf32>
    %33 = arith.addf %28, %32 : vector<8x128xf32>
    %34 = math.tanh %33 : vector<8x128xf32>
    %cst_18 = arith.constant 1.000000e+00 : f32
    %35 = vector.broadcast %cst_18 : f32 to vector<8x128xf32>
    %36 = arith.subf %35, %27 : vector<8x128xf32>
    %37 = arith.mulf %36, %34 : vector<8x128xf32>
    %38 = arith.mulf %27, %12 : vector<8x128xf32>
    %39 = arith.addf %37, %38 : vector<8x128xf32>
    %40 = arith.index_cast %c0_i32 : i32 to index
    %c0_19 = arith.constant 0 : index
    %c0_20 = arith.constant 0 : index
    %41 = vector.load %arg6[%40, %c0_19, %c0_20] : memref<2x8x128xf32, #tpu.memory_space<vmem>>, vector<1x8x128xf32>
    %42 = vector.shape_cast %41 : vector<1x8x128xf32> to vector<8x128xf32>
    %43 = vector.shape_cast %39 : vector<8x128xf32> to vector<1x8x128xf32>
    tpu.vector_store %arg6[%40, %c0_19, %c0_20], %43 {strides = array<i32>} : memref<2x8x128xf32, #tpu.memory_space<vmem>>, vector<1x8x128xf32>,
    %c1_i32 = arith.constant 1 : i32
    %44 = arith.index_cast %c1_i32 : i32 to index
    %c0_21 = arith.constant 0 : index
    %c0_22 = arith.constant 0 : index
    %45 = vector.load %arg8[%44, %c0_21, %c0_22] : memref<2x8x384xf32, #tpu.memory_space<vmem>>, vector<1x8x384xf32>
    %46 = vector.shape_cast %45 : vector<1x8x384xf32> to vector<8x384xf32>
    %47 = arith.truncf %39 : vector<8x128xf32> to vector<8x128xbf16>
    %cst_23 = arith.constant dense<0.000000e+00> : vector<8x384xf32>
    %48 = tpu.matmul %47, %10, %cst_23 {dimension_numbers = #tpu.dot_dimension_numbers<[1], [0], [0], [1], [0, 0, 1, 1], [], []>} : vector<8x128xbf16>, vector<128x384xbf16>, vector<8x384xf32> -> vector<8x384xf32>
    %49 = vector.extract_strided_slice %46 {offsets = [0, 0], sizes = [8, 256], strides = [1, 1]} : vector<8x384xf32> to vector<8x256xf32>
    %50 = vector.extract_strided_slice %48 {offsets = [0, 0], sizes = [8, 256], strides = [1, 1]} : vector<8x384xf32> to vector<8x256xf32>
    %51 = arith.addf %49, %50 : vector<8x256xf32>
    %52 = arith.negf %51 : vector<8x256xf32>
    %53 = math.exp %52 : vector<8x256xf32>
    %cst_24 = arith.constant 1.000000e+00 : f32
    %54 = vector.broadcast %cst_24 : f32 to vector<8x256xf32>
    %55 = arith.addf %54, %53 : vector<8x256xf32>
    %56 = arith.divf %54, %55 : vector<8x256xf32>
    %57 = vector.extract_strided_slice %56 {offsets = [0, 0], sizes = [8, 128], strides = [1, 1]} : vector<8x256xf32> to vector<8x128xf32>
    %58 = vector.extract_strided_slice %56 {offsets = [0, 128], sizes = [8, 128], strides = [1, 1]} : vector<8x256xf32> to vector<8x128xf32>
    %59 = vector.extract_strided_slice %46 {offsets = [0, 256], sizes = [8, 128], strides = [1, 1]} : vector<8x384xf32> to vector<8x128xf32>
    %60 = vector.extract_strided_slice %48 {offsets = [0, 256], sizes = [8, 128], strides = [1, 1]} : vector<8x384xf32> to vector<8x128xf32>
    %61 = vector.broadcast %11 : vector<1x128xf32> to vector<8x128xf32>
    %62 = arith.addf %60, %61 : vector<8x128xf32>
    %63 = arith.mulf %57, %62 : vector<8x128xf32>
    %64 = arith.addf %59, %63 : vector<8x128xf32>
    %65 = math.tanh %64 : vector<8x128xf32>
    %cst_25 = arith.constant 1.000000e+00 : f32
    %66 = vector.broadcast %cst_25 : f32 to vector<8x128xf32>
    %67 = arith.subf %66, %58 : vector<8x128xf32>
    %68 = arith.mulf %67, %65 : vector<8x128xf32>
    %69 = arith.mulf %58, %39 : vector<8x128xf32>
    %70 = arith.addf %68, %69 : vector<8x128xf32>
    %71 = arith.index_cast %c1_i32 : i32 to index
    %c0_26 = arith.constant 0 : index
    %c0_27 = arith.constant 0 : index
    %72 = vector.load %arg6[%71, %c0_26, %c0_27] : memref<2x8x128xf32, #tpu.memory_space<vmem>>, vector<1x8x128xf32>
    %73 = vector.shape_cast %72 : vector<1x8x128xf32> to vector<8x128xf32>
    %74 = vector.shape_cast %70 : vector<8x128xf32> to vector<1x8x128xf32>
    tpu.vector_store %arg6[%71, %c0_26, %c0_27], %74 {strides = array<i32>} : memref<2x8x128xf32, #tpu.memory_space<vmem>>, vector<1x8x128xf32>,
    %c2_i32 = arith.constant 2 : i32
    %c0_28 = arith.constant 0 : index
    %c0_29 = arith.constant 0 : index
    %75 = vector.load %arg7[%c0_28, %c0_29] : memref<8x128xf32, #tpu.memory_space<vmem>>, vector<8x128xf32>
    tpu.vector_store %arg7[%c0_28, %c0_29], %70 {strides = array<i32>} : memref<8x128xf32, #tpu.memory_space<vmem>>, vector<8x128xf32>,
    return
  }
  func.func @transform_0(%arg0: i32) -> (i32, i32, i32) {
    %c0_i32 = arith.constant 0 : i32
    %c0_i32_0 = arith.constant 0 : i32
    %c0_i32_1 = arith.constant 0 : i32
    return %c0_i32, %arg0, %c0_i32_0 : i32, i32, i32
  }
  func.func @transform_1(%arg0: i32) -> (i32, i32) {
    %c0_i32 = arith.constant 0 : i32
    %c0_i32_0 = arith.constant 0 : i32
    %c0_i32_1 = arith.constant 0 : i32
    return %c0_i32, %c0_i32_0 : i32, i32
  }
  func.func @transform_2(%arg0: i32) -> (i32, i32) {
    %c0_i32 = arith.constant 0 : i32
    %c0_i32_0 = arith.constant 0 : i32
    %c0_i32_1 = arith.constant 0 : i32
    return %c0_i32, %c0_i32_0 : i32, i32
  }
  func.func @transform_3(%arg0: i32) -> (i32, i32) {
    %c0_i32 = arith.constant 0 : i32
    %c0_i32_0 = arith.constant 0 : i32
    %c0_i32_1 = arith.constant 0 : i32
    return %c0_i32, %c0_i32_0 : i32, i32
  }
  func.func @transform_4(%arg0: i32) -> (i32, i32) {
    %c0_i32 = arith.constant 0 : i32
    %c0_i32_0 = arith.constant 0 : i32
    %c0_i32_1 = arith.constant 0 : i32
    return %c0_i32, %c0_i32_0 : i32, i32
  }
  func.func @transform_5(%arg0: i32) -> (i32, i32, i32) {
    %c0_i32 = arith.constant 0 : i32
    %c0_i32_0 = arith.constant 0 : i32
    %c0_i32_1 = arith.constant 0 : i32
    return %c0_i32, %arg0, %c0_i32_0 : i32, i32, i32
  }
  func.func @transform_6(%arg0: i32) -> (i32, i32) {
    %c0_i32 = arith.constant 0 : i32
    %c0_i32_0 = arith.constant 0 : i32
    return %arg0, %c0_i32 : i32, i32
  }
}

</mosaic_0001>

<llo_original>
// kernel: drnn_forward.5
$region0: #{drnn_forward.5}
  #allocation0 [shape = 'u32[]', space=smem, size = 0x4, offset = 0x4, fixed_abs, tag = 'smem constant byte address 0x4 - core index']
  #allocation1 [shape = 'u32[144,128]{1,0:T(1,128)}', space=vmem, size = 0x12000, scoped, tag = 'internal scratch']
  #allocation2 [shape = 'f32[2,8,384]{2,1,0:T(8,128)}', space=vmem, size = 0x6000, scoped, tag = 'scratch operand']
  %s0 = inlined_call_operand.vmem [shape: f32[2,8,128], index: 0, kind: input, shape index: {}]
  %s1 = inlined_call_operand.vmem [shape: bf16[128,384], index: 1, kind: input, shape index: {}]
  %s2 = inlined_call_operand.vmem [shape: bf16[128,384], index: 2, kind: input, shape index: {}]
  %s3 = inlined_call_operand.vmem [shape: f32[1,384], index: 3, kind: input, shape index: {}]
  %s4 = inlined_call_operand.vmem [shape: f32[1,128], index: 4, kind: input, shape index: {}]
  %s5 = inlined_call_operand.vmem [shape: f32[2,8,128], index: 5, kind: output, shape index: {0}]
  %s6 = inlined_call_operand.vmem [shape: f32[8,128], index: 6, kind: output, shape index: {1}]
  %7 = xla_tuple %s5, %s6
  %s8 = sld [smem:[#allocation0]]
  $region38: #{drnn_forward.5} parent=0
    _
  %s10 = ssub.s32 1, %s8
  %s11 = scalar_select 0, %s10, %s8
  // Predicated region
  $region2: #{drnn_forward.5} parent=0 // pred_check
    _
  $region3: #{drnn_forward.5} parent=0 // pred_check_branch
    %13 = sbr.rel (0) target = $region5
  $region4: #{drnn_forward.5} parent=0 // pred_region
    _
  $region5: #{drnn_forward.5} parent=0 // pred_fallthru
    _
  // Predicated region
  $region6: #{drnn_forward.5} parent=0 // pred_check
    _
  $region7: #{drnn_forward.5} parent=0 // pred_check_branch
    %15 = sbr.rel (0) target = $region9
  $region8: #{drnn_forward.5} parent=0 // pred_region
    _
  $region9: #{drnn_forward.5} parent=0 // pred_fallthru
    _
  // Predicated region
  $region10: #{drnn_forward.5} parent=0 // pred_check
    _
  $region11: #{drnn_forward.5} parent=0 // pred_check_branch
    %17 = sbr.rel (0) target = $region13
  $region12: #{drnn_forward.5} parent=0 // pred_region
    _
  $region13: #{drnn_forward.5} parent=0 // pred_fallthru
    _
  // Predicated region
  $region14: #{drnn_forward.5} parent=0 // pred_check
    _
  $region15: #{drnn_forward.5} parent=0 // pred_check_branch
    %19 = sbr.rel (0) target = $region17
  $region16: #{drnn_forward.5} parent=0 // pred_region
    _
  $region17: #{drnn_forward.5} parent=0 // pred_fallthru
    _
  // Predicated region
  $region18: #{drnn_forward.5} parent=0 // pred_check
    _
  $region19: #{drnn_forward.5} parent=0 // pred_check_branch
    %21 = sbr.rel (0) target = $region21
  $region20: #{drnn_forward.5} parent=0 // pred_region
    _
  $region21: #{drnn_forward.5} parent=0 // pred_fallthru
    _
  %v23 = vld [vmem:[%s0] sm:$0xff]
  %v24 = vld [vmem:[%s0 + $0x8] sm:$0xff]
  %v25 = vpack.c.bf16 %v24, %v23
  %v26 = vld [vmem:[%s1] sm:$0xff]
  %v27 = vld [vmem:[%s1 + $0x8] sm:$0xf]
  %v28 = vld [vmem:[%s1 + $0xc] sm:$0xff]
  %v29 = vld [vmem:[%s1 + $0x14] sm:$0xf]
  %v30 = vld [vmem:[%s1 + $0x18] sm:$0xff]
  %v31 = vld [vmem:[%s1 + $0x20] sm:$0xf]
  %v32 = vld [vmem:[%s1 + $0x24] sm:$0xff]
  %v33 = vld [vmem:[%s1 + $0x2c] sm:$0xf]
  %v34 = vld [vmem:[%s1 + $0x30] sm:$0xff]
  %v35 = vld [vmem:[%s1 + $0x38] sm:$0xf]
  %v36 = vld [vmem:[%s1 + $0x3c] sm:$0xff]
  %v37 = vld [vmem:[%s1 + $0x44] sm:$0xf]
  %v38 = vld [vmem:[%s1 + $0x48] sm:$0xff]
  %v39 = vld [vmem:[%s1 + $0x50] sm:$0xf]
  %v40 = vld [vmem:[%s1 + $0x54] sm:$0xff]
  %v41 = vld [vmem:[%s1 + $0x5c] sm:$0xf]
  %v42 = vld [vmem:[%s1 + $0x60] sm:$0xff]
  %v43 = vld [vmem:[%s1 + $0x68] sm:$0xf]
  %v44 = vld [vmem:[%s1 + $0x6c] sm:$0xff]
  %v45 = vld [vmem:[%s1 + $0x74] sm:$0xf]
  %v46 = vld [vmem:[%s1 + $0x78] sm:$0xff]
  %v47 = vld [vmem:[%s1 + $0x80] sm:$0xf]
  %v48 = vld [vmem:[%s1 + $0x84] sm:$0xff]
  %v49 = vld [vmem:[%s1 + $0x8c] sm:$0xf]
  %v50 = vld [vmem:[%s1 + $0x90] sm:$0xff]
  %v51 = vld [vmem:[%s1 + $0x98] sm:$0xf]
  %v52 = vld [vmem:[%s1 + $0x9c] sm:$0xff]
  %v53 = vld [vmem:[%s1 + $0xa4] sm:$0xf]
  %v54 = vld [vmem:[%s1 + $0xa8] sm:$0xff]
  %v55 = vld [vmem:[%s1 + $0xb0] sm:$0xf]
  %v56 = vld [vmem:[%s1 + $0xb4] sm:$0xff]
  %v57 = vld [vmem:[%s1 + $0xbc] sm:$0xf]
  %v58 = vld [vmem:[%s3] sm:$0x7]
  %v60 = vlaneseq
  %v61 = vshrl.u32 %v60, 7
  %v62 = vsub.s32 0, %v61
  %v63 = vrot.slane %v58, %v62
  %v64 = vlaneseq
  %v65 = vshrl.u32 %v64, 7
  %v66 = vsub.s32 1, %v65
  %v67 = vrot.slane %v58, %v66
  %v68 = vlaneseq
  %v69 = vshrl.u32 %v68, 7
  %v70 = vsub.s32 2, %v69
  %v71 = vrot.slane %v58, %v70
  %v107 = vunpack.c.l.b16 %v26
  %v108 = vunpack.c.h.b16 %v26
  %v109 = vunpack.c.l.b16 %v27
  %v110 = vunpack.c.l.b16 %v28
  %v111 = vunpack.c.h.b16 %v28
  %v112 = vunpack.c.l.b16 %v29
  %v113 = vunpack.c.l.b16 %v30
  %v114 = vunpack.c.h.b16 %v30
  %v115 = vunpack.c.l.b16 %v31
  %v116 = vunpack.c.l.b16 %v32
  %v117 = vunpack.c.h.b16 %v32
  %v118 = vunpack.c.l.b16 %v33
  %v119 = vunpack.c.l.b16 %v34
  %v120 = vunpack.c.h.b16 %v34
  %v121 = vunpack.c.l.b16 %v35
  %v122 = vunpack.c.l.b16 %v36
  %v123 = vunpack.c.h.b16 %v36
  %v124 = vunpack.c.l.b16 %v37
  %v125 = vunpack.c.l.b16 %v38
  %v126 = vunpack.c.h.b16 %v38
  %v127 = vunpack.c.l.b16 %v39
  %v128 = vunpack.c.l.b16 %v40
  %v129 = vunpack.c.h.b16 %v40
  %v130 = vunpack.c.l.b16 %v41
  %v131 = vunpack.c.l.b16 %v42
  %v132 = vunpack.c.h.b16 %v42
  %v133 = vunpack.c.l.b16 %v43
  %v134 = vunpack.c.l.b16 %v44
  %v135 = vunpack.c.h.b16 %v44
  %v136 = vunpack.c.l.b16 %v45
  %v137 = vunpack.c.l.b16 %v46
  %v138 = vunpack.c.h.b16 %v46
  %v139 = vunpack.c.l.b16 %v47
  %v140 = vunpack.c.l.b16 %v48
  %v141 = vunpack.c.h.b16 %v48
  %v142 = vunpack.c.l.b16 %v49
  %v143 = vunpack.c.l.b16 %v50
  %v144 = vunpack.c.h.b16 %v50
  %v145 = vunpack.c.l.b16 %v51
  %v146 = vunpack.c.l.b16 %v52
  %v147 = vunpack.c.h.b16 %v52
  %v148 = vunpack.c.l.b16 %v53
  %v149 = vunpack.c.l.b16 %v54
  %v150 = vunpack.c.h.b16 %v54
  %v151 = vunpack.c.l.b16 %v55
  %v152 = vunpack.c.l.b16 %v56
  %v153 = vunpack.c.h.b16 %v56
  %v154 = vunpack.c.l.b16 %v57
  %v155 = vpack.c.b16 %v110, %v107
  %v156 = vpack.c.b16 %v111, %v108
  %v157 = vpack.c.b16 %v112, %v109
  %v158 = vpack.c.b16 %v116, %v113
  %v159 = vpack.c.b16 %v117, %v114
  %v160 = vpack.c.b16 %v118, %v115
  %v161 = vpack.c.b16 %v122, %v119
  %v162 = vpack.c.b16 %v123, %v120
  %v163 = vpack.c.b16 %v124, %v121
  %v164 = vpack.c.b16 %v128, %v125
  %v165 = vpack.c.b16 %v129, %v126
  %v166 = vpack.c.b16 %v130, %v127
  %v167 = vpack.c.b16 %v134, %v131
  %v168 = vpack.c.b16 %v135, %v132
  %v169 = vpack.c.b16 %v136, %v133
  %v170 = vpack.c.b16 %v140, %v137
  %v171 = vpack.c.b16 %v141, %v138
  %v172 = vpack.c.b16 %v142, %v139
  %v173 = vpack.c.b16 %v146, %v143
  %v174 = vpack.c.b16 %v147, %v144
  %v175 = vpack.c.b16 %v148, %v145
  %v176 = vpack.c.b16 %v152, %v149
  %v177 = vpack.c.b16 %v153, %v150
  %v178 = vpack.c.b16 %v154, %v151
  %203 = vmatprep.subr.bf16.mxu0 %v156
  %204 = vmatpush1.bf16.msra.mxu0 %v155
  %205 = vmatprep.subr.bf16.mxu0 %v159
  %206 = vmatpush1.bf16.msra.mxu0 %v158
  %207 = vmatprep.subr.bf16.mxu0 %v162
  %208 = vmatpush1.bf16.msra.mxu0 %v161
  %209 = vmatprep.subr.bf16.mxu0 %v165
  %210 = vmatpush1.bf16.msra.mxu0 %v164
  %211 = vmatprep.subr.bf16.mxu0 %v168
  %212 = vmatpush1.bf16.msra.mxu0 %v167
  %213 = vmatprep.subr.bf16.mxu0 %v171
  %214 = vmatpush1.bf16.msra.mxu0 %v170
  %215 = vmatprep.subr.bf16.mxu0 %v174
  %216 = vmatpush1.bf16.msra.mxu0 %v173
  %217 = vmatprep.subr.bf16.mxu0 %v177
  %218 = vmatpush1.bf16.msra.mxu0 %v176
  %219 = vmatprep.subr.bf16.mxu0 0
  %220 = vmatpush1.bf16.msra.mxu0 0
  %221 = vmatprep.subr.bf16.mxu0 0
  %222 = vmatpush1.bf16.msra.mxu0 0
  %223 = vmatprep.subr.bf16.mxu0 0
  %224 = vmatpush1.bf16.msra.mxu0 0
  %225 = vmatprep.subr.bf16.mxu0 0
  %226 = vmatpush1.bf16.msra.mxu0 0
  %227 = vmatprep.subr.bf16.mxu0 0
  %228 = vmatpush1.bf16.msra.mxu0 0
  %229 = vmatprep.subr.bf16.mxu0 0
  %230 = vmatpush1.bf16.msra.mxu0 0
  %231 = vmatprep.subr.bf16.mxu0 0
  %232 = vmatpush1.bf16.msra.mxu0 0
  %233 = vmatprep.subr.bf16.mxu0 0
  %234 = vmatpush1.bf16.msra.mxu0 0
  %235 = vmatprep.mubr.bf16.mxu0 0
  %236 = vmatmul.mubr.bf16.gmra.mrb[0].mxu0 %v25
  %v237 = vpop.f32.mrb[0].mxu0
  %v238 = vadd.f32 %v63, %v237
  %v239 = vpop.f32.mrb[0].mxu0
  %v240 = vadd.f32 %v67, %v239
  %v241 = vpop.f32.mrb[0].mxu0
  %v242 = vadd.f32 %v63, %v241
  %v243 = vpop.f32.mrb[0].mxu0
  %v244 = vadd.f32 %v67, %v243
  %245 = vdwg.mxu0
  %246 = vmatprep.subr.bf16.mxu0 0
  %247 = vmatpush1.bf16.msra.mxu0 %v157
  %248 = vmatprep.subr.bf16.mxu0 0
  %249 = vmatpush1.bf16.msra.mxu0 %v160
  %250 = vmatprep.subr.bf16.mxu0 0
  %251 = vmatpush1.bf16.msra.mxu0 %v163
  %252 = vmatprep.subr.bf16.mxu0 0
  %253 = vmatpush1.bf16.msra.mxu0 %v166
  %254 = vmatprep.subr.bf16.mxu0 0
  %255 = vmatpush1.bf16.msra.mxu0 %v169
  %256 = vmatprep.subr.bf16.mxu0 0
  %257 = vmatpush1.bf16.msra.mxu0 %v172
  %258 = vmatprep.subr.bf16.mxu0 0
  %259 = vmatpush1.bf16.msra.mxu0 %v175
  %260 = vmatprep.subr.bf16.mxu0 0
  %261 = vmatpush1.bf16.msra.mxu0 %v178
  %262 = vmatprep.subr.bf16.mxu0 0
  %263 = vmatpush1.bf16.msra.mxu0 0
  %264 = vmatprep.subr.bf16.mxu0 0
  %265 = vmatpush1.bf16.msra.mxu0 0
  %266 = vmatprep.subr.bf16.mxu0 0
  %267 = vmatpush1.bf16.msra.mxu0 0
  %268 = vmatprep.subr.bf16.mxu0 0
  %269 = vmatpush1.bf16.msra.mxu0 0
  %270 = vmatprep.subr.bf16.mxu0 0
  %271 = vmatpush1.bf16.msra.mxu0 0
  %272 = vmatprep.subr.bf16.mxu0 0
  %273 = vmatpush1.bf16.msra.mxu0 0
  %274 = vmatprep.subr.bf16.mxu0 0
  %275 = vmatpush1.bf16.msra.mxu0 0
  %276 = vmatprep.subr.bf16.mxu0 0
  %277 = vmatpush1.bf16.msra.mxu0 0
  %278 = vmatprep.mubr.bf16.mxu0 0
  %279 = vmatmul.mubr.bf16.gmra.mrb[0].mxu0 %v25
  %v280 = vpop.f32.mrb[0].mxu0
  %v281 = vadd.f32 %v71, %v280
  %v282 = vpop.f32.mrb[0].mxu0
  %v283 = vpop.f32.mrb[0].mxu0
  %v284 = vadd.f32 %v71, %v283
  %v285 = vpop.f32.mrb[0].mxu0
  %286 = vdwg.mxu0
  %287 = vst [vmem:[#allocation2] sm:$0xff] %v238
  %288 = vst [vmem:[#allocation2 + $0x8] sm:$0xff] %v240
  %289 = vst [vmem:[#allocation2 + $0x10] sm:$0xff] %v281
  %290 = vst [vmem:[#allocation2 + $0x18] sm:$0xff] %v242
  %291 = vst [vmem:[#allocation2 + $0x20] sm:$0xff] %v244
  %292 = vst [vmem:[#allocation2 + $0x28] sm:$0xff] %v284
  %v293 = vld [vmem:[%s2] sm:$0xff]
  %v294 = vld [vmem:[%s2 + $0x8] sm:$0xf]
  %v295 = vld [vmem:[%s2 + $0xc] sm:$0xff]
  %v296 = vld [vmem:[%s2 + $0x14] sm:$0xf]
  %v297 = vld [vmem:[%s2 + $0x18] sm:$0xff]
  %v298 = vld [vmem:[%s2 + $0x20] sm:$0xf]
  %v299 = vld [vmem:[%s2 + $0x24] sm:$0xff]
  %v300 = vld [vmem:[%s2 + $0x2c] sm:$0xf]
  %v301 = vld [vmem:[%s2 + $0x30] sm:$0xff]
  %v302 = vld [vmem:[%s2 + $0x38] sm:$0xf]
  %v303 = vld [vmem:[%s2 + $0x3c] sm:$0xff]
  %v304 = vld [vmem:[%s2 + $0x44] sm:$0xf]
  %v305 = vld [vmem:[%s2 + $0x48] sm:$0xff]
  %v306 = vld [vmem:[%s2 + $0x50] sm:$0xf]
  %v307 = vld [vmem:[%s2 + $0x54] sm:$0xff]
  %v308 = vld [vmem:[%s2 + $0x5c] sm:$0xf]
  %v309 = vld [vmem:[%s2 + $0x60] sm:$0xff]
  %v310 = vld [vmem:[%s2 + $0x68] sm:$0xf]
  %v311 = vld [vmem:[%s2 + $0x6c] sm:$0xff]
  %v312 = vld [vmem:[%s2 + $0x74] sm:$0xf]
  %v313 = vld [vmem:[%s2 + $0x78] sm:$0xff]
  %v314 = vld [vmem:[%s2 + $0x80] sm:$0xf]
  %v315 = vld [vmem:[%s2 + $0x84] sm:$0xff]
  %v316 = vld [vmem:[%s2 + $0x8c] sm:$0xf]
  %v317 = vld [vmem:[%s2 + $0x90] sm:$0xff]
  %v318 = vld [vmem:[%s2 + $0x98] sm:$0xf]
  %v319 = vld [vmem:[%s2 + $0x9c] sm:$0xff]
  %v320 = vld [vmem:[%s2 + $0xa4] sm:$0xf]
  %v321 = vld [vmem:[%s2 + $0xa8] sm:$0xff]
  %v322 = vld [vmem:[%s2 + $0xb0] sm:$0xf]
  %v323 = vld [vmem:[%s2 + $0xb4] sm:$0xff]
  %v324 = vld [vmem:[%s2 + $0xbc] sm:$0xf]
  %v325 = vld [vmem:[%s4] sm:$0x1]
  %v326 = vld [vmem:[#allocation2] sm:$0xff]
  %v327 = vld [vmem:[#allocation2 + $0x8] sm:$0xff]
  %v328 = vld [vmem:[#allocation2 + $0x10] sm:$0xff]
  %v361 = vunpack.c.l.b16 %v293
  %v362 = vunpack.c.h.b16 %v293
  %v363 = vunpack.c.l.b16 %v294
  %v364 = vunpack.c.l.b16 %v295
  %v365 = vunpack.c.h.b16 %v295
  %v366 = vunpack.c.l.b16 %v296
  %v367 = vunpack.c.l.b16 %v297
  %v368 = vunpack.c.h.b16 %v297
  %v369 = vunpack.c.l.b16 %v298
  %v370 = vunpack.c.l.b16 %v299
  %v371 = vunpack.c.h.b16 %v299
  %v372 = vunpack.c.l.b16 %v300
  %v373 = vunpack.c.l.b16 %v301
  %v374 = vunpack.c.h.b16 %v301
  %v375 = vunpack.c.l.b16 %v302
  %v376 = vunpack.c.l.b16 %v303
  %v377 = vunpack.c.h.b16 %v303
  %v378 = vunpack.c.l.b16 %v304
  %v379 = vunpack.c.l.b16 %v305
  %v380 = vunpack.c.h.b16 %v305
  %v381 = vunpack.c.l.b16 %v306
  %v382 = vunpack.c.l.b16 %v307
  %v383 = vunpack.c.h.b16 %v307
  %v384 = vunpack.c.l.b16 %v308
  %v385 = vunpack.c.l.b16 %v309
  %v386 = vunpack.c.h.b16 %v309
  %v387 = vunpack.c.l.b16 %v310
  %v388 = vunpack.c.l.b16 %v311
  %v389 = vunpack.c.h.b16 %v311
  %v390 = vunpack.c.l.b16 %v312
  %v391 = vunpack.c.l.b16 %v313
  %v392 = vunpack.c.h.b16 %v313
  %v393 = vunpack.c.l.b16 %v314
  %v394 = vunpack.c.l.b16 %v315
  %v395 = vunpack.c.h.b16 %v315
  %v396 = vunpack.c.l.b16 %v316
  %v397 = vunpack.c.l.b16 %v317
  %v398 = vunpack.c.h.b16 %v317
  %v399 = vunpack.c.l.b16 %v318
  %v400 = vunpack.c.l.b16 %v319
  %v401 = vunpack.c.h.b16 %v319
  %v402 = vunpack.c.l.b16 %v320
  %v403 = vunpack.c.l.b16 %v321
  %v404 = vunpack.c.h.b16 %v321
  %v405 = vunpack.c.l.b16 %v322
  %v406 = vunpack.c.l.b16 %v323
  %v407 = vunpack.c.h.b16 %v323
  %v408 = vunpack.c.l.b16 %v324
  %v409 = vpack.c.b16 %v364, %v361
  %v410 = vpack.c.b16 %v365, %v362
  %v411 = vpack.c.b16 %v366, %v363
  %v412 = vpack.c.b16 %v370, %v367
  %v413 = vpack.c.b16 %v371, %v368
  %v414 = vpack.c.b16 %v372, %v369
  %v415 = vpack.c.b16 %v376, %v373
  %v416 = vpack.c.b16 %v377, %v374
  %v417 = vpack.c.b16 %v378, %v375
  %v418 = vpack.c.b16 %v382, %v379
  %v419 = vpack.c.b16 %v383, %v380
  %v420 = vpack.c.b16 %v384, %v381
  %v421 = vpack.c.b16 %v388, %v385
  %v422 = vpack.c.b16 %v389, %v386
  %v423 = vpack.c.b16 %v390, %v387
  %v424 = vpack.c.b16 %v394, %v391
  %v425 = vpack.c.b16 %v395, %v392
  %v426 = vpack.c.b16 %v396, %v393
  %v427 = vpack.c.b16 %v400, %v397
  %v428 = vpack.c.b16 %v401, %v398
  %v429 = vpack.c.b16 %v402, %v399
  %v430 = vpack.c.b16 %v406, %v403
  %v431 = vpack.c.b16 %v407, %v404
  %v432 = vpack.c.b16 %v408, %v405
  %457 = vmatprep.subr.bf16.mxu0 %v410
  %458 = vmatpush1.bf16.msra.mxu0 %v409
  %459 = vmatprep.subr.bf16.mxu0 %v413
  %460 = vmatpush1.bf16.msra.mxu0 %v412
  %461 = vmatprep.subr.bf16.mxu0 %v416
  %462 = vmatpush1.bf16.msra.mxu0 %v415
  %463 = vmatprep.subr.bf16.mxu0 %v419
  %464 = vmatpush1.bf16.msra.mxu0 %v418
  %465 = vmatprep.subr.bf16.mxu0 %v422
  %466 = vmatpush1.bf16.msra.mxu0 %v421
  %467 = vmatprep.subr.bf16.mxu0 %v425
  %468 = vmatpush1.bf16.msra.mxu0 %v424
  %469 = vmatprep.subr.bf16.mxu0 %v428
  %470 = vmatpush1.bf16.msra.mxu0 %v427
  %471 = vmatprep.subr.bf16.mxu0 %v431
  %472 = vmatpush1.bf16.msra.mxu0 %v430
  %473 = vmatprep.subr.bf16.mxu0 0
  %474 = vmatpush1.bf16.msra.mxu0 0
  %475 = vmatprep.subr.bf16.mxu0 0
  %476 = vmatpush1.bf16.msra.mxu0 0
  %477 = vmatprep.subr.bf16.mxu0 0
  %478 = vmatpush1.bf16.msra.mxu0 0
  %479 = vmatprep.subr.bf16.mxu0 0
  %480 = vmatpush1.bf16.msra.mxu0 0
  %481 = vmatprep.subr.bf16.mxu0 0
  %482 = vmatpush1.bf16.msra.mxu0 0
  %483 = vmatprep.subr.bf16.mxu0 0
  %484 = vmatpush1.bf16.msra.mxu0 0
  %485 = vmatprep.subr.bf16.mxu0 0
  %486 = vmatpush1.bf16.msra.mxu0 0
  %487 = vmatprep.subr.bf16.mxu0 0
  %488 = vmatpush1.bf16.msra.mxu0 0
  %489 = vmatprep.mubr.bf16.mxu0 0
  %490 = vmatmul.mubr.bf16.gmra.mrb[0].mxu0 0
  %v491 = vpop.f32.mrb[0].mxu0
  %v492 = vadd.f32 0.0, %v491
  %v493 = vpop.f32.mrb[0].mxu0
  %v494 = vadd.f32 0.0, %v493
  %v495 = vpop.f32.mrb[0].mxu0
  %v496 = vpop.f32.mrb[0].mxu0
  %497 = vdwg.mxu0
  %498 = vmatprep.subr.bf16.mxu0 0
  %499 = vmatpush1.bf16.msra.mxu0 %v411
  %500 = vmatprep.subr.bf16.mxu0 0
  %501 = vmatpush1.bf16.msra.mxu0 %v414
  %502 = vmatprep.subr.bf16.mxu0 0
  %503 = vmatpush1.bf16.msra.mxu0 %v417
  %504 = vmatprep.subr.bf16.mxu0 0
  %505 = vmatpush1.bf16.msra.mxu0 %v420
  %506 = vmatprep.subr.bf16.mxu0 0
  %507 = vmatpush1.bf16.msra.mxu0 %v423
  %508 = vmatprep.subr.bf16.mxu0 0
  %509 = vmatpush1.bf16.msra.mxu0 %v426
  %510 = vmatprep.subr.bf16.mxu0 0
  %511 = vmatpush1.bf16.msra.mxu0 %v429
  %512 = vmatprep.subr.bf16.mxu0 0
  %513 = vmatpush1.bf16.msra.mxu0 %v432
  %514 = vmatprep.subr.bf16.mxu0 0
  %515 = vmatpush1.bf16.msra.mxu0 0
  %516 = vmatprep.subr.bf16.mxu0 0
  %517 = vmatpush1.bf16.msra.mxu0 0
  %518 = vmatprep.subr.bf16.mxu0 0
  %519 = vmatpush1.bf16.msra.mxu0 0
  %520 = vmatprep.subr.bf16.mxu0 0
  %521 = vmatpush1.bf16.msra.mxu0 0
  %522 = vmatprep.subr.bf16.mxu0 0
  %523 = vmatpush1.bf16.msra.mxu0 0
  %524 = vmatprep.subr.bf16.mxu0 0
  %525 = vmatpush1.bf16.msra.mxu0 0
  %526 = vmatprep.subr.bf16.mxu0 0
  %527 = vmatpush1.bf16.msra.mxu0 0
  %528 = vmatprep.subr.bf16.mxu0 0
  %529 = vmatpush1.bf16.msra.mxu0 0
  %530 = vmatprep.mubr.bf16.mxu0 0
  %531 = vmatmul.mubr.bf16.gmra.mrb[0].mxu0 0
  %v532 = vpop.f32.mrb[0].mxu0
  %v533 = vadd.f32 0.0, %v532
  %v534 = vpop.f32.mrb[0].mxu0
  %v535 = vpop.f32.mrb[0].mxu0
  %v536 = vpop.f32.mrb[0].mxu0
  %537 = vdwg.mxu0
  %v538 = vadd.f32 %v326, %v492
  %v539 = vadd.f32 %v327, %v494
  %v540 = vxor.u32 %v538, 2147483648
  %v541 = vxor.u32 %v539, 2147483648
  %v542 = vmul.f32 %v540, 1.442695
  %v543 = vpow.pop %v542
  %v544 = vmul.f32 %v541, 1.442695
  %v545 = vpow.pop %v544
  %v546 = vadd.f32 %v543, 1.0
  %v547 = vadd.f32 %v545, 1.0
  %v548 = vrcp.pop %v546
  %v549 = vmul.f32 1.0, %v548
  %v550 = vrcp.pop %v547
  %v551 = vmul.f32 1.0, %v550
  %v553 = vlaneseq
  %v554 = vshrl.u32 %v553, 7
  %v555 = vsub.s32 0, %v554
  %v556 = vrot.slane %v325, %v555
  %v558 = vadd.f32 %v533, %v556
  %v559 = vmul.f32 %v549, %v558
  %v560 = vadd.f32 %v328, %v559
  %v561 = vtanh.pop %v560
  %v562 = vsub.f32 1.0, %v551
  %v563 = vmul.f32 %v562, %v561
  %v564 = vmul.f32 %v551, 0.0
  %v565 = vadd.f32 %v563, %v564
  %566 = vst [vmem:[%s5] sm:$0xff] %v565
  %s567 = scalar_lea.vmem [#allocation2], 24
  %v568 = vld [vmem:[%s567] sm:$0xff]
  %v569 = vld [vmem:[%s567 + $0x8] sm:$0xff]
  %v570 = vld [vmem:[%s567 + $0x10] sm:$0xff]
  %v571 = vpack.c.bf16 %v565, %v565
  %572 = vmatprep.subr.bf16.mxu0 %v410
  %573 = vmatpush1.bf16.msra.mxu0 %v409
  %574 = vmatprep.subr.bf16.mxu0 %v413
  %575 = vmatpush1.bf16.msra.mxu0 %v412
  %576 = vmatprep.subr.bf16.mxu0 %v416
  %577 = vmatpush1.bf16.msra.mxu0 %v415
  %578 = vmatprep.subr.bf16.mxu0 %v419
  %579 = vmatpush1.bf16.msra.mxu0 %v418
  %580 = vmatprep.subr.bf16.mxu0 %v422
  %581 = vmatpush1.bf16.msra.mxu0 %v421
  %582 = vmatprep.subr.bf16.mxu0 %v425
  %583 = vmatpush1.bf16.msra.mxu0 %v424
  %584 = vmatprep.subr.bf16.mxu0 %v428
  %585 = vmatpush1.bf16.msra.mxu0 %v427
  %586 = vmatprep.subr.bf16.mxu0 %v431
  %587 = vmatpush1.bf16.msra.mxu0 %v430
  %588 = vmatprep.subr.bf16.mxu0 0
  %589 = vmatpush1.bf16.msra.mxu0 0
  %590 = vmatprep.subr.bf16.mxu0 0
  %591 = vmatpush1.bf16.msra.mxu0 0
  %592 = vmatprep.subr.bf16.mxu0 0
  %593 = vmatpush1.bf16.msra.mxu0 0
  %594 = vmatprep.subr.bf16.mxu0 0
  %595 = vmatpush1.bf16.msra.mxu0 0
  %596 = vmatprep.subr.bf16.mxu0 0
  %597 = vmatpush1.bf16.msra.mxu0 0
  %598 = vmatprep.subr.bf16.mxu0 0
  %599 = vmatpush1.bf16.msra.mxu0 0
  %600 = vmatprep.subr.bf16.mxu0 0
  %601 = vmatpush1.bf16.msra.mxu0 0
  %602 = vmatprep.subr.bf16.mxu0 0
  %603 = vmatpush1.bf16.msra.mxu0 0
  %604 = vmatprep.mubr.bf16.mxu0 0
  %605 = vmatmul.mubr.bf16.gmra.mrb[0].mxu0 %v571
  %v606 = vpop.f32.mrb[0].mxu0
  %v607 = vadd.f32 0.0, %v606
  %v608 = vpop.f32.mrb[0].mxu0
  %v609 = vadd.f32 0.0, %v608
  %v610 = vpop.f32.mrb[0].mxu0
  %v611 = vpop.f32.mrb[0].mxu0
  %612 = vdwg.mxu0
  %613 = vmatprep.subr.bf16.mxu0 0
  %614 = vmatpush1.bf16.msra.mxu0 %v411
  %615 = vmatprep.subr.bf16.mxu0 0
  %616 = vmatpush1.bf16.msra.mxu0 %v414
  %617 = vmatprep.subr.bf16.mxu0 0
  %618 = vmatpush1.bf16.msra.mxu0 %v417
  %619 = vmatprep.subr.bf16.mxu0 0
  %620 = vmatpush1.bf16.msra.mxu0 %v420
  %621 = vmatprep.subr.bf16.mxu0 0
  %622 = vmatpush1.bf16.msra.mxu0 %v423
  %623 = vmatprep.subr.bf16.mxu0 0
  %624 = vmatpush1.bf16.msra.mxu0 %v426
  %625 = vmatprep.subr.bf16.mxu0 0
  %626 = vmatpush1.bf16.msra.mxu0 %v429
  %627 = vmatprep.subr.bf16.mxu0 0
  %628 = vmatpush1.bf16.msra.mxu0 %v432
  %629 = vmatprep.subr.bf16.mxu0 0
  %630 = vmatpush1.bf16.msra.mxu0 0
  %631 = vmatprep.subr.bf16.mxu0 0
  %632 = vmatpush1.bf16.msra.mxu0 0
  %633 = vmatprep.subr.bf16.mxu0 0
  %634 = vmatpush1.bf16.msra.mxu0 0
  %635 = vmatprep.subr.bf16.mxu0 0
  %636 = vmatpush1.bf16.msra.mxu0 0
  %637 = vmatprep.subr.bf16.mxu0 0
  %638 = vmatpush1.bf16.msra.mxu0 0
  %639 = vmatprep.subr.bf16.mxu0 0
  %640 = vmatpush1.bf16.msra.mxu0 0
  %641 = vmatprep.subr.bf16.mxu0 0
  %642 = vmatpush1.bf16.msra.mxu0 0
  %643 = vmatprep.subr.bf16.mxu0 0
  %644 = vmatpush1.bf16.msra.mxu0 0
  %645 = vmatprep.mubr.bf16.mxu0 0
  %646 = vmatmul.mubr.bf16.gmra.mrb[0].mxu0 %v571
  %v647 = vpop.f32.mrb[0].mxu0
  %v648 = vadd.f32 0.0, %v647
  %v649 = vpop.f32.mrb[0].mxu0
  %v650 = vpop.f32.mrb[0].mxu0
  %v651 = vpop.f32.mrb[0].mxu0
  %652 = vdwg.mxu0
  %v653 = vadd.f32 %v568, %v607
  %v654 = vadd.f32 %v569, %v609
  %v655 = vxor.u32 %v653, 2147483648
  %v656 = vxor.u32 %v654, 2147483648
  %v657 = vmul.f32 %v655, 1.442695
  %v658 = vpow.pop %v657
  %v659 = vmul.f32 %v656, 1.442695
  %v660 = vpow.pop %v659
  %v661 = vadd.f32 %v658, 1.0
  %v662 = vadd.f32 %v660, 1.0
  %v663 = vrcp.pop %v661
  %v664 = vmul.f32 1.0, %v663
  %v665 = vrcp.pop %v662
  %v666 = vmul.f32 1.0, %v665
  %v667 = vadd.f32 %v648, %v556
  %v668 = vmul.f32 %v664, %v667
  %v669 = vadd.f32 %v570, %v668
  %v670 = vtanh.pop %v669
  %v671 = vsub.f32 1.0, %v666
  %v672 = vmul.f32 %v671, %v670
  %v673 = vmul.f32 %v666, %v565
  %v674 = vadd.f32 %v672, %v673
  %s675 = scalar_lea.vmem %s5, 8
  %676 = vst [vmem:[%s675] sm:$0xff] %v674
  %677 = vst [vmem:[%s6] sm:$0xff] %v674
  // Predicated region
  $region22: #{drnn_forward.5} parent=0 // pred_check
    _
  $region23: #{drnn_forward.5} parent=0 // pred_check_branch
    %679 = sbr.rel (0) target = $region25
  $region24: #{drnn_forward.5} parent=0 // pred_region
    _
  $region25: #{drnn_forward.5} parent=0 // pred_fallthru
    _
  // Predicated region
  $region26: #{drnn_forward.5} parent=0 // pred_check
    _
  $region27: #{drnn_forward.5} parent=0 // pred_check_branch
    %681 = sbr.rel (0) target = $region29
  $region28: #{drnn_forward.5} parent=0 // pred_region
    _
  $region29: #{drnn_forward.5} parent=0 // pred_fallthru
    _
  // Predicated region
  $region30: #{drnn_forward.5} parent=0 // pred_check
    _
  $region31: #{drnn_forward.5} parent=0 // pred_check_branch
    %683 = sbr.rel (0) target = $region33
  $region32: #{drnn_forward.5} parent=0 // pred_region
    _
  $region33: #{drnn_forward.5} parent=0 // pred_fallthru
    _
  // Predicated region
  $region34: #{drnn_forward.5} parent=0 // pred_check
    _
  $region35: #{drnn_forward.5} parent=0 // pred_check_branch
    %685 = sbr.rel (0) target = $region37
  $region36: #{drnn_forward.5} parent=0 // pred_region
    _
  $region37: #{drnn_forward.5} parent=0 // pred_fallthru
    _

// kernel: drnn_forward.4
$region0: #{drnn_forward.4}
  #allocation0 [shape = 'u32[]', space=smem, size = 0x4, offset = 0x4, fixed_abs, tag = 'smem constant byte address 0x4 - core index']
  #allocation1 [shape = 'u32[144,128]{1,0:T(1,128)}', space=vmem, size = 0x12000, scoped, tag = 'internal scratch']
  #allocation2 [shape = 'f32[4,8,384]{2,1,0:T(8,128)}', space=vmem, size = 0xc000, scoped, tag = 'scratch operand']
  %s0 = inlined_call_operand.vmem [shape: f32[4,8,128], index: 0, kind: input, shape index: {}]
  %s1 = inlined_call_operand.vmem [shape: bf16[128,384], index: 1, kind: input, shape index: {}]
  %s2 = inlined_call_operand.vmem [shape: bf16[128,384], index: 2, kind: input, shape index: {}]
  %s3 = inlined_call_operand.vmem [shape: f32[1,384], index: 3, kind: input, shape index: {}]
  %s4 = inlined_call_operand.vmem [shape: f32[1,128], index: 4, kind: input, shape index: {}]
  %s5 = inlined_call_operand.vmem [shape: f32[4,8,128], index: 5, kind: output, shape index: {0}]
  %s6 = inlined_call_operand.vmem [shape: f32[8,128], index: 6, kind: output, shape index: {1}]
  %7 = xla_tuple %s5, %s6
  %s8 = sld [smem:[#allocation0]]
  $region38: #{drnn_forward.4} parent=0
    _
  %s10 = ssub.s32 1, %s8
  %s11 = scalar_select 0, %s10, %s8
  // Predicated region
  $region2: #{drnn_forward.4} parent=0 // pred_check
    _
  $region3: #{drnn_forward.4} parent=0 // pred_check_branch
    %13 = sbr.rel (0) target = $region5
  $region4: #{drnn_forward.4} parent=0 // pred_region
    _
  $region5: #{drnn_forward.4} parent=0 // pred_fallthru
    _
  // Predicated region
  $region6: #{drnn_forward.4} parent=0 // pred_check
    _
  $region7: #{drnn_forward.4} parent=0 // pred_check_branch
    %15 = sbr.rel (0) target = $region9
  $region8: #{drnn_forward.4} parent=0 // pred_region
    _
  $region9: #{drnn_forward.4} parent=0 // pred_fallthru
    _
  // Predicated region
  $region10: #{drnn_forward.4} parent=0 // pred_check
    _
  $region11: #{drnn_forward.4} parent=0 // pred_check_branch
    %17 = sbr.rel (0) target = $region13
  $region12: #{drnn_forward.4} parent=0 // pred_region
    _
  $region13: #{drnn_forward.4} parent=0 // pred_fallthru
    _
  // Predicated region
  $region14: #{drnn_forward.4} parent=0 // pred_check
    _
  $region15: #{drnn_forward.4} parent=0 // pred_check_branch
    %19 = sbr.rel (0) target = $region17
  $region16: #{drnn_forward.4} parent=0 // pred_region
    _
  $region17: #{drnn_forward.4} parent=0 // pred_fallthru
    _
  // Predicated region
  $region18: #{drnn_forward.4} parent=0 // pred_check
    _
  $region19: #{drnn_forward.4} parent=0 // pred_check_branch
    %21 = sbr.rel (0) target = $region21
  $region20: #{drnn_forward.4} parent=0 // pred_region
    _
  $region21: #{drnn_forward.4} parent=0 // pred_fallthru
    _
  %v23 = vld [vmem:[%s0] sm:$0xff]
  %v24 = vld [vmem:[%s0 + $0x8] sm:$0xff]
  %v25 = vld [vmem:[%s0 + $0x10] sm:$0xff]
  %v26 = vld [vmem:[%s0 + $0x18] sm:$0xff]
  %v27 = vpack.c.bf16 %v24, %v23
  %v28 = vpack.c.bf16 %v26, %v25
  %v29 = vld [vmem:[%s1] sm:$0xff]
  %v30 = vld [vmem:[%s1 + $0x8] sm:$0xf]
  %v31 = vld [vmem:[%s1 + $0xc] sm:$0xff]
  %v32 = vld [vmem:[%s1 + $0x14] sm:$0xf]
  %v33 = vld [vmem:[%s1 + $0x18] sm:$0xff]
  %v34 = vld [vmem:[%s1 + $0x20] sm:$0xf]
  %v35 = vld [vmem:[%s1 + $0x24] sm:$0xff]
  %v36 = vld [vmem:[%s1 + $0x2c] sm:$0xf]
  %v37 = vld [vmem:[%s1 + $0x30] sm:$0xff]
  %v38 = vld [vmem:[%s1 + $0x38] sm:$0xf]
  %v39 = vld [vmem:[%s1 + $0x3c] sm:$0xff]
  %v40 = vld [vmem:[%s1 + $0x44] sm:$0xf]
  %v41 = vld [vmem:[%s1 + $0x48] sm:$0xff]
  %v42 = vld [vmem:[%s1 + $0x50] sm:$0xf]
  %v43 = vld [vmem:[%s1 + $0x54] sm:$0xff]
  %v44 = vld [vmem:[%s1 + $0x5c] sm:$0xf]
  %v45 = vld [vmem:[%s1 + $0x60] sm:$0xff]
  %v46 = vld [vmem:[%s1 + $0x68] sm:$0xf]
  %v47 = vld [vmem:[%s1 + $0x6c] sm:$0xff]
  %v48 = vld [vmem:[%s1 + $0x74] sm:$0xf]
  %v49 = vld [vmem:[%s1 + $0x78] sm:$0xff]
  %v50 = vld [vmem:[%s1 + $0x80] sm:$0xf]
  %v51 = vld [vmem:[%s1 + $0x84] sm:$0xff]
  %v52 = vld [vmem:[%s1 + $0x8c] sm:$0xf]
  %v53 = vld [vmem:[%s1 + $0x90] sm:$0xff]
  %v54 = vld [vmem:[%s1 + $0x98] sm:$0xf]
  %v55 = vld [vmem:[%s1 + $0x9c] sm:$0xff]
  %v56 = vld [vmem:[%s1 + $0xa4] sm:$0xf]
  %v57 = vld [vmem:[%s1 + $0xa8] sm:$0xff]
  %v58 = vld [vmem:[%s1 + $0xb0] sm:$0xf]
  %v59 = vld [vmem:[%s1 + $0xb4] sm:$0xff]
  %v60 = vld [vmem:[%s1 + $0xbc] sm:$0xf]
  %v61 = vld [vmem:[%s3] sm:$0x7]
  %v63 = vlaneseq
  %v64 = vshrl.u32 %v63, 7
  %v65 = vsub.s32 0, %v64
  %v66 = vrot.slane %v61, %v65
  %v67 = vlaneseq
  %v68 = vshrl.u32 %v67, 7
  %v69 = vsub.s32 1, %v68
  %v70 = vrot.slane %v61, %v69
  %v71 = vlaneseq
  %v72 = vshrl.u32 %v71, 7
  %v73 = vsub.s32 2, %v72
  %v74 = vrot.slane %v61, %v73
  %v110 = vunpack.c.l.b16 %v29
  %v111 = vunpack.c.h.b16 %v29
  %v112 = vunpack.c.l.b16 %v30
  %v113 = vunpack.c.l.b16 %v31
  %v114 = vunpack.c.h.b16 %v31
  %v115 = vunpack.c.l.b16 %v32
  %v116 = vunpack.c.l.b16 %v33
  %v117 = vunpack.c.h.b16 %v33
  %v118 = vunpack.c.l.b16 %v34
  %v119 = vunpack.c.l.b16 %v35
  %v120 = vunpack.c.h.b16 %v35
  %v121 = vunpack.c.l.b16 %v36
  %v122 = vunpack.c.l.b16 %v37
  %v123 = vunpack.c.h.b16 %v37
  %v124 = vunpack.c.l.b16 %v38
  %v125 = vunpack.c.l.b16 %v39
  %v126 = vunpack.c.h.b16 %v39
  %v127 = vunpack.c.l.b16 %v40
  %v128 = vunpack.c.l.b16 %v41
  %v129 = vunpack.c.h.b16 %v41
  %v130 = vunpack.c.l.b16 %v42
  %v131 = vunpack.c.l.b16 %v43
  %v132 = vunpack.c.h.b16 %v43
  %v133 = vunpack.c.l.b16 %v44
  %v134 = vunpack.c.l.b16 %v45
  %v135 = vunpack.c.h.b16 %v45
  %v136 = vunpack.c.l.b16 %v46
  %v137 = vunpack.c.l.b16 %v47
  %v138 = vunpack.c.h.b16 %v47
  %v139 = vunpack.c.l.b16 %v48
  %v140 = vunpack.c.l.b16 %v49
  %v141 = vunpack.c.h.b16 %v49
  %v142 = vunpack.c.l.b16 %v50
  %v143 = vunpack.c.l.b16 %v51
  %v144 = vunpack.c.h.b16 %v51
  %v145 = vunpack.c.l.b16 %v52
  %v146 = vunpack.c.l.b16 %v53
  %v147 = vunpack.c.h.b16 %v53
  %v148 = vunpack.c.l.b16 %v54
  %v149 = vunpack.c.l.b16 %v55
  %v150 = vunpack.c.h.b16 %v55
  %v151 = vunpack.c.l.b16 %v56
  %v152 = vunpack.c.l.b16 %v57
  %v153 = vunpack.c.h.b16 %v57
  %v154 = vunpack.c.l.b16 %v58
  %v155 = vunpack.c.l.b16 %v59
  %v156 = vunpack.c.h.b16 %v59
  %v157 = vunpack.c.l.b16 %v60
  %v158 = vpack.c.b16 %v113, %v110
  %v159 = vpack.c.b16 %v114, %v111
  %v160 = vpack.c.b16 %v115, %v112
  %v161 = vpack.c.b16 %v119, %v116
  %v162 = vpack.c.b16 %v120, %v117
  %v163 = vpack.c.b16 %v121, %v118
  %v164 = vpack.c.b16 %v125, %v122
  %v165 = vpack.c.b16 %v126, %v123
  %v166 = vpack.c.b16 %v127, %v124
  %v167 = vpack.c.b16 %v131, %v128
  %v168 = vpack.c.b16 %v132, %v129
  %v169 = vpack.c.b16 %v133, %v130
  %v170 = vpack.c.b16 %v137, %v134
  %v171 = vpack.c.b16 %v138, %v135
  %v172 = vpack.c.b16 %v139, %v136
  %v173 = vpack.c.b16 %v143, %v140
  %v174 = vpack.c.b16 %v144, %v141
  %v175 = vpack.c.b16 %v145, %v142
  %v176 = vpack.c.b16 %v149, %v146
  %v177 = vpack.c.b16 %v150, %v147
  %v178 = vpack.c.b16 %v151, %v148
  %v179 = vpack.c.b16 %v155, %v152
  %v180 = vpack.c.b16 %v156, %v153
  %v181 = vpack.c.b16 %v157, %v154
  %206 = vmatprep.subr.bf16.mxu0 %v159
  %207 = vmatpush1.bf16.msra.mxu0 %v158
  %208 = vmatprep.subr.bf16.mxu0 %v162
  %209 = vmatpush1.bf16.msra.mxu0 %v161
  %210 = vmatprep.subr.bf16.mxu0 %v165
  %211 = vmatpush1.bf16.msra.mxu0 %v164
  %212 = vmatprep.subr.bf16.mxu0 %v168
  %213 = vmatpush1.bf16.msra.mxu0 %v167
  %214 = vmatprep.subr.bf16.mxu0 %v171
  %215 = vmatpush1.bf16.msra.mxu0 %v170
  %216 = vmatprep.subr.bf16.mxu0 %v174
  %217 = vmatpush1.bf16.msra.mxu0 %v173
  %218 = vmatprep.subr.bf16.mxu0 %v177
  %219 = vmatpush1.bf16.msra.mxu0 %v176
  %220 = vmatprep.subr.bf16.mxu0 %v180
  %221 = vmatpush1.bf16.msra.mxu0 %v179
  %222 = vmatprep.subr.bf16.mxu0 0
  %223 = vmatpush1.bf16.msra.mxu0 0
  %224 = vmatprep.subr.bf16.mxu0 0
  %225 = vmatpush1.bf16.msra.mxu0 0
  %226 = vmatprep.subr.bf16.mxu0 0
  %227 = vmatpush1.bf16.msra.mxu0 0
  %228 = vmatprep.subr.bf16.mxu0 0
  %229 = vmatpush1.bf16.msra.mxu0 0
  %230 = vmatprep.subr.bf16.mxu0 0
  %231 = vmatpush1.bf16.msra.mxu0 0
  %232 = vmatprep.subr.bf16.mxu0 0
  %233 = vmatpush1.bf16.msra.mxu0 0
  %234 = vmatprep.subr.bf16.mxu0 0
  %235 = vmatpush1.bf16.msra.mxu0 0
  %236 = vmatprep.subr.bf16.mxu0 0
  %237 = vmatpush1.bf16.msra.mxu0 0
  %238 = vmatprep.mubr.bf16.mxu0 0
  %239 = vmatmul.mubr.bf16.gmra.mrb[0].mxu0 %v27
  %v240 = vpop.f32.mrb[0].mxu0
  %v241 = vadd.f32 %v66, %v240
  %v242 = vpop.f32.mrb[0].mxu0
  %v243 = vadd.f32 %v70, %v242
  %v244 = vpop.f32.mrb[0].mxu0
  %v245 = vadd.f32 %v66, %v244
  %v246 = vpop.f32.mrb[0].mxu0
  %v247 = vadd.f32 %v70, %v246
  %248 = vmatprep.mubr.bf16.mxu0 0
  %249 = vmatmul.mubr.bf16.gmra.mrb[0].mxu0 %v28
  %v250 = vpop.f32.mrb[0].mxu0
  %v251 = vadd.f32 %v66, %v250
  %v252 = vpop.f32.mrb[0].mxu0
  %v253 = vadd.f32 %v70, %v252
  %v254 = vpop.f32.mrb[0].mxu0
  %v255 = vadd.f32 %v66, %v254
  %v256 = vpop.f32.mrb[0].mxu0
  %v257 = vadd.f32 %v70, %v256
  %258 = vdwg.mxu0
  %259 = vmatprep.subr.bf16.mxu0 0
  %260 = vmatpush1.bf16.msra.mxu0 %v160
  %261 = vmatprep.subr.bf16.mxu0 0
  %262 = vmatpush1.bf16.msra.mxu0 %v163
  %263 = vmatprep.subr.bf16.mxu0 0
  %264 = vmatpush1.bf16.msra.mxu0 %v166
  %265 = vmatprep.subr.bf16.mxu0 0
  %266 = vmatpush1.bf16.msra.mxu0 %v169
  %267 = vmatprep.subr.bf16.mxu0 0
  %268 = vmatpush1.bf16.msra.mxu0 %v172
  %269 = vmatprep.subr.bf16.mxu0 0
  %270 = vmatpush1.bf16.msra.mxu0 %v175
  %271 = vmatprep.subr.bf16.mxu0 0
  %272 = vmatpush1.bf16.msra.mxu0 %v178
  %273 = vmatprep.subr.bf16.mxu0 0
  %274 = vmatpush1.bf16.msra.mxu0 %v181
  %275 = vmatprep.subr.bf16.mxu0 0
  %276 = vmatpush1.bf16.msra.mxu0 0
  %277 = vmatprep.subr.bf16.mxu0 0
  %278 = vmatpush1.bf16.msra.mxu0 0
  %279 = vmatprep.subr.bf16.mxu0 0
  %280 = vmatpush1.bf16.msra.mxu0 0
  %281 = vmatprep.subr.bf16.mxu0 0
  %282 = vmatpush1.bf16.msra.mxu0 0
  %283 = vmatprep.subr.bf16.mxu0 0
  %284 = vmatpush1.bf16.msra.mxu0 0
  %285 = vmatprep.subr.bf16.mxu0 0
  %286 = vmatpush1.bf16.msra.mxu0 0
  %287 = vmatprep.subr.bf16.mxu0 0
  %288 = vmatpush1.bf16.msra.mxu0 0
  %289 = vmatprep.subr.bf16.mxu0 0
  %290 = vmatpush1.bf16.msra.mxu0 0
  %291 = vmatprep.mubr.bf16.mxu0 0
  %292 = vmatmul.mubr.bf16.gmra.mrb[0].mxu0 %v27
  %v293 = vpop.f32.mrb[0].mxu0
  %v294 = vadd.f32 %v74, %v293
  %v295 = vpop.f32.mrb[0].mxu0
  %v296 = vpop.f32.mrb[0].mxu0
  %v297 = vadd.f32 %v74, %v296
  %v298 = vpop.f32.mrb[0].mxu0
  %299 = vmatprep.mubr.bf16.mxu0 0
  %300 = vmatmul.mubr.bf16.gmra.mrb[0].mxu0 %v28
  %v301 = vpop.f32.mrb[0].mxu0
  %v302 = vadd.f32 %v74, %v301
  %v303 = vpop.f32.mrb[0].mxu0
  %v304 = vpop.f32.mrb[0].mxu0
  %v305 = vadd.f32 %v74, %v304
  %v306 = vpop.f32.mrb[0].mxu0
  %307 = vdwg.mxu0
  %308 = vst [vmem:[#allocation2] sm:$0xff] %v241
  %309 = vst [vmem:[#allocation2 + $0x8] sm:$0xff] %v243
  %310 = vst [vmem:[#allocation2 + $0x10] sm:$0xff] %v294
  %311 = vst [vmem:[#allocation2 + $0x18] sm:$0xff] %v245
  %312 = vst [vmem:[#allocation2 + $0x20] sm:$0xff] %v247
  %313 = vst [vmem:[#allocation2 + $0x28] sm:$0xff] %v297
  %314 = vst [vmem:[#allocation2 + $0x30] sm:$0xff] %v251
  %315 = vst [vmem:[#allocation2 + $0x38] sm:$0xff] %v253
  %316 = vst [vmem:[#allocation2 + $0x40] sm:$0xff] %v302
  %317 = vst [vmem:[#allocation2 + $0x48] sm:$0xff] %v255
  %318 = vst [vmem:[#allocation2 + $0x50] sm:$0xff] %v257
  %319 = vst [vmem:[#allocation2 + $0x58] sm:$0xff] %v305
  %v320 = vld [vmem:[%s2] sm:$0xff]
  %v321 = vld [vmem:[%s2 + $0x8] sm:$0xf]
  %v322 = vld [vmem:[%s2 + $0xc] sm:$0xff]
  %v323 = vld [vmem:[%s2 + $0x14] sm:$0xf]
  %v324 = vld [vmem:[%s2 + $0x18] sm:$0xff]
  %v325 = vld [vmem:[%s2 + $0x20] sm:$0xf]
  %v326 = vld [vmem:[%s2 + $0x24] sm:$0xff]
  %v327 = vld [vmem:[%s2 + $0x2c] sm:$0xf]
  %v328 = vld [vmem:[%s2 + $0x30] sm:$0xff]
  %v329 = vld [vmem:[%s2 + $0x38] sm:$0xf]
  %v330 = vld [vmem:[%s2 + $0x3c] sm:$0xff]
  %v331 = vld [vmem:[%s2 + $0x44] sm:$0xf]
  %v332 = vld [vmem:[%s2 + $0x48] sm:$0xff]
  %v333 = vld [vmem:[%s2 + $0x50] sm:$0xf]
  %v334 = vld [vmem:[%s2 + $0x54] sm:$0xff]
  %v335 = vld [vmem:[%s2 + $0x5c] sm:$0xf]
  %v336 = vld [vmem:[%s2 + $0x60] sm:$0xff]
  %v337 = vld [vmem:[%s2 + $0x68] sm:$0xf]
  %v338 = vld [vmem:[%s2 + $0x6c] sm:$0xff]
  %v339 = vld [vmem:[%s2 + $0x74] sm:$0xf]
  %v340 = vld [vmem:[%s2 + $0x78] sm:$0xff]
  %v341 = vld [vmem:[%s2 + $0x80] sm:$0xf]
  %v342 = vld [vmem:[%s2 + $0x84] sm:$0xff]
  %v343 = vld [vmem:[%s2 + $0x8c] sm:$0xf]
  %v344 = vld [vmem:[%s2 + $0x90] sm:$0xff]
  %v345 = vld [vmem:[%s2 + $0x98] sm:$0xf]
  %v346 = vld [vmem:[%s2 + $0x9c] sm:$0xff]
  %v347 = vld [vmem:[%s2 + $0xa4] sm:$0xf]
  %v348 = vld [vmem:[%s2 + $0xa8] sm:$0xff]
  %v349 = vld [vmem:[%s2 + $0xb0] sm:$0xf]
  %v350 = vld [vmem:[%s2 + $0xb4] sm:$0xff]
  %v351 = vld [vmem:[%s2 + $0xbc] sm:$0xf]
  %v352 = vld [vmem:[%s4] sm:$0x1]
  %v353 = vld [vmem:[#allocation2] sm:$0xff]
  %v354 = vld [vmem:[#allocation2 + $0x8] sm:$0xff]
  %v355 = vld [vmem:[#allocation2 + $0x10] sm:$0xff]
  %v388 = vunpack.c.l.b16 %v320
  %v389 = vunpack.c.h.b16 %v320
  %v390 = vunpack.c.l.b16 %v321
  %v391 = vunpack.c.l.b16 %v322
  %v392 = vunpack.c.h.b16 %v322
  %v393 = vunpack.c.l.b16 %v323
  %v394 = vunpack.c.l.b16 %v324
  %v395 = vunpack.c.h.b16 %v324
  %v396 = vunpack.c.l.b16 %v325
  %v397 = vunpack.c.l.b16 %v326
  %v398 = vunpack.c.h.b16 %v326
  %v399 = vunpack.c.l.b16 %v327
  %v400 = vunpack.c.l.b16 %v328
  %v401 = vunpack.c.h.b16 %v328
  %v402 = vunpack.c.l.b16 %v329
  %v403 = vunpack.c.l.b16 %v330
  %v404 = vunpack.c.h.b16 %v330
  %v405 = vunpack.c.l.b16 %v331
  %v406 = vunpack.c.l.b16 %v332
  %v407 = vunpack.c.h.b16 %v332
  %v408 = vunpack.c.l.b16 %v333
  %v409 = vunpack.c.l.b16 %v334
  %v410 = vunpack.c.h.b16 %v334
  %v411 = vunpack.c.l.b16 %v335
  %v412 = vunpack.c.l.b16 %v336
  %v413 = vunpack.c.h.b16 %v336
  %v414 = vunpack.c.l.b16 %v337
  %v415 = vunpack.c.l.b16 %v338
  %v416 = vunpack.c.h.b16 %v338
  %v417 = vunpack.c.l.b16 %v339
  %v418 = vunpack.c.l.b16 %v340
  %v419 = vunpack.c.h.b16 %v340
  %v420 = vunpack.c.l.b16 %v341
  %v421 = vunpack.c.l.b16 %v342
  %v422 = vunpack.c.h.b16 %v342
  %v423 = vunpack.c.l.b16 %v343
  %v424 = vunpack.c.l.b16 %v344
  %v425 = vunpack.c.h.b16 %v344
  %v426 = vunpack.c.l.b16 %v345
  %v427 = vunpack.c.l.b16 %v346
  %v428 = vunpack.c.h.b16 %v346
  %v429 = vunpack.c.l.b16 %v347
  %v430 = vunpack.c.l.b16 %v348
  %v431 = vunpack.c.h.b16 %v348
  %v432 = vunpack.c.l.b16 %v349
  %v433 = vunpack.c.l.b16 %v350
  %v434 = vunpack.c.h.b16 %v350
  %v435 = vunpack.c.l.b16 %v351
  %v436 = vpack.c.b16 %v391, %v388
  %v437 = vpack.c.b16 %v392, %v389
  %v438 = vpack.c.b16 %v393, %v390
  %v439 = vpack.c.b16 %v397, %v394
  %v440 = vpack.c.b16 %v398, %v395
  %v441 = vpack.c.b16 %v399, %v396
  %v442 = vpack.c.b16 %v403, %v400
  %v443 = vpack.c.b16 %v404, %v401
  %v444 = vpack.c.b16 %v405, %v402
  %v445 = vpack.c.b16 %v409, %v406
  %v446 = vpack.c.b16 %v410, %v407
  %v447 = vpack.c.b16 %v411, %v408
  %v448 = vpack.c.b16 %v415, %v412
  %v449 = vpack.c.b16 %v416, %v413
  %v450 = vpack.c.b16 %v417, %v414
  %v451 = vpack.c.b16 %v421, %v418
  %v452 = vpack.c.b16 %v422, %v419
  %v453 = vpack.c.b16 %v423, %v420
  %v454 = vpack.c.b16 %v427, %v424
  %v455 = vpack.c.b16 %v428, %v425
  %v456 = vpack.c.b16 %v429, %v426
  %v457 = vpack.c.b16 %v433, %v430
  %v458 = vpack.c.b16 %v434, %v431
  %v459 = vpack.c.b16 %v435, %v432
  %484 = vmatprep.subr.bf16.mxu0 %v437
  %485 = vmatpush1.bf16.msra.mxu0 %v436
  %486 = vmatprep.subr.bf16.mxu0 %v440
  %487 = vmatpush1.bf16.msra.mxu0 %v439
  %488 = vmatprep.subr.bf16.mxu0 %v443
  %489 = vmatpush1.bf16.msra.mxu0 %v442
  %490 = vmatprep.subr.bf16.mxu0 %v446
  %491 = vmatpush1.bf16.msra.mxu0 %v445
  %492 = vmatprep.subr.bf16.mxu0 %v449
  %493 = vmatpush1.bf16.msra.mxu0 %v448
  %494 = vmatprep.subr.bf16.mxu0 %v452
  %495 = vmatpush1.bf16.msra.mxu0 %v451
  %496 = vmatprep.subr.bf16.mxu0 %v455
  %497 = vmatpush1.bf16.msra.mxu0 %v454
  %498 = vmatprep.subr.bf16.mxu0 %v458
  %499 = vmatpush1.bf16.msra.mxu0 %v457
  %500 = vmatprep.subr.bf16.mxu0 0
  %501 = vmatpush1.bf16.msra.mxu0 0
  %502 = vmatprep.subr.bf16.mxu0 0
  %503 = vmatpush1.bf16.msra.mxu0 0
  %504 = vmatprep.subr.bf16.mxu0 0
  %505 = vmatpush1.bf16.msra.mxu0 0
  %506 = vmatprep.subr.bf16.mxu0 0
  %507 = vmatpush1.bf16.msra.mxu0 0
  %508 = vmatprep.subr.bf16.mxu0 0
  %509 = vmatpush1.bf16.msra.mxu0 0
  %510 = vmatprep.subr.bf16.mxu0 0
  %511 = vmatpush1.bf16.msra.mxu0 0
  %512 = vmatprep.subr.bf16.mxu0 0
  %513 = vmatpush1.bf16.msra.mxu0 0
  %514 = vmatprep.subr.bf16.mxu0 0
  %515 = vmatpush1.bf16.msra.mxu0 0
  %516 = vmatprep.mubr.bf16.mxu0 0
  %517 = vmatmul.mubr.bf16.gmra.mrb[0].mxu0 0
  %v518 = vpop.f32.mrb[0].mxu0
  %v519 = vadd.f32 0.0, %v518
  %v520 = vpop.f32.mrb[0].mxu0
  %v521 = vadd.f32 0.0, %v520
  %v522 = vpop.f32.mrb[0].mxu0
  %v523 = vpop.f32.mrb[0].mxu0
  %524 = vdwg.mxu0
  %525 = vmatprep.subr.bf16.mxu0 0
  %526 = vmatpush1.bf16.msra.mxu0 %v438
  %527 = vmatprep.subr.bf16.mxu0 0
  %528 = vmatpush1.bf16.msra.mxu0 %v441
  %529 = vmatprep.subr.bf16.mxu0 0
  %530 = vmatpush1.bf16.msra.mxu0 %v444
  %531 = vmatprep.subr.bf16.mxu0 0
  %532 = vmatpush1.bf16.msra.mxu0 %v447
  %533 = vmatprep.subr.bf16.mxu0 0
  %534 = vmatpush1.bf16.msra.mxu0 %v450
  %535 = vmatprep.subr.bf16.mxu0 0
  %536 = vmatpush1.bf16.msra.mxu0 %v453
  %537 = vmatprep.subr.bf16.mxu0 0
  %538 = vmatpush1.bf16.msra.mxu0 %v456
  %539 = vmatprep.subr.bf16.mxu0 0
  %540 = vmatpush1.bf16.msra.mxu0 %v459
  %541 = vmatprep.subr.bf16.mxu0 0
  %542 = vmatpush1.bf16.msra.mxu0 0
  %543 = vmatprep.subr.bf16.mxu0 0
  %544 = vmatpush1.bf16.msra.mxu0 0
  %545 = vmatprep.subr.bf16.mxu0 0
  %546 = vmatpush1.bf16.msra.mxu0 0
  %547 = vmatprep.subr.bf16.mxu0 0
  %548 = vmatpush1.bf16.msra.mxu0 0
  %549 = vmatprep.subr.bf16.mxu0 0
  %550 = vmatpush1.bf16.msra.mxu0 0
  %551 = vmatprep.subr.bf16.mxu0 0
  %552 = vmatpush1.bf16.msra.mxu0 0
  %553 = vmatprep.subr.bf16.mxu0 0
  %554 = vmatpush1.bf16.msra.mxu0 0
  %555 = vmatprep.subr.bf16.mxu0 0
  %556 = vmatpush1.bf16.msra.mxu0 0
  %557 = vmatprep.mubr.bf16.mxu0 0
  %558 = vmatmul.mubr.bf16.gmra.mrb[0].mxu0 0
  %v559 = vpop.f32.mrb[0].mxu0
  %v560 = vadd.f32 0.0, %v559
  %v561 = vpop.f32.mrb[0].mxu0
  %v562 = vpop.f32.mrb[0].mxu0
  %v563 = vpop.f32.mrb[0].mxu0
  %564 = vdwg.mxu0
  %v565 = vadd.f32 %v353, %v519
  %v566 = vadd.f32 %v354, %v521
  %v567 = vxor.u32 %v565, 2147483648
  %v568 = vxor.u32 %v566, 2147483648
  %v569 = vmul.f32 %v567, 1.442695
  %v570 = vpow.pop %v569
  %v571 = vmul.f32 %v568, 1.442695
  %v572 = vpow.pop %v571
  %v573 = vadd.f32 %v570, 1.0
  %v574 = vadd.f32 %v572, 1.0
  %v575 = vrcp.pop %v573
  %v576 = vmul.f32 1.0, %v575
  %v577 = vrcp.pop %v574
  %v578 = vmul.f32 1.0, %v577
  %v580 = vlaneseq
  %v581 = vshrl.u32 %v580, 7
  %v582 = vsub.s32 0, %v581
  %v583 = vrot.slane %v352, %v582
  %v585 = vadd.f32 %v560, %v583
  %v586 = vmul.f32 %v576, %v585
  %v587 = vadd.f32 %v355, %v586
  %v588 = vtanh.pop %v587
  %v589 = vsub.f32 1.0, %v578
  %v590 = vmul.f32 %v589, %v588
  %v591 = vmul.f32 %v578, 0.0
  %v592 = vadd.f32 %v590, %v591
  %593 = vst [vmem:[%s5] sm:$0xff] %v592
  %s594 = scalar_lea.vmem [#allocation2], 24
  %v595 = vld [vmem:[%s594] sm:$0xff]
  %v596 = vld [vmem:[%s594 + $0x8] sm:$0xff]
  %v597 = vld [vmem:[%s594 + $0x10] sm:$0xff]
  %v598 = vpack.c.bf16 %v592, %v592
  %599 = vmatprep.subr.bf16.mxu0 %v437
  %600 = vmatpush1.bf16.msra.mxu0 %v436
  %601 = vmatprep.subr.bf16.mxu0 %v440
  %602 = vmatpush1.bf16.msra.mxu0 %v439
  %603 = vmatprep.subr.bf16.mxu0 %v443
  %604 = vmatpush1.bf16.msra.mxu0 %v442
  %605 = vmatprep.subr.bf16.mxu0 %v446
  %606 = vmatpush1.bf16.msra.mxu0 %v445
  %607 = vmatprep.subr.bf16.mxu0 %v449
  %608 = vmatpush1.bf16.msra.mxu0 %v448
  %609 = vmatprep.subr.bf16.mxu0 %v452
  %610 = vmatpush1.bf16.msra.mxu0 %v451
  %611 = vmatprep.subr.bf16.mxu0 %v455
  %612 = vmatpush1.bf16.msra.mxu0 %v454
  %613 = vmatprep.subr.bf16.mxu0 %v458
  %614 = vmatpush1.bf16.msra.mxu0 %v457
  %615 = vmatprep.subr.bf16.mxu0 0
  %616 = vmatpush1.bf16.msra.mxu0 0
  %617 = vmatprep.subr.bf16.mxu0 0
  %618 = vmatpush1.bf16.msra.mxu0 0
  %619 = vmatprep.subr.bf16.mxu0 0
  %620 = vmatpush1.bf16.msra.mxu0 0
  %621 = vmatprep.subr.bf16.mxu0 0
  %622 = vmatpush1.bf16.msra.mxu0 0
  %623 = vmatprep.subr.bf16.mxu0 0
  %624 = vmatpush1.bf16.msra.mxu0 0
  %625 = vmatprep.subr.bf16.mxu0 0
  %626 = vmatpush1.bf16.msra.mxu0 0
  %627 = vmatprep.subr.bf16.mxu0 0
  %628 = vmatpush1.bf16.msra.mxu0 0
  %629 = vmatprep.subr.bf16.mxu0 0
  %630 = vmatpush1.bf16.msra.mxu0 0
  %631 = vmatprep.mubr.bf16.mxu0 0
  %632 = vmatmul.mubr.bf16.gmra.mrb[0].mxu0 %v598
  %v633 = vpop.f32.mrb[0].mxu0
  %v634 = vadd.f32 0.0, %v633
  %v635 = vpop.f32.mrb[0].mxu0
  %v636 = vadd.f32 0.0, %v635
  %v637 = vpop.f32.mrb[0].mxu0
  %v638 = vpop.f32.mrb[0].mxu0
  %639 = vdwg.mxu0
  %640 = vmatprep.subr.bf16.mxu0 0
  %641 = vmatpush1.bf16.msra.mxu0 %v438
  %642 = vmatprep.subr.bf16.mxu0 0
  %643 = vmatpush1.bf16.msra.mxu0 %v441
  %644 = vmatprep.subr.bf16.mxu0 0
  %645 = vmatpush1.bf16.msra.mxu0 %v444
  %646 = vmatprep.subr.bf16.mxu0 0
  %647 = vmatpush1.bf16.msra.mxu0 %v447
  %648 = vmatprep.subr.bf16.mxu0 0
  %649 = vmatpush1.bf16.msra.mxu0 %v450
  %650 = vmatprep.subr.bf16.mxu0 0
  %651 = vmatpush1.bf16.msra.mxu0 %v453
  %652 = vmatprep.subr.bf16.mxu0 0
  %653 = vmatpush1.bf16.msra.mxu0 %v456
  %654 = vmatprep.subr.bf16.mxu0 0
  %655 = vmatpush1.bf16.msra.mxu0 %v459
  %656 = vmatprep.subr.bf16.mxu0 0
  %657 = vmatpush1.bf16.msra.mxu0 0
  %658 = vmatprep.subr.bf16.mxu0 0
  %659 = vmatpush1.bf16.msra.mxu0 0
  %660 = vmatprep.subr.bf16.mxu0 0
  %661 = vmatpush1.bf16.msra.mxu0 0
  %662 = vmatprep.subr.bf16.mxu0 0
  %663 = vmatpush1.bf16.msra.mxu0 0
  %664 = vmatprep.subr.bf16.mxu0 0
  %665 = vmatpush1.bf16.msra.mxu0 0
  %666 = vmatprep.subr.bf16.mxu0 0
  %667 = vmatpush1.bf16.msra.mxu0 0
  %668 = vmatprep.subr.bf16.mxu0 0
  %669 = vmatpush1.bf16.msra.mxu0 0
  %670 = vmatprep.subr.bf16.mxu0 0
  %671 = vmatpush1.bf16.msra.mxu0 0
  %672 = vmatprep.mubr.bf16.mxu0 0
  %673 = vmatmul.mubr.bf16.gmra.mrb[0].mxu0 %v598
  %v674 = vpop.f32.mrb[0].mxu0
  %v675 = vadd.f32 0.0, %v674
  %v676 = vpop.f32.mrb[0].mxu0
  %v677 = vpop.f32.mrb[0].mxu0
  %v678 = vpop.f32.mrb[0].mxu0
  %679 = vdwg.mxu0
  %v680 = vadd.f32 %v595, %v634
  %v681 = vadd.f32 %v596, %v636
  %v682 = vxor.u32 %v680, 2147483648
  %v683 = vxor.u32 %v681, 2147483648
  %v684 = vmul.f32 %v682, 1.442695
  %v685 = vpow.pop %v684
  %v686 = vmul.f32 %v683, 1.442695
  %v687 = vpow.pop %v686
  %v688 = vadd.f32 %v685, 1.0
  %v689 = vadd.f32 %v687, 1.0
  %v690 = vrcp.pop %v688
  %v691 = vmul.f32 1.0, %v690
  %v692 = vrcp.pop %v689
  %v693 = vmul.f32 1.0, %v692
  %v694 = vadd.f32 %v675, %v583
  %v695 = vmul.f32 %v691, %v694
  %v696 = vadd.f32 %v597, %v695
  %v697 = vtanh.pop %v696
  %v698 = vsub.f32 1.0, %v693
  %v699 = vmul.f32 %v698, %v697
  %v700 = vmul.f32 %v693, %v592
  %v701 = vadd.f32 %v699, %v700
  %s702 = scalar_lea.vmem %s5, 8
  %703 = vst [vmem:[%s702] sm:$0xff] %v701
  %s704 = scalar_lea.vmem [#allocation2], 48
  %v705 = vld [vmem:[%s704] sm:$0xff]
  %v706 = vld [vmem:[%s704 + $0x8] sm:$0xff]
  %v707 = vld [vmem:[%s704 + $0x10] sm:$0xff]
  %v708 = vpack.c.bf16 %v701, %v701
  %709 = vmatprep.subr.bf16.mxu0 %v437
  %710 = vmatpush1.bf16.msra.mxu0 %v436
  %711 = vmatprep.subr.bf16.mxu0 %v440
  %712 = vmatpush1.bf16.msra.mxu0 %v439
  %713 = vmatprep.subr.bf16.mxu0 %v443
  %714 = vmatpush1.bf16.msra.mxu0 %v442
  %715 = vmatprep.subr.bf16.mxu0 %v446
  %716 = vmatpush1.bf16.msra.mxu0 %v445
  %717 = vmatprep.subr.bf16.mxu0 %v449
  %718 = vmatpush1.bf16.msra.mxu0 %v448
  %719 = vmatprep.subr.bf16.mxu0 %v452
  %720 = vmatpush1.bf16.msra.mxu0 %v451
  %721 = vmatprep.subr.bf16.mxu0 %v455
  %722 = vmatpush1.bf16.msra.mxu0 %v454
  %723 = vmatprep.subr.bf16.mxu0 %v458
  %724 = vmatpush1.bf16.msra.mxu0 %v457
  %725 = vmatprep.subr.bf16.mxu0 0
  %726 = vmatpush1.bf16.msra.mxu0 0
  %727 = vmatprep.subr.bf16.mxu0 0
  %728 = vmatpush1.bf16.msra.mxu0 0
  %729 = vmatprep.subr.bf16.mxu0 0
  %730 = vmatpush1.bf16.msra.mxu0 0
  %731 = vmatprep.subr.bf16.mxu0 0
  %732 = vmatpush1.bf16.msra.mxu0 0
  %733 = vmatprep.subr.bf16.mxu0 0
  %734 = vmatpush1.bf16.msra.mxu0 0
  %735 = vmatprep.subr.bf16.mxu0 0
  %736 = vmatpush1.bf16.msra.mxu0 0
  %737 = vmatprep.subr.bf16.mxu0 0
  %738 = vmatpush1.bf16.msra.mxu0 0
  %739 = vmatprep.subr.bf16.mxu0 0
  %740 = vmatpush1.bf16.msra.mxu0 0
  %741 = vmatprep.mubr.bf16.mxu0 0
  %742 = vmatmul.mubr.bf16.gmra.mrb[0].mxu0 %v708
  %v743 = vpop.f32.mrb[0].mxu0
  %v744 = vadd.f32 0.0, %v743
  %v745 = vpop.f32.mrb[0].mxu0
  %v746 = vadd.f32 0.0, %v745
  %v747 = vpop.f32.mrb[0].mxu0
  %v748 = vpop.f32.mrb[0].mxu0
  %749 = vdwg.mxu0
  %750 = vmatprep.subr.bf16.mxu0 0
  %751 = vmatpush1.bf16.msra.mxu0 %v438
  %752 = vmatprep.subr.bf16.mxu0 0
  %753 = vmatpush1.bf16.msra.mxu0 %v441
  %754 = vmatprep.subr.bf16.mxu0 0
  %755 = vmatpush1.bf16.msra.mxu0 %v444
  %756 = vmatprep.subr.bf16.mxu0 0
  %757 = vmatpush1.bf16.msra.mxu0 %v447
  %758 = vmatprep.subr.bf16.mxu0 0
  %759 = vmatpush1.bf16.msra.mxu0 %v450
  %760 = vmatprep.subr.bf16.mxu0 0
  %761 = vmatpush1.bf16.msra.mxu0 %v453
  %762 = vmatprep.subr.bf16.mxu0 0
  %763 = vmatpush1.bf16.msra.mxu0 %v456
  %764 = vmatprep.subr.bf16.mxu0 0
  %765 = vmatpush1.bf16.msra.mxu0 %v459
  %766 = vmatprep.subr.bf16.mxu0 0
  %767 = vmatpush1.bf16.msra.mxu0 0
  %768 = vmatprep.subr.bf16.mxu0 0
  %769 = vmatpush1.bf16.msra.mxu0 0
  %770 = vmatprep.subr.bf16.mxu0 0
  %771 = vmatpush1.bf16.msra.mxu0 0
  %772 = vmatprep.subr.bf16.mxu0 0
  %773 = vmatpush1.bf16.msra.mxu0 0
  %774 = vmatprep.subr.bf16.mxu0 0
  %775 = vmatpush1.bf16.msra.mxu0 0
  %776 = vmatprep.subr.bf16.mxu0 0
  %777 = vmatpush1.bf16.msra.mxu0 0
  %778 = vmatprep.subr.bf16.mxu0 0
  %779 = vmatpush1.bf16.msra.mxu0 0
  %780 = vmatprep.subr.bf16.mxu0 0
  %781 = vmatpush1.bf16.msra.mxu0 0
  %782 = vmatprep.mubr.bf16.mxu0 0
  %783 = vmatmul.mubr.bf16.gmra.mrb[0].mxu0 %v708
  %v784 = vpop.f32.mrb[0].mxu0
  %v785 = vadd.f32 0.0, %v784
  %v786 = vpop.f32.mrb[0].mxu0
  %v787 = vpop.f32.mrb[0].mxu0
  %v788 = vpop.f32.mrb[0].mxu0
  %789 = vdwg.mxu0
  %v790 = vadd.f32 %v705, %v744
  %v791 = vadd.f32 %v706, %v746
  %v792 = vxor.u32 %v790, 2147483648
  %v793 = vxor.u32 %v791, 2147483648
  %v794 = vmul.f32 %v792, 1.442695
  %v795 = vpow.pop %v794
  %v796 = vmul.f32 %v793, 1.442695
  %v797 = vpow.pop %v796
  %v798 = vadd.f32 %v795, 1.0
  %v799 = vadd.f32 %v797, 1.0
  %v800 = vrcp.pop %v798
  %v801 = vmul.f32 1.0, %v800
  %v802 = vrcp.pop %v799
  %v803 = vmul.f32 1.0, %v802
  %v804 = vadd.f32 %v785, %v583
  %v805 = vmul.f32 %v801, %v804
  %v806 = vadd.f32 %v707, %v805
  %v807 = vtanh.pop %v806
  %v808 = vsub.f32 1.0, %v803
  %v809 = vmul.f32 %v808, %v807
  %v810 = vmul.f32 %v803, %v701
  %v811 = vadd.f32 %v809, %v810
  %s812 = scalar_lea.vmem %s5, 16
  %813 = vst [vmem:[%s812] sm:$0xff] %v811
  %s814 = scalar_lea.vmem [#allocation2], 72
  %v815 = vld [vmem:[%s814] sm:$0xff]
  %v816 = vld [vmem:[%s814 + $0x8] sm:$0xff]
  %v817 = vld [vmem:[%s814 + $0x10] sm:$0xff]
  %v818 = vpack.c.bf16 %v811, %v811
  %819 = vmatprep.subr.bf16.mxu0 %v437
  %820 = vmatpush1.bf16.msra.mxu0 %v436
  %821 = vmatprep.subr.bf16.mxu0 %v440
  %822 = vmatpush1.bf16.msra.mxu0 %v439
  %823 = vmatprep.subr.bf16.mxu0 %v443
  %824 = vmatpush1.bf16.msra.mxu0 %v442
  %825 = vmatprep.subr.bf16.mxu0 %v446
  %826 = vmatpush1.bf16.msra.mxu0 %v445
  %827 = vmatprep.subr.bf16.mxu0 %v449
  %828 = vmatpush1.bf16.msra.mxu0 %v448
  %829 = vmatprep.subr.bf16.mxu0 %v452
  %830 = vmatpush1.bf16.msra.mxu0 %v451
  %831 = vmatprep.subr.bf16.mxu0 %v455
  %832 = vmatpush1.bf16.msra.mxu0 %v454
  %833 = vmatprep.subr.bf16.mxu0 %v458
  %834 = vmatpush1.bf16.msra.mxu0 %v457
  %835 = vmatprep.subr.bf16.mxu0 0
  %836 = vmatpush1.bf16.msra.mxu0 0
  %837 = vmatprep.subr.bf16.mxu0 0
  %838 = vmatpush1.bf16.msra.mxu0 0
  %839 = vmatprep.subr.bf16.mxu0 0
  %840 = vmatpush1.bf16.msra.mxu0 0
  %841 = vmatprep.subr.bf16.mxu0 0
  %842 = vmatpush1.bf16.msra.mxu0 0
  %843 = vmatprep.subr.bf16.mxu0 0
  %844 = vmatpush1.bf16.msra.mxu0 0
  %845 = vmatprep.subr.bf16.mxu0 0
  %846 = vmatpush1.bf16.msra.mxu0 0
  %847 = vmatprep.subr.bf16.mxu0 0
  %848 = vmatpush1.bf16.msra.mxu0 0
  %849 = vmatprep.subr.bf16.mxu0 0
  %850 = vmatpush1.bf16.msra.mxu0 0
  %851 = vmatprep.mubr.bf16.mxu0 0
  %852 = vmatmul.mubr.bf16.gmra.mrb[0].mxu0 %v818
  %v853 = vpop.f32.mrb[0].mxu0
  %v854 = vadd.f32 0.0, %v853
  %v855 = vpop.f32.mrb[0].mxu0
  %v856 = vadd.f32 0.0, %v855
  %v857 = vpop.f32.mrb[0].mxu0
  %v858 = vpop.f32.mrb[0].mxu0
  %859 = vdwg.mxu0
  %860 = vmatprep.subr.bf16.mxu0 0
  %861 = vmatpush1.bf16.msra.mxu0 %v438
  %862 = vmatprep.subr.bf16.mxu0 0
  %863 = vmatpush1.bf16.msra.mxu0 %v441
  %864 = vmatprep.subr.bf16.mxu0 0
  %865 = vmatpush1.bf16.msra.mxu0 %v444
  %866 = vmatprep.subr.bf16.mxu0 0
  %867 = vmatpush1.bf16.msra.mxu0 %v447
  %868 = vmatprep.subr.bf16.mxu0 0
  %869 = vmatpush1.bf16.msra.mxu0 %v450
  %870 = vmatprep.subr.bf16.mxu0 0
  %871 = vmatpush1.bf16.msra.mxu0 %v453
  %872 = vmatprep.subr.bf16.mxu0 0
  %873 = vmatpush1.bf16.msra.mxu0 %v456
  %874 = vmatprep.subr.bf16.mxu0 0
  %875 = vmatpush1.bf16.msra.mxu0 %v459
  %876 = vmatprep.subr.bf16.mxu0 0
  %877 = vmatpush1.bf16.msra.mxu0 0
  %878 = vmatprep.subr.bf16.mxu0 0
  %879 = vmatpush1.bf16.msra.mxu0 0
  %880 = vmatprep.subr.bf16.mxu0 0
  %881 = vmatpush1.bf16.msra.mxu0 0
  %882 = vmatprep.subr.bf16.mxu0 0
  %883 = vmatpush1.bf16.msra.mxu0 0
  %884 = vmatprep.subr.bf16.mxu0 0
  %885 = vmatpush1.bf16.msra.mxu0 0
  %886 = vmatprep.subr.bf16.mxu0 0
  %887 = vmatpush1.bf16.msra.mxu0 0
  %888 = vmatprep.subr.bf16.mxu0 0
  %889 = vmatpush1.bf16.msra.mxu0 0
  %890 = vmatprep.subr.bf16.mxu0 0
  %891 = vmatpush1.bf16.msra.mxu0 0
  %892 = vmatprep.mubr.bf16.mxu0 0
  %893 = vmatmul.mubr.bf16.gmra.mrb[0].mxu0 %v818
  %v894 = vpop.f32.mrb[0].mxu0
  %v895 = vadd.f32 0.0, %v894
  %v896 = vpop.f32.mrb[0].mxu0
  %v897 = vpop.f32.mrb[0].mxu0
  %v898 = vpop.f32.mrb[0].mxu0
  %899 = vdwg.mxu0
  %v900 = vadd.f32 %v815, %v854
  %v901 = vadd.f32 %v816, %v856
  %v902 = vxor.u32 %v900, 2147483648
  %v903 = vxor.u32 %v901, 2147483648
  %v904 = vmul.f32 %v902, 1.442695
  %v905 = vpow.pop %v904
  %v906 = vmul.f32 %v903, 1.442695
  %v907 = vpow.pop %v906
  %v908 = vadd.f32 %v905, 1.0
  %v909 = vadd.f32 %v907, 1.0
  %v910 = vrcp.pop %v908
  %v911 = vmul.f32 1.0, %v910
  %v912 = vrcp.pop %v909
  %v913 = vmul.f32 1.0, %v912
  %v914 = vadd.f32 %v895, %v583
  %v915 = vmul.f32 %v911, %v914
  %v916 = vadd.f32 %v817, %v915
  %v917 = vtanh.pop %v916
  %v918 = vsub.f32 1.0, %v913
  %v919 = vmul.f32 %v918, %v917
  %v920 = vmul.f32 %v913, %v811
  %v921 = vadd.f32 %v919, %v920
  %s922 = scalar_lea.vmem %s5, 24
  %923 = vst [vmem:[%s922] sm:$0xff] %v921
  %924 = vst [vmem:[%s6] sm:$0xff] %v921
  // Predicated region
  $region22: #{drnn_forward.4} parent=0 // pred_check
    _
  $region23: #{drnn_forward.4} parent=0 // pred_check_branch
    %926 = sbr.rel (0) target = $region25
  $region24: #{drnn_forward.4} parent=0 // pred_region
    _
  $region25: #{drnn_forward.4} parent=0 // pred_fallthru
    _
  // Predicated region
  $region26: #{drnn_forward.4} parent=0 // pred_check
    _
  $region27: #{drnn_forward.4} parent=0 // pred_check_branch
    %928 = sbr.rel (0) target = $region29
  $region28: #{drnn_forward.4} parent=0 // pred_region
    _
  $region29: #{drnn_forward.4} parent=0 // pred_fallthru
    _
  // Predicated region
  $region30: #{drnn_forward.4} parent=0 // pred_check
    _
  $region31: #{drnn_forward.4} parent=0 // pred_check_branch
    %930 = sbr.rel (0) target = $region33
  $region32: #{drnn_forward.4} parent=0 // pred_region
    _
  $region33: #{drnn_forward.4} parent=0 // pred_fallthru
    _
  // Predicated region
  $region34: #{drnn_forward.4} parent=0 // pred_check
    _
  $region35: #{drnn_forward.4} parent=0 // pred_check_branch
    %932 = sbr.rel (0) target = $region37
  $region36: #{drnn_forward.4} parent=0 // pred_region
    _
  $region37: #{drnn_forward.4} parent=0 // pred_fallthru
    _

// kernel: drnn_forward.3
$region0: #{drnn_forward.3}
  #allocation0 [shape = 'u32[]', space=smem, size = 0x4, offset = 0x4, fixed_abs, tag = 'smem constant byte address 0x4 - core index']
  #allocation1 [shape = 'u32[144,128]{1,0:T(1,128)}', space=vmem, size = 0x12000, scoped, tag = 'internal scratch']
  #allocation2 [shape = 'f32[8,8,384]{2,1,0:T(8,128)}', space=vmem, size = 0x18000, scoped, tag = 'scratch operand']
  %s0 = inlined_call_operand.vmem [shape: f32[8,8,4], index: 0, kind: input, shape index: {}]
  %s1 = inlined_call_operand.vmem [shape: bf16[4,384], index: 1, kind: input, shape index: {}]
  %s2 = inlined_call_operand.hbm [shape: bf16[128,384], index: 2, kind: input, shape index: {}]
  %s3 = inlined_call_operand.vmem [shape: f32[1,384], index: 3, kind: input, shape index: {}]
  %s4 = inlined_call_operand.vmem [shape: f32[1,128], index: 4, kind: input, shape index: {}]
  %s5 = inlined_call_operand.vmem [shape: f32[8,8,128], index: 5, kind: output, shape index: {0}]
  %s6 = inlined_call_operand.vmem [shape: f32[8,128], index: 6, kind: output, shape index: {1}]
  %7 = xla_tuple %s5, %s6
  %s8 = sld [smem:[#allocation0]]
  $region42: #{drnn_forward.3} parent=0
    _
  %s10 = ssub.s32 1, %s8
  %s11 = scalar_select 0, %s10, %s8
  $region1: #{drnn_forward.3} parent=0
    #allocation3 [shape = 'u8[98304]{0}', space=vmem, size = 0x18000, scoped, tag = 'input window, operand 2, single buffered']
    #allocation4 [shape = 's32[1]{0}', space=sflag, size = 0x4, scoped, tag = 'scoped memory for drnn_forward.3']
    %12 = vsyncpa [#allocation4], 0
    // Predicated region
    $region2: #{drnn_forward.3} parent=1 // pred_check
      _
    $region3: #{drnn_forward.3} parent=1 // pred_check_branch
      %14 = sbr.rel (0) target = $region5
    $region4: #{drnn_forward.3} parent=1 // pred_region
      _
    $region5: #{drnn_forward.3} parent=1 // pred_fallthru
      _
    // Predicated region
    $region6: #{drnn_forward.3} parent=1 // pred_check
      _
    $region7: #{drnn_forward.3} parent=1 // pred_check_branch
      %16 = sbr.rel (0) target = $region9
    $region8: #{drnn_forward.3} parent=1 // pred_region
      _
    $region9: #{drnn_forward.3} parent=1 // pred_fallthru
      _
    // Predicated region
    $region10: #{drnn_forward.3} parent=1 // pred_check
      _
    $region11: #{drnn_forward.3} parent=1 // pred_check_branch
      %18 = sbr.rel (0) target = $region13
    $region12: #{drnn_forward.3} parent=1 // pred_region
      %s20 = ssub.s32 3072, 3072
      %21 = vsyncadd [#allocation4], %s20
      %s22 = sshll.u32 [#allocation3], 4
      %s23 = int_to_ptr.vmem [resolvable:$true] %s22
      %28 = dma.hbm_to_vmem [thread:$0]  %s2, 3072, %s23, [#allocation4], 192, 192, 12
    $region13: #{drnn_forward.3} parent=1 // pred_fallthru
      _
    // Predicated region
    $region14: #{drnn_forward.3} parent=1 // pred_check
      _
    $region15: #{drnn_forward.3} parent=1 // pred_check_branch
      %30 = sbr.rel (0) target = $region17
    $region16: #{drnn_forward.3} parent=1 // pred_region
      _
    $region17: #{drnn_forward.3} parent=1 // pred_fallthru
      _
    // Predicated region
    $region18: #{drnn_forward.3} parent=1 // pred_check
      _
    $region19: #{drnn_forward.3} parent=1 // pred_check_branch
      %32 = sbr.rel (0) target = $region21
    $region20: #{drnn_forward.3} parent=1 // pred_region
      _
    $region21: #{drnn_forward.3} parent=1 // pred_fallthru
      _
    // Predicated region
    $region22: #{drnn_forward.3} parent=1 // pred_check
      _
    $region23: #{drnn_forward.3} parent=1 // pred_check_branch
      %34 = sbr.rel (0) target = $region25
    $region24: #{drnn_forward.3} parent=1 // pred_region
      %35 = dma.done [#allocation4], 3072
    $region25: #{drnn_forward.3} parent=1 // pred_fallthru
      _
    %v37 = vld [vmem:[%s0] sm:$0xff]
    %v38 = vld [vmem:[%s0 + $0x8] sm:$0xff]
    %v39 = vld [vmem:[%s0 + $0x10] sm:$0xff]
    %v40 = vld [vmem:[%s0 + $0x18] sm:$0xff]
    %v41 = vld [vmem:[%s0 + $0x20] sm:$0xff]
    %v42 = vld [vmem:[%s0 + $0x28] sm:$0xff]
    %v43 = vld [vmem:[%s0 + $0x30] sm:$0xff]
    %v44 = vld [vmem:[%s0 + $0x38] sm:$0xff]
    %v45 = vpack.c.bf16 %v38, %v37
    %v46 = vpack.c.bf16 %v40, %v39
    %v47 = vpack.c.bf16 %v42, %v41
    %v48 = vpack.c.bf16 %v44, %v43
    %v49 = vld [vmem:[%s1] sm:$0x3f]
    %v50 = vld [vmem:[%s3] sm:$0x7]
    %v52 = vlaneseq
    %v53 = vshrl.u32 %v52, 7
    %v54 = vsub.s32 0, %v53
    %v55 = vrot.slane %v50, %v54
    %v56 = vlaneseq
    %v57 = vshrl.u32 %v56, 7
    %v58 = vsub.s32 1, %v57
    %v59 = vrot.slane %v50, %v58
    %v60 = vlaneseq
    %v61 = vshrl.u32 %v60, 7
    %v62 = vsub.s32 2, %v61
    %v63 = vrot.slane %v50, %v62
    %v68 = vcombine.high %v49, %v49
    %v70 = vunpack.c.l.s4 1983009808
    %v71 = vunpack.c.0.s8 %v70
    %v72 = vlaneseq
    %v73 = vshrl.u32 %v72, 7
    %v74 = vsub.s32 %v71, %v73
    %v75 = vrot.slane %v49, %v74
    %v77 = vunpack.c.l.s4 1983009808
    %v78 = vunpack.c.0.s8 %v77
    %v79 = vlaneseq
    %v80 = vshrl.u32 %v79, 7
    %v81 = vsub.s32 %v78, %v80
    %v82 = vrot.slane %v68, %v81
    %v83 = vcombine.high %v75, %v75
    %vm84 = vcmask 31744
    %v86 = vsel %vm84, %v45, 0
    %v89 = vsel %vm84, %v46, 0
    %v92 = vsel %vm84, %v47, 0
    %v95 = vsel %vm84, %v48, 0
    %vm97 = vcmask 1041408
    %v99 = vsel %vm97, %v75, 0
    %v102 = vsel %vm97, %v83, 0
    %v105 = vsel %vm97, %v82, 0
    %107 = vmatprep.subr.bf16.mxu0 %v102
    %108 = vmatpush1.bf16.msra.mxu0 %v99
    %109 = vmatprep.subr.bf16.mxu0 0
    %110 = vmatpush1.bf16.msra.mxu0 0
    %111 = vmatprep.subr.bf16.mxu0 0
    %112 = vmatpush1.bf16.msra.mxu0 0
    %113 = vmatprep.subr.bf16.mxu0 0
    %114 = vmatpush1.bf16.msra.mxu0 0
    %115 = vmatprep.subr.bf16.mxu0 0
    %116 = vmatpush1.bf16.msra.mxu0 0
    %117 = vmatprep.subr.bf16.mxu0 0
    %118 = vmatpush1.bf16.msra.mxu0 0
    %119 = vmatprep.subr.bf16.mxu0 0
    %120 = vmatpush1.bf16.msra.mxu0 0
    %121 = vmatprep.subr.bf16.mxu0 0
    %122 = vmatpush1.bf16.msra.mxu0 0
    %123 = vmatprep.subr.bf16.mxu0 0
    %124 = vmatpush1.bf16.msra.mxu0 0
    %125 = vmatprep.subr.bf16.mxu0 0
    %126 = vmatpush1.bf16.msra.mxu0 0
    %127 = vmatprep.subr.bf16.mxu0 0
    %128 = vmatpush1.bf16.msra.mxu0 0
    %129 = vmatprep.subr.bf16.mxu0 0
    %130 = vmatpush1.bf16.msra.mxu0 0
    %131 = vmatprep.subr.bf16.mxu0 0
    %132 = vmatpush1.bf16.msra.mxu0 0
    %133 = vmatprep.subr.bf16.mxu0 0
    %134 = vmatpush1.bf16.msra.mxu0 0
    %135 = vmatprep.subr.bf16.mxu0 0
    %136 = vmatpush1.bf16.msra.mxu0 0
    %137 = vmatprep.subr.bf16.mxu0 0
    %138 = vmatpush1.bf16.msra.mxu0 0
    %139 = vmatprep.mubr.bf16.mxu0 0
    %140 = vmatmul.mubr.bf16.gmra.mrb[0].mxu0 %v86
    %v141 = vpop.f32.mrb[0].mxu0
    %v142 = vadd.f32 %v55, %v141
    %v143 = vpop.f32.mrb[0].mxu0
    %v144 = vadd.f32 %v59, %v143
    %v145 = vpop.f32.mrb[0].mxu0
    %v146 = vadd.f32 %v55, %v145
    %v147 = vpop.f32.mrb[0].mxu0
    %v148 = vadd.f32 %v59, %v147
    %149 = vmatprep.mubr.bf16.mxu0 0
    %150 = vmatmul.mubr.bf16.gmra.mrb[0].mxu0 %v89
    %v151 = vpop.f32.mrb[0].mxu0
    %v152 = vadd.f32 %v55, %v151
    %v153 = vpop.f32.mrb[0].mxu0
    %v154 = vadd.f32 %v59, %v153
    %v155 = vpop.f32.mrb[0].mxu0
    %v156 = vadd.f32 %v55, %v155
    %v157 = vpop.f32.mrb[0].mxu0
    %v158 = vadd.f32 %v59, %v157
    %159 = vmatprep.mubr.bf16.mxu0 0
    %160 = vmatmul.mubr.bf16.gmra.mrb[0].mxu0 %v92
    %v161 = vpop.f32.mrb[0].mxu0
    %v162 = vadd.f32 %v55, %v161
    %v163 = vpop.f32.mrb[0].mxu0
    %v164 = vadd.f32 %v59, %v163
    %v165 = vpop.f32.mrb[0].mxu0
    %v166 = vadd.f32 %v55, %v165
    %v167 = vpop.f32.mrb[0].mxu0
    %v168 = vadd.f32 %v59, %v167
    %169 = vmatprep.mubr.bf16.mxu0 0
    %170 = vmatmul.mubr.bf16.gmra.mrb[0].mxu0 %v95
    %v171 = vpop.f32.mrb[0].mxu0
    %v172 = vadd.f32 %v55, %v171
    %v173 = vpop.f32.mrb[0].mxu0
    %v174 = vadd.f32 %v59, %v173
    %v175 = vpop.f32.mrb[0].mxu0
    %v176 = vadd.f32 %v55, %v175
    %v177 = vpop.f32.mrb[0].mxu0
    %v178 = vadd.f32 %v59, %v177
    %179 = vdwg.mxu0
    %180 = vmatprep.subr.bf16.mxu0 0
    %181 = vmatpush1.bf16.msra.mxu0 %v105
    %182 = vmatprep.subr.bf16.mxu0 0
    %183 = vmatpush1.bf16.msra.mxu0 0
    %184 = vmatprep.subr.bf16.mxu0 0
    %185 = vmatpush1.bf16.msra.mxu0 0
    %186 = vmatprep.subr.bf16.mxu0 0
    %187 = vmatpush1.bf16.msra.mxu0 0
    %188 = vmatprep.subr.bf16.mxu0 0
    %189 = vmatpush1.bf16.msra.mxu0 0
    %190 = vmatprep.subr.bf16.mxu0 0
    %191 = vmatpush1.bf16.msra.mxu0 0
    %192 = vmatprep.subr.bf16.mxu0 0
    %193 = vmatpush1.bf16.msra.mxu0 0
    %194 = vmatprep.subr.bf16.mxu0 0
    %195 = vmatpush1.bf16.msra.mxu0 0
    %196 = vmatprep.subr.bf16.mxu0 0
    %197 = vmatpush1.bf16.msra.mxu0 0
    %198 = vmatprep.subr.bf16.mxu0 0
    %199 = vmatpush1.bf16.msra.mxu0 0
    %200 = vmatprep.subr.bf16.mxu0 0
    %201 = vmatpush1.bf16.msra.mxu0 0
    %202 = vmatprep.subr.bf16.mxu0 0
    %203 = vmatpush1.bf16.msra.mxu0 0
    %204 = vmatprep.subr.bf16.mxu0 0
    %205 = vmatpush1.bf16.msra.mxu0 0
    %206 = vmatprep.subr.bf16.mxu0 0
    %207 = vmatpush1.bf16.msra.mxu0 0
    %208 = vmatprep.subr.bf16.mxu0 0
    %209 = vmatpush1.bf16.msra.mxu0 0
    %210 = vmatprep.subr.bf16.mxu0 0
    %211 = vmatpush1.bf16.msra.mxu0 0
    %212 = vmatprep.mubr.bf16.mxu0 0
    %213 = vmatmul.mubr.bf16.gmra.mrb[0].mxu0 %v86
    %v214 = vpop.f32.mrb[0].mxu0
    %v215 = vadd.f32 %v63, %v214
    %v216 = vpop.f32.mrb[0].mxu0
    %v217 = vpop.f32.mrb[0].mxu0
    %v218 = vadd.f32 %v63, %v217
    %v219 = vpop.f32.mrb[0].mxu0
    %220 = vmatprep.mubr.bf16.mxu0 0
    %221 = vmatmul.mubr.bf16.gmra.mrb[0].mxu0 %v89
    %v222 = vpop.f32.mrb[0].mxu0
    %v223 = vadd.f32 %v63, %v222
    %v224 = vpop.f32.mrb[0].mxu0
    %v225 = vpop.f32.mrb[0].mxu0
    %v226 = vadd.f32 %v63, %v225
    %v227 = vpop.f32.mrb[0].mxu0
    %228 = vmatprep.mubr.bf16.mxu0 0
    %229 = vmatmul.mubr.bf16.gmra.mrb[0].mxu0 %v92
    %v230 = vpop.f32.mrb[0].mxu0
    %v231 = vadd.f32 %v63, %v230
    %v232 = vpop.f32.mrb[0].mxu0
    %v233 = vpop.f32.mrb[0].mxu0
    %v234 = vadd.f32 %v63, %v233
    %v235 = vpop.f32.mrb[0].mxu0
    %236 = vmatprep.mubr.bf16.mxu0 0
    %237 = vmatmul.mubr.bf16.gmra.mrb[0].mxu0 %v95
    %v238 = vpop.f32.mrb[0].mxu0
    %v239 = vadd.f32 %v63, %v238
    %v240 = vpop.f32.mrb[0].mxu0
    %v241 = vpop.f32.mrb[0].mxu0
    %v242 = vadd.f32 %v63, %v241
    %v243 = vpop.f32.mrb[0].mxu0
    %244 = vdwg.mxu0
    %245 = vst [vmem:[#allocation2] sm:$0xff] %v142
    %246 = vst [vmem:[#allocation2 + $0x8] sm:$0xff] %v144
    %247 = vst [vmem:[#allocation2 + $0x10] sm:$0xff] %v215
    %248 = vst [vmem:[#allocation2 + $0x18] sm:$0xff] %v146
    %249 = vst [vmem:[#allocation2 + $0x20] sm:$0xff] %v148
    %250 = vst [vmem:[#allocation2 + $0x28] sm:$0xff] %v218
    %251 = vst [vmem:[#allocation2 + $0x30] sm:$0xff] %v152
    %252 = vst [vmem:[#allocation2 + $0x38] sm:$0xff] %v154
    %253 = vst [vmem:[#allocation2 + $0x40] sm:$0xff] %v223
    %254 = vst [vmem:[#allocation2 + $0x48] sm:$0xff] %v156
    %255 = vst [vmem:[#allocation2 + $0x50] sm:$0xff] %v158
    %256 = vst [vmem:[#allocation2 + $0x58] sm:$0xff] %v226
    %257 = vst [vmem:[#allocation2 + $0x60] sm:$0xff] %v162
    %258 = vst [vmem:[#allocation2 + $0x68] sm:$0xff] %v164
    %259 = vst [vmem:[#allocation2 + $0x70] sm:$0xff] %v231
    %260 = vst [vmem:[#allocation2 + $0x78] sm:$0xff] %v166
    %261 = vst [vmem:[#allocation2 + $0x80] sm:$0xff] %v168
    %262 = vst [vmem:[#allocation2 + $0x88] sm:$0xff] %v234
    %263 = vst [vmem:[#allocation2 + $0x90] sm:$0xff] %v172
    %264 = vst [vmem:[#allocation2 + $0x98] sm:$0xff] %v174
    %265 = vst [vmem:[#allocation2 + $0xa0] sm:$0xff] %v239
    %266 = vst [vmem:[#allocation2 + $0xa8] sm:$0xff] %v176
    %267 = vst [vmem:[#allocation2 + $0xb0] sm:$0xff] %v178
    %268 = vst [vmem:[#allocation2 + $0xb8] sm:$0xff] %v242
    %v269 = vld [vmem:[#allocation3] sm:$0xff]
    %v270 = vld [vmem:[#allocation3 + $0x8] sm:$0xf]
    %v271 = vld [vmem:[#allocation3 + $0xc] sm:$0xff]
    %v272 = vld [vmem:[#allocation3 + $0x14] sm:$0xf]
    %v273 = vld [vmem:[#allocation3 + $0x18] sm:$0xff]
    %v274 = vld [vmem:[#allocation3 + $0x20] sm:$0xf]
    %v275 = vld [vmem:[#allocation3 + $0x24] sm:$0xff]
    %v276 = vld [vmem:[#allocation3 + $0x2c] sm:$0xf]
    %v277 = vld [vmem:[#allocation3 + $0x30] sm:$0xff]
    %v278 = vld [vmem:[#allocation3 + $0x38] sm:$0xf]
    %v279 = vld [vmem:[#allocation3 + $0x3c] sm:$0xff]
    %v280 = vld [vmem:[#allocation3 + $0x44] sm:$0xf]
    %v281 = vld [vmem:[#allocation3 + $0x48] sm:$0xff]
    %v282 = vld [vmem:[#allocation3 + $0x50] sm:$0xf]
    %v283 = vld [vmem:[#allocation3 + $0x54] sm:$0xff]
    %v284 = vld [vmem:[#allocation3 + $0x5c] sm:$0xf]
    %v285 = vld [vmem:[#allocation3 + $0x60] sm:$0xff]
    %v286 = vld [vmem:[#allocation3 + $0x68] sm:$0xf]
    %v287 = vld [vmem:[#allocation3 + $0x6c] sm:$0xff]
    %v288 = vld [vmem:[#allocation3 + $0x74] sm:$0xf]
    %v289 = vld [vmem:[#allocation3 + $0x78] sm:$0xff]
    %v290 = vld [vmem:[#allocation3 + $0x80] sm:$0xf]
    %v291 = vld [vmem:[#allocation3 + $0x84] sm:$0xff]
    %v292 = vld [vmem:[#allocation3 + $0x8c] sm:$0xf]
    %v293 = vld [vmem:[#allocation3 + $0x90] sm:$0xff]
    %v294 = vld [vmem:[#allocation3 + $0x98] sm:$0xf]
    %v295 = vld [vmem:[#allocation3 + $0x9c] sm:$0xff]
    %v296 = vld [vmem:[#allocation3 + $0xa4] sm:$0xf]
    %v297 = vld [vmem:[#allocation3 + $0xa8] sm:$0xff]
    %v298 = vld [vmem:[#allocation3 + $0xb0] sm:$0xf]
    %v299 = vld [vmem:[#allocation3 + $0xb4] sm:$0xff]
    %v300 = vld [vmem:[#allocation3 + $0xbc] sm:$0xf]
    %v301 = vld [vmem:[%s4] sm:$0x1]
    %v302 = vld [vmem:[#allocation2] sm:$0xff]
    %v303 = vld [vmem:[#allocation2 + $0x8] sm:$0xff]
    %v304 = vld [vmem:[#allocation2 + $0x10] sm:$0xff]
    %v337 = vunpack.c.l.b16 %v269
    %v338 = vunpack.c.h.b16 %v269
    %v339 = vunpack.c.l.b16 %v270
    %v340 = vunpack.c.l.b16 %v271
    %v341 = vunpack.c.h.b16 %v271
    %v342 = vunpack.c.l.b16 %v272
    %v343 = vunpack.c.l.b16 %v273
    %v344 = vunpack.c.h.b16 %v273
    %v345 = vunpack.c.l.b16 %v274
    %v346 = vunpack.c.l.b16 %v275
    %v347 = vunpack.c.h.b16 %v275
    %v348 = vunpack.c.l.b16 %v276
    %v349 = vunpack.c.l.b16 %v277
    %v350 = vunpack.c.h.b16 %v277
    %v351 = vunpack.c.l.b16 %v278
    %v352 = vunpack.c.l.b16 %v279
    %v353 = vunpack.c.h.b16 %v279
    %v354 = vunpack.c.l.b16 %v280
    %v355 = vunpack.c.l.b16 %v281
    %v356 = vunpack.c.h.b16 %v281
    %v357 = vunpack.c.l.b16 %v282
    %v358 = vunpack.c.l.b16 %v283
    %v359 = vunpack.c.h.b16 %v283
    %v360 = vunpack.c.l.b16 %v284
    %v361 = vunpack.c.l.b16 %v285
    %v362 = vunpack.c.h.b16 %v285
    %v363 = vunpack.c.l.b16 %v286
    %v364 = vunpack.c.l.b16 %v287
    %v365 = vunpack.c.h.b16 %v287
    %v366 = vunpack.c.l.b16 %v288
    %v367 = vunpack.c.l.b16 %v289
    %v368 = vunpack.c.h.b16 %v289
    %v369 = vunpack.c.l.b16 %v290
    %v370 = vunpack.c.l.b16 %v291
    %v371 = vunpack.c.h.b16 %v291
    %v372 = vunpack.c.l.b16 %v292
    %v373 = vunpack.c.l.b16 %v293
    %v374 = vunpack.c.h.b16 %v293
    %v375 = vunpack.c.l.b16 %v294
    %v376 = vunpack.c.l.b16 %v295
    %v377 = vunpack.c.h.b16 %v295
    %v378 = vunpack.c.l.b16 %v296
    %v379 = vunpack.c.l.b16 %v297
    %v380 = vunpack.c.h.b16 %v297
    %v381 = vunpack.c.l.b16 %v298
    %v382 = vunpack.c.l.b16 %v299
    %v383 = vunpack.c.h.b16 %v299
    %v384 = vunpack.c.l.b16 %v300
    %v385 = vpack.c.b16 %v340, %v337
    %v386 = vpack.c.b16 %v341, %v338
    %v387 = vpack.c.b16 %v342, %v339
    %v388 = vpack.c.b16 %v346, %v343
    %v389 = vpack.c.b16 %v347, %v344
    %v390 = vpack.c.b16 %v348, %v345
    %v391 = vpack.c.b16 %v352, %v349
    %v392 = vpack.c.b16 %v353, %v350
    %v393 = vpack.c.b16 %v354, %v351
    %v394 = vpack.c.b16 %v358, %v355
    %v395 = vpack.c.b16 %v359, %v356
    %v396 = vpack.c.b16 %v360, %v357
    %v397 = vpack.c.b16 %v364, %v361
    %v398 = vpack.c.b16 %v365, %v362
    %v399 = vpack.c.b16 %v366, %v363
    %v400 = vpack.c.b16 %v370, %v367
    %v401 = vpack.c.b16 %v371, %v368
    %v402 = vpack.c.b16 %v372, %v369
    %v403 = vpack.c.b16 %v376, %v373
    %v404 = vpack.c.b16 %v377, %v374
    %v405 = vpack.c.b16 %v378, %v375
    %v406 = vpack.c.b16 %v382, %v379
    %v407 = vpack.c.b16 %v383, %v380
    %v408 = vpack.c.b16 %v384, %v381
    %433 = vmatprep.subr.bf16.mxu0 %v386
    %434 = vmatpush1.bf16.msra.mxu0 %v385
    %435 = vmatprep.subr.bf16.mxu0 %v389
    %436 = vmatpush1.bf16.msra.mxu0 %v388
    %437 = vmatprep.subr.bf16.mxu0 %v392
    %438 = vmatpush1.bf16.msra.mxu0 %v391
    %439 = vmatprep.subr.bf16.mxu0 %v395
    %440 = vmatpush1.bf16.msra.mxu0 %v394
    %441 = vmatprep.subr.bf16.mxu0 %v398
    %442 = vmatpush1.bf16.msra.mxu0 %v397
    %443 = vmatprep.subr.bf16.mxu0 %v401
    %444 = vmatpush1.bf16.msra.mxu0 %v400
    %445 = vmatprep.subr.bf16.mxu0 %v404
    %446 = vmatpush1.bf16.msra.mxu0 %v403
    %447 = vmatprep.subr.bf16.mxu0 %v407
    %448 = vmatpush1.bf16.msra.mxu0 %v406
    %449 = vmatprep.subr.bf16.mxu0 0
    %450 = vmatpush1.bf16.msra.mxu0 0
    %451 = vmatprep.subr.bf16.mxu0 0
    %452 = vmatpush1.bf16.msra.mxu0 0
    %453 = vmatprep.subr.bf16.mxu0 0
    %454 = vmatpush1.bf16.msra.mxu0 0
    %455 = vmatprep.subr.bf16.mxu0 0
    %456 = vmatpush1.bf16.msra.mxu0 0
    %457 = vmatprep.subr.bf16.mxu0 0
    %458 = vmatpush1.bf16.msra.mxu0 0
    %459 = vmatprep.subr.bf16.mxu0 0
    %460 = vmatpush1.bf16.msra.mxu0 0
    %461 = vmatprep.subr.bf16.mxu0 0
    %462 = vmatpush1.bf16.msra.mxu0 0
    %463 = vmatprep.subr.bf16.mxu0 0
    %464 = vmatpush1.bf16.msra.mxu0 0
    %465 = vmatprep.mubr.bf16.mxu0 0
    %466 = vmatmul.mubr.bf16.gmra.mrb[0].mxu0 0
    %v467 = vpop.f32.mrb[0].mxu0
    %v468 = vadd.f32 0.0, %v467
    %v469 = vpop.f32.mrb[0].mxu0
    %v470 = vadd.f32 0.0, %v469
    %v471 = vpop.f32.mrb[0].mxu0
    %v472 = vpop.f32.mrb[0].mxu0
    %473 = vdwg.mxu0
    %474 = vmatprep.subr.bf16.mxu0 0
    %475 = vmatpush1.bf16.msra.mxu0 %v387
    %476 = vmatprep.subr.bf16.mxu0 0
    %477 = vmatpush1.bf16.msra.mxu0 %v390
    %478 = vmatprep.subr.bf16.mxu0 0
    %479 = vmatpush1.bf16.msra.mxu0 %v393
    %480 = vmatprep.subr.bf16.mxu0 0
    %481 = vmatpush1.bf16.msra.mxu0 %v396
    %482 = vmatprep.subr.bf16.mxu0 0
    %483 = vmatpush1.bf16.msra.mxu0 %v399
    %484 = vmatprep.subr.bf16.mxu0 0
    %485 = vmatpush1.bf16.msra.mxu0 %v402
    %486 = vmatprep.subr.bf16.mxu0 0
    %487 = vmatpush1.bf16.msra.mxu0 %v405
    %488 = vmatprep.subr.bf16.mxu0 0
    %489 = vmatpush1.bf16.msra.mxu0 %v408
    %490 = vmatprep.subr.bf16.mxu0 0
    %491 = vmatpush1.bf16.msra.mxu0 0
    %492 = vmatprep.subr.bf16.mxu0 0
    %493 = vmatpush1.bf16.msra.mxu0 0
    %494 = vmatprep.subr.bf16.mxu0 0
    %495 = vmatpush1.bf16.msra.mxu0 0
    %496 = vmatprep.subr.bf16.mxu0 0
    %497 = vmatpush1.bf16.msra.mxu0 0
    %498 = vmatprep.subr.bf16.mxu0 0
    %499 = vmatpush1.bf16.msra.mxu0 0
    %500 = vmatprep.subr.bf16.mxu0 0
    %501 = vmatpush1.bf16.msra.mxu0 0
    %502 = vmatprep.subr.bf16.mxu0 0
    %503 = vmatpush1.bf16.msra.mxu0 0
    %504 = vmatprep.subr.bf16.mxu0 0
    %505 = vmatpush1.bf16.msra.mxu0 0
    %506 = vmatprep.mubr.bf16.mxu0 0
    %507 = vmatmul.mubr.bf16.gmra.mrb[0].mxu0 0
    %v508 = vpop.f32.mrb[0].mxu0
    %v509 = vadd.f32 0.0, %v508
    %v510 = vpop.f32.mrb[0].mxu0
    %v511 = vpop.f32.mrb[0].mxu0
    %v512 = vpop.f32.mrb[0].mxu0
    %513 = vdwg.mxu0
    %v514 = vadd.f32 %v302, %v468
    %v515 = vadd.f32 %v303, %v470
    %v516 = vxor.u32 %v514, 2147483648
    %v517 = vxor.u32 %v515, 2147483648
    %v518 = vmul.f32 %v516, 1.442695
    %v519 = vpow.pop %v518
    %v520 = vmul.f32 %v517, 1.442695
    %v521 = vpow.pop %v520
    %v522 = vadd.f32 %v519, 1.0
    %v523 = vadd.f32 %v521, 1.0
    %v524 = vrcp.pop %v522
    %v525 = vmul.f32 1.0, %v524
    %v526 = vrcp.pop %v523
    %v527 = vmul.f32 1.0, %v526
    %v529 = vlaneseq
    %v530 = vshrl.u32 %v529, 7
    %v531 = vsub.s32 0, %v530
    %v532 = vrot.slane %v301, %v531
    %v534 = vadd.f32 %v509, %v532
    %v535 = vmul.f32 %v525, %v534
    %v536 = vadd.f32 %v304, %v535
    %v537 = vtanh.pop %v536
    %v538 = vsub.f32 1.0, %v527
    %v539 = vmul.f32 %v538, %v537
    %v540 = vmul.f32 %v527, 0.0
    %v541 = vadd.f32 %v539, %v540
    %542 = vst [vmem:[%s5] sm:$0xff] %v541
    %s543 = scalar_lea.vmem [#allocation2], 24
    %v544 = vld [vmem:[%s543] sm:$0xff]
    %v545 = vld [vmem:[%s543 + $0x8] sm:$0xff]
    %v546 = vld [vmem:[%s543 + $0x10] sm:$0xff]
    %v547 = vpack.c.bf16 %v541, %v541
    %548 = vmatprep.subr.bf16.mxu0 %v386
    %549 = vmatpush1.bf16.msra.mxu0 %v385
    %550 = vmatprep.subr.bf16.mxu0 %v389
    %551 = vmatpush1.bf16.msra.mxu0 %v388
    %552 = vmatprep.subr.bf16.mxu0 %v392
    %553 = vmatpush1.bf16.msra.mxu0 %v391
    %554 = vmatprep.subr.bf16.mxu0 %v395
    %555 = vmatpush1.bf16.msra.mxu0 %v394
    %556 = vmatprep.subr.bf16.mxu0 %v398
    %557 = vmatpush1.bf16.msra.mxu0 %v397
    %558 = vmatprep.subr.bf16.mxu0 %v401
    %559 = vmatpush1.bf16.msra.mxu0 %v400
    %560 = vmatprep.subr.bf16.mxu0 %v404
    %561 = vmatpush1.bf16.msra.mxu0 %v403
    %562 = vmatprep.subr.bf16.mxu0 %v407
    %563 = vmatpush1.bf16.msra.mxu0 %v406
    %564 = vmatprep.subr.bf16.mxu0 0
    %565 = vmatpush1.bf16.msra.mxu0 0
    %566 = vmatprep.subr.bf16.mxu0 0
    %567 = vmatpush1.bf16.msra.mxu0 0
    %568 = vmatprep.subr.bf16.mxu0 0
    %569 = vmatpush1.bf16.msra.mxu0 0
    %570 = vmatprep.subr.bf16.mxu0 0
    %571 = vmatpush1.bf16.msra.mxu0 0
    %572 = vmatprep.subr.bf16.mxu0 0
    %573 = vmatpush1.bf16.msra.mxu0 0
    %574 = vmatprep.subr.bf16.mxu0 0
    %575 = vmatpush1.bf16.msra.mxu0 0
    %576 = vmatprep.subr.bf16.mxu0 0
    %577 = vmatpush1.bf16.msra.mxu0 0
    %578 = vmatprep.subr.bf16.mxu0 0
    %579 = vmatpush1.bf16.msra.mxu0 0
    %580 = vmatprep.mubr.bf16.mxu0 0
    %581 = vmatmul.mubr.bf16.gmra.mrb[0].mxu0 %v547
    %v582 = vpop.f32.mrb[0].mxu0
    %v583 = vadd.f32 0.0, %v582
    %v584 = vpop.f32.mrb[0].mxu0
    %v585 = vadd.f32 0.0, %v584
    %v586 = vpop.f32.mrb[0].mxu0
    %v587 = vpop.f32.mrb[0].mxu0
    %588 = vdwg.mxu0
    %589 = vmatprep.subr.bf16.mxu0 0
    %590 = vmatpush1.bf16.msra.mxu0 %v387
    %591 = vmatprep.subr.bf16.mxu0 0
    %592 = vmatpush1.bf16.msra.mxu0 %v390
    %593 = vmatprep.subr.bf16.mxu0 0
    %594 = vmatpush1.bf16.msra.mxu0 %v393
    %595 = vmatprep.subr.bf16.mxu0 0
    %596 = vmatpush1.bf16.msra.mxu0 %v396
    %597 = vmatprep.subr.bf16.mxu0 0
    %598 = vmatpush1.bf16.msra.mxu0 %v399
    %599 = vmatprep.subr.bf16.mxu0 0
    %600 = vmatpush1.bf16.msra.mxu0 %v402
    %601 = vmatprep.subr.bf16.mxu0 0
    %602 = vmatpush1.bf16.msra.mxu0 %v405
    %603 = vmatprep.subr.bf16.mxu0 0
    %604 = vmatpush1.bf16.msra.mxu0 %v408
    %605 = vmatprep.subr.bf16.mxu0 0
    %606 = vmatpush1.bf16.msra.mxu0 0
    %607 = vmatprep.subr.bf16.mxu0 0
    %608 = vmatpush1.bf16.msra.mxu0 0
    %609 = vmatprep.subr.bf16.mxu0 0
    %610 = vmatpush1.bf16.msra.mxu0 0
    %611 = vmatprep.subr.bf16.mxu0 0
    %612 = vmatpush1.bf16.msra.mxu0 0
    %613 = vmatprep.subr.bf16.mxu0 0
    %614 = vmatpush1.bf16.msra.mxu0 0
    %615 = vmatprep.subr.bf16.mxu0 0
    %616 = vmatpush1.bf16.msra.mxu0 0
    %617 = vmatprep.subr.bf16.mxu0 0
    %618 = vmatpush1.bf16.msra.mxu0 0
    %619 = vmatprep.subr.bf16.mxu0 0
    %620 = vmatpush1.bf16.msra.mxu0 0
    %621 = vmatprep.mubr.bf16.mxu0 0
    %622 = vmatmul.mubr.bf16.gmra.mrb[0].mxu0 %v547
    %v623 = vpop.f32.mrb[0].mxu0
    %v624 = vadd.f32 0.0, %v623
    %v625 = vpop.f32.mrb[0].mxu0
    %v626 = vpop.f32.mrb[0].mxu0
    %v627 = vpop.f32.mrb[0].mxu0
    %628 = vdwg.mxu0
    %v629 = vadd.f32 %v544, %v583
    %v630 = vadd.f32 %v545, %v585
    %v631 = vxor.u32 %v629, 2147483648
    %v632 = vxor.u32 %v630, 2147483648
    %v633 = vmul.f32 %v631, 1.442695
    %v634 = vpow.pop %v633
    %v635 = vmul.f32 %v632, 1.442695
    %v636 = vpow.pop %v635
    %v637 = vadd.f32 %v634, 1.0
    %v638 = vadd.f32 %v636, 1.0
    %v639 = vrcp.pop %v637
    %v640 = vmul.f32 1.0, %v639
    %v641 = vrcp.pop %v638
    %v642 = vmul.f32 1.0, %v641
    %v643 = vadd.f32 %v624, %v532
    %v644 = vmul.f32 %v640, %v643
    %v645 = vadd.f32 %v546, %v644
    %v646 = vtanh.pop %v645
    %v647 = vsub.f32 1.0, %v642
    %v648 = vmul.f32 %v647, %v646
    %v649 = vmul.f32 %v642, %v541
    %v650 = vadd.f32 %v648, %v649
    %s651 = scalar_lea.vmem %s5, 8
    %652 = vst [vmem:[%s651] sm:$0xff] %v650
    %s653 = scalar_lea.vmem [#allocation2], 48
    %v654 = vld [vmem:[%s653] sm:$0xff]
    %v655 = vld [vmem:[%s653 + $0x8] sm:$0xff]
    %v656 = vld [vmem:[%s653 + $0x10] sm:$0xff]
    %v657 = vpack.c.bf16 %v650, %v650
    %658 = vmatprep.subr.bf16.mxu0 %v386
    %659 = vmatpush1.bf16.msra.mxu0 %v385
    %660 = vmatprep.subr.bf16.mxu0 %v389
    %661 = vmatpush1.bf16.msra.mxu0 %v388
    %662 = vmatprep.subr.bf16.mxu0 %v392
    %663 = vmatpush1.bf16.msra.mxu0 %v391
    %664 = vmatprep.subr.bf16.mxu0 %v395
    %665 = vmatpush1.bf16.msra.mxu0 %v394
    %666 = vmatprep.subr.bf16.mxu0 %v398
    %667 = vmatpush1.bf16.msra.mxu0 %v397
    %668 = vmatprep.subr.bf16.mxu0 %v401
    %669 = vmatpush1.bf16.msra.mxu0 %v400
    %670 = vmatprep.subr.bf16.mxu0 %v404
    %671 = vmatpush1.bf16.msra.mxu0 %v403
    %672 = vmatprep.subr.bf16.mxu0 %v407
    %673 = vmatpush1.bf16.msra.mxu0 %v406
    %674 = vmatprep.subr.bf16.mxu0 0
    %675 = vmatpush1.bf16.msra.mxu0 0
    %676 = vmatprep.subr.bf16.mxu0 0
    %677 = vmatpush1.bf16.msra.mxu0 0
    %678 = vmatprep.subr.bf16.mxu0 0
    %679 = vmatpush1.bf16.msra.mxu0 0
    %680 = vmatprep.subr.bf16.mxu0 0
    %681 = vmatpush1.bf16.msra.mxu0 0
    %682 = vmatprep.subr.bf16.mxu0 0
    %683 = vmatpush1.bf16.msra.mxu0 0
    %684 = vmatprep.subr.bf16.mxu0 0
    %685 = vmatpush1.bf16.msra.mxu0 0
    %686 = vmatprep.subr.bf16.mxu0 0
    %687 = vmatpush1.bf16.msra.mxu0 0
    %688 = vmatprep.subr.bf16.mxu0 0
    %689 = vmatpush1.bf16.msra.mxu0 0
    %690 = vmatprep.mubr.bf16.mxu0 0
    %691 = vmatmul.mubr.bf16.gmra.mrb[0].mxu0 %v657
    %v692 = vpop.f32.mrb[0].mxu0
    %v693 = vadd.f32 0.0, %v692
    %v694 = vpop.f32.mrb[0].mxu0
    %v695 = vadd.f32 0.0, %v694
    %v696 = vpop.f32.mrb[0].mxu0
    %v697 = vpop.f32.mrb[0].mxu0
    %698 = vdwg.mxu0
    %699 = vmatprep.subr.bf16.mxu0 0
    %700 = vmatpush1.bf16.msra.mxu0 %v387
    %701 = vmatprep.subr.bf16.mxu0 0
    %702 = vmatpush1.bf16.msra.mxu0 %v390
    %703 = vmatprep.subr.bf16.mxu0 0
    %704 = vmatpush1.bf16.msra.mxu0 %v393
    %705 = vmatprep.subr.bf16.mxu0 0
    %706 = vmatpush1.bf16.msra.mxu0 %v396
    %707 = vmatprep.subr.bf16.mxu0 0
    %708 = vmatpush1.bf16.msra.mxu0 %v399
    %709 = vmatprep.subr.bf16.mxu0 0
    %710 = vmatpush1.bf16.msra.mxu0 %v402
    %711 = vmatprep.subr.bf16.mxu0 0
    %712 = vmatpush1.bf16.msra.mxu0 %v405
    %713 = vmatprep.subr.bf16.mxu0 0
    %714 = vmatpush1.bf16.msra.mxu0 %v408
    %715 = vmatprep.subr.bf16.mxu0 0
    %716 = vmatpush1.bf16.msra.mxu0 0
    %717 = vmatprep.subr.bf16.mxu0 0
    %718 = vmatpush1.bf16.msra.mxu0 0
    %719 = vmatprep.subr.bf16.mxu0 0
    %720 = vmatpush1.bf16.msra.mxu0 0
    %721 = vmatprep.subr.bf16.mxu0 0
    %722 = vmatpush1.bf16.msra.mxu0 0
    %723 = vmatprep.subr.bf16.mxu0 0
    %724 = vmatpush1.bf16.msra.mxu0 0
    %725 = vmatprep.subr.bf16.mxu0 0
    %726 = vmatpush1.bf16.msra.mxu0 0
    %727 = vmatprep.subr.bf16.mxu0 0
    %728 = vmatpush1.bf16.msra.mxu0 0
    %729 = vmatprep.subr.bf16.mxu0 0
    %730 = vmatpush1.bf16.msra.mxu0 0
    %731 = vmatprep.mubr.bf16.mxu0 0
    %732 = vmatmul.mubr.bf16.gmra.mrb[0].mxu0 %v657
    %v733 = vpop.f32.mrb[0].mxu0
    %v734 = vadd.f32 0.0, %v733
    %v735 = vpop.f32.mrb[0].mxu0
    %v736 = vpop.f32.mrb[0].mxu0
    %v737 = vpop.f32.mrb[0].mxu0
    %738 = vdwg.mxu0
    %v739 = vadd.f32 %v654, %v693
    %v740 = vadd.f32 %v655, %v695
    %v741 = vxor.u32 %v739, 2147483648
    %v742 = vxor.u32 %v740, 2147483648
    %v743 = vmul.f32 %v741, 1.442695
    %v744 = vpow.pop %v743
    %v745 = vmul.f32 %v742, 1.442695
    %v746 = vpow.pop %v745
    %v747 = vadd.f32 %v744, 1.0
    %v748 = vadd.f32 %v746, 1.0
    %v749 = vrcp.pop %v747
    %v750 = vmul.f32 1.0, %v749
    %v751 = vrcp.pop %v748
    %v752 = vmul.f32 1.0, %v751
    %v753 = vadd.f32 %v734, %v532
    %v754 = vmul.f32 %v750, %v753
    %v755 = vadd.f32 %v656, %v754
    %v756 = vtanh.pop %v755
    %v757 = vsub.f32 1.0, %v752
    %v758 = vmul.f32 %v757, %v756
    %v759 = vmul.f32 %v752, %v650
    %v760 = vadd.f32 %v758, %v759
    %s761 = scalar_lea.vmem %s5, 16
    %762 = vst [vmem:[%s761] sm:$0xff] %v760
    %s763 = scalar_lea.vmem [#allocation2], 72
    %v764 = vld [vmem:[%s763] sm:$0xff]
    %v765 = vld [vmem:[%s763 + $0x8] sm:$0xff]
    %v766 = vld [vmem:[%s763 + $0x10] sm:$0xff]
    %v767 = vpack.c.bf16 %v760, %v760
    %768 = vmatprep.subr.bf16.mxu0 %v386
    %769 = vmatpush1.bf16.msra.mxu0 %v385
    %770 = vmatprep.subr.bf16.mxu0 %v389
    %771 = vmatpush1.bf16.msra.mxu0 %v388
    %772 = vmatprep.subr.bf16.mxu0 %v392
    %773 = vmatpush1.bf16.msra.mxu0 %v391
    %774 = vmatprep.subr.bf16.mxu0 %v395
    %775 = vmatpush1.bf16.msra.mxu0 %v394
    %776 = vmatprep.subr.bf16.mxu0 %v398
    %777 = vmatpush1.bf16.msra.mxu0 %v397
    %778 = vmatprep.subr.bf16.mxu0 %v401
    %779 = vmatpush1.bf16.msra.mxu0 %v400
    %780 = vmatprep.subr.bf16.mxu0 %v404
    %781 = vmatpush1.bf16.msra.mxu0 %v403
    %782 = vmatprep.subr.bf16.mxu0 %v407
    %783 = vmatpush1.bf16.msra.mxu0 %v406
    %784 = vmatprep.subr.bf16.mxu0 0
    %785 = vmatpush1.bf16.msra.mxu0 0
    %786 = vmatprep.subr.bf16.mxu0 0
    %787 = vmatpush1.bf16.msra.mxu0 0
    %788 = vmatprep.subr.bf16.mxu0 0
    %789 = vmatpush1.bf16.msra.mxu0 0
    %790 = vmatprep.subr.bf16.mxu0 0
    %791 = vmatpush1.bf16.msra.mxu0 0
    %792 = vmatprep.subr.bf16.mxu0 0
    %793 = vmatpush1.bf16.msra.mxu0 0
    %794 = vmatprep.subr.bf16.mxu0 0
    %795 = vmatpush1.bf16.msra.mxu0 0
    %796 = vmatprep.subr.bf16.mxu0 0
    %797 = vmatpush1.bf16.msra.mxu0 0
    %798 = vmatprep.subr.bf16.mxu0 0
    %799 = vmatpush1.bf16.msra.mxu0 0
    %800 = vmatprep.mubr.bf16.mxu0 0
    %801 = vmatmul.mubr.bf16.gmra.mrb[0].mxu0 %v767
    %v802 = vpop.f32.mrb[0].mxu0
    %v803 = vadd.f32 0.0, %v802
    %v804 = vpop.f32.mrb[0].mxu0
    %v805 = vadd.f32 0.0, %v804
    %v806 = vpop.f32.mrb[0].mxu0
    %v807 = vpop.f32.mrb[0].mxu0
    %808 = vdwg.mxu0
    %809 = vmatprep.subr.bf16.mxu0 0
    %810 = vmatpush1.bf16.msra.mxu0 %v387
    %811 = vmatprep.subr.bf16.mxu0 0
    %812 = vmatpush1.bf16.msra.mxu0 %v390
    %813 = vmatprep.subr.bf16.mxu0 0
    %814 = vmatpush1.bf16.msra.mxu0 %v393
    %815 = vmatprep.subr.bf16.mxu0 0
    %816 = vmatpush1.bf16.msra.mxu0 %v396
    %817 = vmatprep.subr.bf16.mxu0 0
    %818 = vmatpush1.bf16.msra.mxu0 %v399
    %819 = vmatprep.subr.bf16.mxu0 0
    %820 = vmatpush1.bf16.msra.mxu0 %v402
    %821 = vmatprep.subr.bf16.mxu0 0
    %822 = vmatpush1.bf16.msra.mxu0 %v405
    %823 = vmatprep.subr.bf16.mxu0 0
    %824 = vmatpush1.bf16.msra.mxu0 %v408
    %825 = vmatprep.subr.bf16.mxu0 0
    %826 = vmatpush1.bf16.msra.mxu0 0
    %827 = vmatprep.subr.bf16.mxu0 0
    %828 = vmatpush1.bf16.msra.mxu0 0
    %829 = vmatprep.subr.bf16.mxu0 0
    %830 = vmatpush1.bf16.msra.mxu0 0
    %831 = vmatprep.subr.bf16.mxu0 0
    %832 = vmatpush1.bf16.msra.mxu0 0
    %833 = vmatprep.subr.bf16.mxu0 0
    %834 = vmatpush1.bf16.msra.mxu0 0
    %835 = vmatprep.subr.bf16.mxu0 0
    %836 = vmatpush1.bf16.msra.mxu0 0
    %837 = vmatprep.subr.bf16.mxu0 0
    %838 = vmatpush1.bf16.msra.mxu0 0
    %839 = vmatprep.subr.bf16.mxu0 0
    %840 = vmatpush1.bf16.msra.mxu0 0
    %841 = vmatprep.mubr.bf16.mxu0 0
    %842 = vmatmul.mubr.bf16.gmra.mrb[0].mxu0 %v767
    %v843 = vpop.f32.mrb[0].mxu0
    %v844 = vadd.f32 0.0, %v843
    %v845 = vpop.f32.mrb[0].mxu0
    %v846 = vpop.f32.mrb[0].mxu0
    %v847 = vpop.f32.mrb[0].mxu0
    %848 = vdwg.mxu0
    %v849 = vadd.f32 %v764, %v803
    %v850 = vadd.f32 %v765, %v805
    %v851 = vxor.u32 %v849, 2147483648
    %v852 = vxor.u32 %v850, 2147483648
    %v853 = vmul.f32 %v851, 1.442695
    %v854 = vpow.pop %v853
    %v855 = vmul.f32 %v852, 1.442695
    %v856 = vpow.pop %v855
    %v857 = vadd.f32 %v854, 1.0
    %v858 = vadd.f32 %v856, 1.0
    %v859 = vrcp.pop %v857
    %v860 = vmul.f32 1.0, %v859
    %v861 = vrcp.pop %v858
    %v862 = vmul.f32 1.0, %v861
    %v863 = vadd.f32 %v844, %v532
    %v864 = vmul.f32 %v860, %v863
    %v865 = vadd.f32 %v766, %v864
    %v866 = vtanh.pop %v865
    %v867 = vsub.f32 1.0, %v862
    %v868 = vmul.f32 %v867, %v866
    %v869 = vmul.f32 %v862, %v760
    %v870 = vadd.f32 %v868, %v869
    %s871 = scalar_lea.vmem %s5, 24
    %872 = vst [vmem:[%s871] sm:$0xff] %v870
    %s873 = scalar_lea.vmem [#allocation2], 96
    %v874 = vld [vmem:[%s873] sm:$0xff]
    %v875 = vld [vmem:[%s873 + $0x8] sm:$0xff]
    %v876 = vld [vmem:[%s873 + $0x10] sm:$0xff]
    %v877 = vpack.c.bf16 %v870, %v870
    %878 = vmatprep.subr.bf16.mxu0 %v386
    %879 = vmatpush1.bf16.msra.mxu0 %v385
    %880 = vmatprep.subr.bf16.mxu0 %v389
    %881 = vmatpush1.bf16.msra.mxu0 %v388
    %882 = vmatprep.subr.bf16.mxu0 %v392
    %883 = vmatpush1.bf16.msra.mxu0 %v391
    %884 = vmatprep.subr.bf16.mxu0 %v395
    %885 = vmatpush1.bf16.msra.mxu0 %v394
    %886 = vmatprep.subr.bf16.mxu0 %v398
    %887 = vmatpush1.bf16.msra.mxu0 %v397
    %888 = vmatprep.subr.bf16.mxu0 %v401
    %889 = vmatpush1.bf16.msra.mxu0 %v400
    %890 = vmatprep.subr.bf16.mxu0 %v404
    %891 = vmatpush1.bf16.msra.mxu0 %v403
    %892 = vmatprep.subr.bf16.mxu0 %v407
    %893 = vmatpush1.bf16.msra.mxu0 %v406
    %894 = vmatprep.subr.bf16.mxu0 0
    %895 = vmatpush1.bf16.msra.mxu0 0
    %896 = vmatprep.subr.bf16.mxu0 0
    %897 = vmatpush1.bf16.msra.mxu0 0
    %898 = vmatprep.subr.bf16.mxu0 0
    %899 = vmatpush1.bf16.msra.mxu0 0
    %900 = vmatprep.subr.bf16.mxu0 0
    %901 = vmatpush1.bf16.msra.mxu0 0
    %902 = vmatprep.subr.bf16.mxu0 0
    %903 = vmatpush1.bf16.msra.mxu0 0
    %904 = vmatprep.subr.bf16.mxu0 0
    %905 = vmatpush1.bf16.msra.mxu0 0
    %906 = vmatprep.subr.bf16.mxu0 0
    %907 = vmatpush1.bf16.msra.mxu0 0
    %908 = vmatprep.subr.bf16.mxu0 0
    %909 = vmatpush1.bf16.msra.mxu0 0
    %910 = vmatprep.mubr.bf16.mxu0 0
    %911 = vmatmul.mubr.bf16.gmra.mrb[0].mxu0 %v877
    %v912 = vpop.f32.mrb[0].mxu0
    %v913 = vadd.f32 0.0, %v912
    %v914 = vpop.f32.mrb[0].mxu0
    %v915 = vadd.f32 0.0, %v914
    %v916 = vpop.f32.mrb[0].mxu0
    %v917 = vpop.f32.mrb[0].mxu0
    %918 = vdwg.mxu0
    %919 = vmatprep.subr.bf16.mxu0 0
    %920 = vmatpush1.bf16.msra.mxu0 %v387
    %921 = vmatprep.subr.bf16.mxu0 0
    %922 = vmatpush1.bf16.msra.mxu0 %v390
    %923 = vmatprep.subr.bf16.mxu0 0
    %924 = vmatpush1.bf16.msra.mxu0 %v393
    %925 = vmatprep.subr.bf16.mxu0 0
    %926 = vmatpush1.bf16.msra.mxu0 %v396
    %927 = vmatprep.subr.bf16.mxu0 0
    %928 = vmatpush1.bf16.msra.mxu0 %v399
    %929 = vmatprep.subr.bf16.mxu0 0
    %930 = vmatpush1.bf16.msra.mxu0 %v402
    %931 = vmatprep.subr.bf16.mxu0 0
    %932 = vmatpush1.bf16.msra.mxu0 %v405
    %933 = vmatprep.subr.bf16.mxu0 0
    %934 = vmatpush1.bf16.msra.mxu0 %v408
    %935 = vmatprep.subr.bf16.mxu0 0
    %936 = vmatpush1.bf16.msra.mxu0 0
    %937 = vmatprep.subr.bf16.mxu0 0
    %938 = vmatpush1.bf16.msra.mxu0 0
    %939 = vmatprep.subr.bf16.mxu0 0
    %940 = vmatpush1.bf16.msra.mxu0 0
    %941 = vmatprep.subr.bf16.mxu0 0
    %942 = vmatpush1.bf16.msra.mxu0 0
    %943 = vmatprep.subr.bf16.mxu0 0
    %944 = vmatpush1.bf16.msra.mxu0 0
    %945 = vmatprep.subr.bf16.mxu0 0
    %946 = vmatpush1.bf16.msra.mxu0 0
    %947 = vmatprep.subr.bf16.mxu0 0
    %948 = vmatpush1.bf16.msra.mxu0 0
    %949 = vmatprep.subr.bf16.mxu0 0
    %950 = vmatpush1.bf16.msra.mxu0 0
    %951 = vmatprep.mubr.bf16.mxu0 0
    %952 = vmatmul.mubr.bf16.gmra.mrb[0].mxu0 %v877
    %v953 = vpop.f32.mrb[0].mxu0
    %v954 = vadd.f32 0.0, %v953
    %v955 = vpop.f32.mrb[0].mxu0
    %v956 = vpop.f32.mrb[0].mxu0
    %v957 = vpop.f32.mrb[0].mxu0
    %958 = vdwg.mxu0
    %v959 = vadd.f32 %v874, %v913
    %v960 = vadd.f32 %v875, %v915
    %v961 = vxor.u32 %v959, 2147483648
    %v962 = vxor.u32 %v960, 2147483648
    %v963 = vmul.f32 %v961, 1.442695
    %v964 = vpow.pop %v963
    %v965 = vmul.f32 %v962, 1.442695
    %v966 = vpow.pop %v965
    %v967 = vadd.f32 %v964, 1.0
    %v968 = vadd.f32 %v966, 1.0
    %v969 = vrcp.pop %v967
    %v970 = vmul.f32 1.0, %v969
    %v971 = vrcp.pop %v968
    %v972 = vmul.f32 1.0, %v971
    %v973 = vadd.f32 %v954, %v532
    %v974 = vmul.f32 %v970, %v973
    %v975 = vadd.f32 %v876, %v974
    %v976 = vtanh.pop %v975
    %v977 = vsub.f32 1.0, %v972
    %v978 = vmul.f32 %v977, %v976
    %v979 = vmul.f32 %v972, %v870
    %v980 = vadd.f32 %v978, %v979
    %s981 = scalar_lea.vmem %s5, 32
    %982 = vst [vmem:[%s981] sm:$0xff] %v980
    %s983 = scalar_lea.vmem [#allocation2], 120
    %v984 = vld [vmem:[%s983] sm:$0xff]
    %v985 = vld [vmem:[%s983 + $0x8] sm:$0xff]
    %v986 = vld [vmem:[%s983 + $0x10] sm:$0xff]
    %v987 = vpack.c.bf16 %v980, %v980
    %988 = vmatprep.subr.bf16.mxu0 %v386
    %989 = vmatpush1.bf16.msra.mxu0 %v385
    %990 = vmatprep.subr.bf16.mxu0 %v389
    %991 = vmatpush1.bf16.msra.mxu0 %v388
    %992 = vmatprep.subr.bf16.mxu0 %v392
    %993 = vmatpush1.bf16.msra.mxu0 %v391
    %994 = vmatprep.subr.bf16.mxu0 %v395
    %995 = vmatpush1.bf16.msra.mxu0 %v394
    %996 = vmatprep.subr.bf16.mxu0 %v398
    %997 = vmatpush1.bf16.msra.mxu0 %v397
    %998 = vmatprep.subr.bf16.mxu0 %v401
    %999 = vmatpush1.bf16.msra.mxu0 %v400
    %1000 = vmatprep.subr.bf16.mxu0 %v404
    %1001 = vmatpush1.bf16.msra.mxu0 %v403
    %1002 = vmatprep.subr.bf16.mxu0 %v407
    %1003 = vmatpush1.bf16.msra.mxu0 %v406
    %1004 = vmatprep.subr.bf16.mxu0 0
    %1005 = vmatpush1.bf16.msra.mxu0 0
    %1006 = vmatprep.subr.bf16.mxu0 0
    %1007 = vmatpush1.bf16.msra.mxu0 0
    %1008 = vmatprep.subr.bf16.mxu0 0
    %1009 = vmatpush1.bf16.msra.mxu0 0
    %1010 = vmatprep.subr.bf16.mxu0 0
    %1011 = vmatpush1.bf16.msra.mxu0 0
    %1012 = vmatprep.subr.bf16.mxu0 0
    %1013 = vmatpush1.bf16.msra.mxu0 0
    %1014 = vmatprep.subr.bf16.mxu0 0
    %1015 = vmatpush1.bf16.msra.mxu0 0
    %1016 = vmatprep.subr.bf16.mxu0 0
    %1017 = vmatpush1.bf16.msra.mxu0 0
    %1018 = vmatprep.subr.bf16.mxu0 0
    %1019 = vmatpush1.bf16.msra.mxu0 0
    %1020 = vmatprep.mubr.bf16.mxu0 0
    %1021 = vmatmul.mubr.bf16.gmra.mrb[0].mxu0 %v987
    %v1022 = vpop.f32.mrb[0].mxu0
    %v1023 = vadd.f32 0.0, %v1022
    %v1024 = vpop.f32.mrb[0].mxu0
    %v1025 = vadd.f32 0.0, %v1024
    %v1026 = vpop.f32.mrb[0].mxu0
    %v1027 = vpop.f32.mrb[0].mxu0
    %1028 = vdwg.mxu0
    %1029 = vmatprep.subr.bf16.mxu0 0
    %1030 = vmatpush1.bf16.msra.mxu0 %v387
    %1031 = vmatprep.subr.bf16.mxu0 0
    %1032 = vmatpush1.bf16.msra.mxu0 %v390
    %1033 = vmatprep.subr.bf16.mxu0 0
    %1034 = vmatpush1.bf16.msra.mxu0 %v393
    %1035 = vmatprep.subr.bf16.mxu0 0
    %1036 = vmatpush1.bf16.msra.mxu0 %v396
    %1037 = vmatprep.subr.bf16.mxu0 0
    %1038 = vmatpush1.bf16.msra.mxu0 %v399
    %1039 = vmatprep.subr.bf16.mxu0 0
    %1040 = vmatpush1.bf16.msra.mxu0 %v402
    %1041 = vmatprep.subr.bf16.mxu0 0
    %1042 = vmatpush1.bf16.msra.mxu0 %v405
    %1043 = vmatprep.subr.bf16.mxu0 0
    %1044 = vmatpush1.bf16.msra.mxu0 %v408
    %1045 = vmatprep.subr.bf16.mxu0 0
    %1046 = vmatpush1.bf16.msra.mxu0 0
    %1047 = vmatprep.subr.bf16.mxu0 0
    %1048 = vmatpush1.bf16.msra.mxu0 0
    %1049 = vmatprep.subr.bf16.mxu0 0
    %1050 = vmatpush1.bf16.msra.mxu0 0
    %1051 = vmatprep.subr.bf16.mxu0 0
    %1052 = vmatpush1.bf16.msra.mxu0 0
    %1053 = vmatprep.subr.bf16.mxu0 0
    %1054 = vmatpush1.bf16.msra.mxu0 0
    %1055 = vmatprep.subr.bf16.mxu0 0
    %1056 = vmatpush1.bf16.msra.mxu0 0
    %1057 = vmatprep.subr.bf16.mxu0 0
    %1058 = vmatpush1.bf16.msra.mxu0 0
    %1059 = vmatprep.subr.bf16.mxu0 0
    %1060 = vmatpush1.bf16.msra.mxu0 0
    %1061 = vmatprep.mubr.bf16.mxu0 0
    %1062 = vmatmul.mubr.bf16.gmra.mrb[0].mxu0 %v987
    %v1063 = vpop.f32.mrb[0].mxu0
    %v1064 = vadd.f32 0.0, %v1063
    %v1065 = vpop.f32.mrb[0].mxu0
    %v1066 = vpop.f32.mrb[0].mxu0
    %v1067 = vpop.f32.mrb[0].mxu0
    %1068 = vdwg.mxu0
    %v1069 = vadd.f32 %v984, %v1023
    %v1070 = vadd.f32 %v985, %v1025
    %v1071 = vxor.u32 %v1069, 2147483648
    %v1072 = vxor.u32 %v1070, 2147483648
    %v1073 = vmul.f32 %v1071, 1.442695
    %v1074 = vpow.pop %v1073
    %v1075 = vmul.f32 %v1072, 1.442695
    %v1076 = vpow.pop %v1075
    %v1077 = vadd.f32 %v1074, 1.0
    %v1078 = vadd.f32 %v1076, 1.0
    %v1079 = vrcp.pop %v1077
    %v1080 = vmul.f32 1.0, %v1079
    %v1081 = vrcp.pop %v1078
    %v1082 = vmul.f32 1.0, %v1081
    %v1083 = vadd.f32 %v1064, %v532
    %v1084 = vmul.f32 %v1080, %v1083
    %v1085 = vadd.f32 %v986, %v1084
    %v1086 = vtanh.pop %v1085
    %v1087 = vsub.f32 1.0, %v1082
    %v1088 = vmul.f32 %v1087, %v1086
    %v1089 = vmul.f32 %v1082, %v980
    %v1090 = vadd.f32 %v1088, %v1089
    %s1091 = scalar_lea.vmem %s5, 40
    %1092 = vst [vmem:[%s1091] sm:$0xff] %v1090
    %s1093 = scalar_lea.vmem [#allocation2], 144
    %v1094 = vld [vmem:[%s1093] sm:$0xff]
    %v1095 = vld [vmem:[%s1093 + $0x8] sm:$0xff]
    %v1096 = vld [vmem:[%s1093 + $0x10] sm:$0xff]
    %v1097 = vpack.c.bf16 %v1090, %v1090
    %1098 = vmatprep.subr.bf16.mxu0 %v386
    %1099 = vmatpush1.bf16.msra.mxu0 %v385
    %1100 = vmatprep.subr.bf16.mxu0 %v389
    %1101 = vmatpush1.bf16.msra.mxu0 %v388
    %1102 = vmatprep.subr.bf16.mxu0 %v392
    %1103 = vmatpush1.bf16.msra.mxu0 %v391
    %1104 = vmatprep.subr.bf16.mxu0 %v395
    %1105 = vmatpush1.bf16.msra.mxu0 %v394
    %1106 = vmatprep.subr.bf16.mxu0 %v398
    %1107 = vmatpush1.bf16.msra.mxu0 %v397
    %1108 = vmatprep.subr.bf16.mxu0 %v401
    %1109 = vmatpush1.bf16.msra.mxu0 %v400
    %1110 = vmatprep.subr.bf16.mxu0 %v404
    %1111 = vmatpush1.bf16.msra.mxu0 %v403
    %1112 = vmatprep.subr.bf16.mxu0 %v407
    %1113 = vmatpush1.bf16.msra.mxu0 %v406
    %1114 = vmatprep.subr.bf16.mxu0 0
    %1115 = vmatpush1.bf16.msra.mxu0 0
    %1116 = vmatprep.subr.bf16.mxu0 0
    %1117 = vmatpush1.bf16.msra.mxu0 0
    %1118 = vmatprep.subr.bf16.mxu0 0
    %1119 = vmatpush1.bf16.msra.mxu0 0
    %1120 = vmatprep.subr.bf16.mxu0 0
    %1121 = vmatpush1.bf16.msra.mxu0 0
    %1122 = vmatprep.subr.bf16.mxu0 0
    %1123 = vmatpush1.bf16.msra.mxu0 0
    %1124 = vmatprep.subr.bf16.mxu0 0
    %1125 = vmatpush1.bf16.msra.mxu0 0
    %1126 = vmatprep.subr.bf16.mxu0 0
    %1127 = vmatpush1.bf16.msra.mxu0 0
    %1128 = vmatprep.subr.bf16.mxu0 0
    %1129 = vmatpush1.bf16.msra.mxu0 0
    %1130 = vmatprep.mubr.bf16.mxu0 0
    %1131 = vmatmul.mubr.bf16.gmra.mrb[0].mxu0 %v1097
    %v1132 = vpop.f32.mrb[0].mxu0
    %v1133 = vadd.f32 0.0, %v1132
    %v1134 = vpop.f32.mrb[0].mxu0
    %v1135 = vadd.f32 0.0, %v1134
    %v1136 = vpop.f32.mrb[0].mxu0
    %v1137 = vpop.f32.mrb[0].mxu0
    %1138 = vdwg.mxu0
    %1139 = vmatprep.subr.bf16.mxu0 0
    %1140 = vmatpush1.bf16.msra.mxu0 %v387
    %1141 = vmatprep.subr.bf16.mxu0 0
    %1142 = vmatpush1.bf16.msra.mxu0 %v390
    %1143 = vmatprep.subr.bf16.mxu0 0
    %1144 = vmatpush1.bf16.msra.mxu0 %v393
    %1145 = vmatprep.subr.bf16.mxu0 0
    %1146 = vmatpush1.bf16.msra.mxu0 %v396
    %1147 = vmatprep.subr.bf16.mxu0 0
    %1148 = vmatpush1.bf16.msra.mxu0 %v399
    %1149 = vmatprep.subr.bf16.mxu0 0
    %1150 = vmatpush1.bf16.msra.mxu0 %v402
    %1151 = vmatprep.subr.bf16.mxu0 0
    %1152 = vmatpush1.bf16.msra.mxu0 %v405
    %1153 = vmatprep.subr.bf16.mxu0 0
    %1154 = vmatpush1.bf16.msra.mxu0 %v408
    %1155 = vmatprep.subr.bf16.mxu0 0
    %1156 = vmatpush1.bf16.msra.mxu0 0
    %1157 = vmatprep.subr.bf16.mxu0 0
    %1158 = vmatpush1.bf16.msra.mxu0 0
    %1159 = vmatprep.subr.bf16.mxu0 0
    %1160 = vmatpush1.bf16.msra.mxu0 0
    %1161 = vmatprep.subr.bf16.mxu0 0
    %1162 = vmatpush1.bf16.msra.mxu0 0
    %1163 = vmatprep.subr.bf16.mxu0 0
    %1164 = vmatpush1.bf16.msra.mxu0 0
    %1165 = vmatprep.subr.bf16.mxu0 0
    %1166 = vmatpush1.bf16.msra.mxu0 0
    %1167 = vmatprep.subr.bf16.mxu0 0
    %1168 = vmatpush1.bf16.msra.mxu0 0
    %1169 = vmatprep.subr.bf16.mxu0 0
    %1170 = vmatpush1.bf16.msra.mxu0 0
    %1171 = vmatprep.mubr.bf16.mxu0 0
    %1172 = vmatmul.mubr.bf16.gmra.mrb[0].mxu0 %v1097
    %v1173 = vpop.f32.mrb[0].mxu0
    %v1174 = vadd.f32 0.0, %v1173
    %v1175 = vpop.f32.mrb[0].mxu0
    %v1176 = vpop.f32.mrb[0].mxu0
    %v1177 = vpop.f32.mrb[0].mxu0
    %1178 = vdwg.mxu0
    %v1179 = vadd.f32 %v1094, %v1133
    %v1180 = vadd.f32 %v1095, %v1135
    %v1181 = vxor.u32 %v1179, 2147483648
    %v1182 = vxor.u32 %v1180, 2147483648
    %v1183 = vmul.f32 %v1181, 1.442695
    %v1184 = vpow.pop %v1183
    %v1185 = vmul.f32 %v1182, 1.442695
    %v1186 = vpow.pop %v1185
    %v1187 = vadd.f32 %v1184, 1.0
    %v1188 = vadd.f32 %v1186, 1.0
    %v1189 = vrcp.pop %v1187
    %v1190 = vmul.f32 1.0, %v1189
    %v1191 = vrcp.pop %v1188
    %v1192 = vmul.f32 1.0, %v1191
    %v1193 = vadd.f32 %v1174, %v532
    %v1194 = vmul.f32 %v1190, %v1193
    %v1195 = vadd.f32 %v1096, %v1194
    %v1196 = vtanh.pop %v1195
    %v1197 = vsub.f32 1.0, %v1192
    %v1198 = vmul.f32 %v1197, %v1196
    %v1199 = vmul.f32 %v1192, %v1090
    %v1200 = vadd.f32 %v1198, %v1199
    %s1201 = scalar_lea.vmem %s5, 48
    %1202 = vst [vmem:[%s1201] sm:$0xff] %v1200
    %s1203 = scalar_lea.vmem [#allocation2], 168
    %v1204 = vld [vmem:[%s1203] sm:$0xff]
    %v1205 = vld [vmem:[%s1203 + $0x8] sm:$0xff]
    %v1206 = vld [vmem:[%s1203 + $0x10] sm:$0xff]
    %v1207 = vpack.c.bf16 %v1200, %v1200
    %1208 = vmatprep.subr.bf16.mxu0 %v386
    %1209 = vmatpush1.bf16.msra.mxu0 %v385
    %1210 = vmatprep.subr.bf16.mxu0 %v389
    %1211 = vmatpush1.bf16.msra.mxu0 %v388
    %1212 = vmatprep.subr.bf16.mxu0 %v392
    %1213 = vmatpush1.bf16.msra.mxu0 %v391
    %1214 = vmatprep.subr.bf16.mxu0 %v395
    %1215 = vmatpush1.bf16.msra.mxu0 %v394
    %1216 = vmatprep.subr.bf16.mxu0 %v398
    %1217 = vmatpush1.bf16.msra.mxu0 %v397
    %1218 = vmatprep.subr.bf16.mxu0 %v401
    %1219 = vmatpush1.bf16.msra.mxu0 %v400
    %1220 = vmatprep.subr.bf16.mxu0 %v404
    %1221 = vmatpush1.bf16.msra.mxu0 %v403
    %1222 = vmatprep.subr.bf16.mxu0 %v407
    %1223 = vmatpush1.bf16.msra.mxu0 %v406
    %1224 = vmatprep.subr.bf16.mxu0 0
    %1225 = vmatpush1.bf16.msra.mxu0 0
    %1226 = vmatprep.subr.bf16.mxu0 0
    %1227 = vmatpush1.bf16.msra.mxu0 0
    %1228 = vmatprep.subr.bf16.mxu0 0
    %1229 = vmatpush1.bf16.msra.mxu0 0
    %1230 = vmatprep.subr.bf16.mxu0 0
    %1231 = vmatpush1.bf16.msra.mxu0 0
    %1232 = vmatprep.subr.bf16.mxu0 0
    %1233 = vmatpush1.bf16.msra.mxu0 0
    %1234 = vmatprep.subr.bf16.mxu0 0
    %1235 = vmatpush1.bf16.msra.mxu0 0
    %1236 = vmatprep.subr.bf16.mxu0 0
    %1237 = vmatpush1.bf16.msra.mxu0 0
    %1238 = vmatprep.subr.bf16.mxu0 0
    %1239 = vmatpush1.bf16.msra.mxu0 0
    %1240 = vmatprep.mubr.bf16.mxu0 0
    %1241 = vmatmul.mubr.bf16.gmra.mrb[0].mxu0 %v1207
    %v1242 = vpop.f32.mrb[0].mxu0
    %v1243 = vadd.f32 0.0, %v1242
    %v1244 = vpop.f32.mrb[0].mxu0
    %v1245 = vadd.f32 0.0, %v1244
    %v1246 = vpop.f32.mrb[0].mxu0
    %v1247 = vpop.f32.mrb[0].mxu0
    %1248 = vdwg.mxu0
    %1249 = vmatprep.subr.bf16.mxu0 0
    %1250 = vmatpush1.bf16.msra.mxu0 %v387
    %1251 = vmatprep.subr.bf16.mxu0 0
    %1252 = vmatpush1.bf16.msra.mxu0 %v390
    %1253 = vmatprep.subr.bf16.mxu0 0
    %1254 = vmatpush1.bf16.msra.mxu0 %v393
    %1255 = vmatprep.subr.bf16.mxu0 0
    %1256 = vmatpush1.bf16.msra.mxu0 %v396
    %1257 = vmatprep.subr.bf16.mxu0 0
    %1258 = vmatpush1.bf16.msra.mxu0 %v399
    %1259 = vmatprep.subr.bf16.mxu0 0
    %1260 = vmatpush1.bf16.msra.mxu0 %v402
    %1261 = vmatprep.subr.bf16.mxu0 0
    %1262 = vmatpush1.bf16.msra.mxu0 %v405
    %1263 = vmatprep.subr.bf16.mxu0 0
    %1264 = vmatpush1.bf16.msra.mxu0 %v408
    %1265 = vmatprep.subr.bf16.mxu0 0
    %1266 = vmatpush1.bf16.msra.mxu0 0
    %1267 = vmatprep.subr.bf16.mxu0 0
    %1268 = vmatpush1.bf16.msra.mxu0 0
    %1269 = vmatprep.subr.bf16.mxu0 0
    %1270 = vmatpush1.bf16.msra.mxu0 0
    %1271 = vmatprep.subr.bf16.mxu0 0
    %1272 = vmatpush1.bf16.msra.mxu0 0
    %1273 = vmatprep.subr.bf16.mxu0 0
    %1274 = vmatpush1.bf16.msra.mxu0 0
    %1275 = vmatprep.subr.bf16.mxu0 0
    %1276 = vmatpush1.bf16.msra.mxu0 0
    %1277 = vmatprep.subr.bf16.mxu0 0
    %1278 = vmatpush1.bf16.msra.mxu0 0
    %1279 = vmatprep.subr.bf16.mxu0 0
    %1280 = vmatpush1.bf16.msra.mxu0 0
    %1281 = vmatprep.mubr.bf16.mxu0 0
    %1282 = vmatmul.mubr.bf16.gmra.mrb[0].mxu0 %v1207
    %v1283 = vpop.f32.mrb[0].mxu0
    %v1284 = vadd.f32 0.0, %v1283
    %v1285 = vpop.f32.mrb[0].mxu0
    %v1286 = vpop.f32.mrb[0].mxu0
    %v1287 = vpop.f32.mrb[0].mxu0
    %1288 = vdwg.mxu0
    %v1289 = vadd.f32 %v1204, %v1243
    %v1290 = vadd.f32 %v1205, %v1245
    %v1291 = vxor.u32 %v1289, 2147483648
    %v1292 = vxor.u32 %v1290, 2147483648
    %v1293 = vmul.f32 %v1291, 1.442695
    %v1294 = vpow.pop %v1293
    %v1295 = vmul.f32 %v1292, 1.442695
    %v1296 = vpow.pop %v1295
    %v1297 = vadd.f32 %v1294, 1.0
    %v1298 = vadd.f32 %v1296, 1.0
    %v1299 = vrcp.pop %v1297
    %v1300 = vmul.f32 1.0, %v1299
    %v1301 = vrcp.pop %v1298
    %v1302 = vmul.f32 1.0, %v1301
    %v1303 = vadd.f32 %v1284, %v532
    %v1304 = vmul.f32 %v1300, %v1303
    %v1305 = vadd.f32 %v1206, %v1304
    %v1306 = vtanh.pop %v1305
    %v1307 = vsub.f32 1.0, %v1302
    %v1308 = vmul.f32 %v1307, %v1306
    %v1309 = vmul.f32 %v1302, %v1200
    %v1310 = vadd.f32 %v1308, %v1309
    %s1311 = scalar_lea.vmem %s5, 56
    %1312 = vst [vmem:[%s1311] sm:$0xff] %v1310
    %1313 = vst [vmem:[%s6] sm:$0xff] %v1310
    // Predicated region
    $region26: #{drnn_forward.3} parent=1 // pred_check
      _
    $region27: #{drnn_forward.3} parent=1 // pred_check_branch
      %1315 = sbr.rel (0) target = $region29
    $region28: #{drnn_forward.3} parent=1 // pred_region
      _
    $region29: #{drnn_forward.3} parent=1 // pred_fallthru
      _
    // Predicated region
    $region30: #{drnn_forward.3} parent=1 // pred_check
      _
    $region31: #{drnn_forward.3} parent=1 // pred_check_branch
      %1317 = sbr.rel (0) target = $region33
    $region32: #{drnn_forward.3} parent=1 // pred_region
      _
    $region33: #{drnn_forward.3} parent=1 // pred_fallthru
      _
    // Predicated region
    $region34: #{drnn_forward.3} parent=1 // pred_check
      _
    $region35: #{drnn_forward.3} parent=1 // pred_check_branch
      %1319 = sbr.rel (0) target = $region37
    $region36: #{drnn_forward.3} parent=1 // pred_region
      _
    $region37: #{drnn_forward.3} parent=1 // pred_fallthru
      _
    // Predicated region
    $region38: #{drnn_forward.3} parent=1 // pred_check
      _
    $region39: #{drnn_forward.3} parent=1 // pred_check_branch
      %1321 = sbr.rel (0) target = $region41
    $region40: #{drnn_forward.3} parent=1 // pred_region
      _
    $region41: #{drnn_forward.3} parent=1 // pred_fallthru
      _
    %1322 = vsyncpa [#allocation4], 1

</llo_original>
